<compile_context>
chip_gen: v7x
topology: tpu7x:2x2x1
jax: 0.10.0
libtpu: 0.0.40
codegen_flags: <defaults>
</compile_context>

<pallas_src>
import math
from functools import partial

import jax
import jax.numpy as jnp
from jax.experimental import pallas as pl
from jax.experimental.pallas import tpu as pltpu

# -------------------- small config consistent with the module ---------------
B, S = 2, 8
H = 32              # hidden_size (stands in for 768)
N_HEADS = 4
D_HEAD = H // N_HEADS
INTER = 64          # FFN intermediate size
N_LAYERS = 2        # encoder layers (stands in for 12)
D_GRU = 16          # GRU hidden per direction (stands in for 256)
VOCAB = 128         # correction vocab (output projection size)
MAX_POS = 64
TYPE_VOCAB = 2
MASK_ID = 103       # as in BertModel.get_mask_embeddings(ind=103)
LN_EPS = 1e-12
ROW_TILE = 8        # row tile for the (B*S, ·) kernels


def _row_tile(M):
    return ROW_TILE if M % ROW_TILE == 0 else M


def _ln(x, g, b):
    mu = jnp.mean(x, axis=-1, keepdims=True)
    var = jnp.mean((x - mu) ** 2, axis=-1, keepdims=True)
    return (x - mu) * jax.lax.rsqrt(var + LN_EPS) * g + b


def _gelu(x):
    # TODO(synk): HF BERT uses erf-gelu; tanh approximation used here.
    return 0.5 * x * (1.0 + jnp.tanh(0.7978845608028654 * (x + 0.044715 * x * x * x)))


# -------------------- generic fused linear (bf16 matmul, f32 accum) ----------
def _linear_kernel(x_ref, w_ref, b_ref, o_ref):
    x = x_ref[...].astype(jnp.bfloat16)
    y = jnp.dot(x, w_ref[...], preferred_element_type=jnp.float32) + b_ref[...]
    o_ref[...] = y


def linear(x2d, w_kn, b_1n):
    """x2d: (M, K) f32; w_kn: (K, N) bf16 (pre-transposed); b_1n: (1, N) f32."""
    M, K = x2d.shape
    N = w_kn.shape[1]
    tm = _row_tile(M)
    row = lambda i: (i, 0)
    full = lambda i: (0, 0)
    return pl.pallas_call(
        _linear_kernel,
        grid=(M // tm,),
        in_specs=[pl.BlockSpec((tm, K), row),
                  pl.BlockSpec((K, N), full),
                  pl.BlockSpec((1, N), full)],
        out_specs=pl.BlockSpec((tm, N), row),
        out_shape=jax.ShapeDtypeStruct((M, N), jnp.float32),
        compiler_params=pltpu.CompilerParams(dimension_semantics=("parallel",)),
    )(x2d, w_kn, b_1n)


# -------------------- embedding LayerNorm -------------------------------------
def _layernorm_kernel(x_ref, g_ref, b_ref, o_ref):
    o_ref[...] = _ln(x_ref[...], g_ref[...], b_ref[...])


def layernorm(x2d, g_1n, b_1n):
    M, Hx = x2d.shape
    tm = _row_tile(M)
    row = lambda i: (i, 0)
    full = lambda i: (0, 0)
    return pl.pallas_call(
        _layernorm_kernel,
        grid=(M // tm,),
        in_specs=[pl.BlockSpec((tm, Hx), row),
                  pl.BlockSpec((1, Hx), full),
                  pl.BlockSpec((1, Hx), full)],
        out_specs=pl.BlockSpec((tm, Hx), row),
        out_shape=jax.ShapeDtypeStruct((M, Hx), jnp.float32),
        compiler_params=pltpu.CompilerParams(dimension_semantics=("parallel",)),
    )(x2d, g_1n, b_1n)


# -------------------- fused detection heads + sigmoid + soft mask -------------
def _det_softmask_kernel(g_ref, w_ref, b_ref, emb_ref, m_ref, det_ref, sm_ref):
    g = g_ref[...].astype(jnp.bfloat16)
    heads = jnp.dot(g, w_ref[...], preferred_element_type=jnp.float32) + b_ref[...]  # (tm, 3)
    det_ref[...] = heads[:, :2]
    coef = jax.nn.sigmoid(heads[:, 2:3])                      # (tm, 1)
    sm_ref[...] = coef * m_ref[...] + (1.0 - coef) * emb_ref[...]


def det_and_softmask(gru2d, w_heads, b_heads, emb2d, mask_emb):
    # TODO(synk): training-mode hard masking branch (loop over attention_mask) not implemented.
    M, G = gru2d.shape
    tm = _row_tile(M)
    row = lambda i: (i, 0)
    full = lambda i: (0, 0)
    return pl.pallas_call(
        _det_softmask_kernel,
        grid=(M // tm,),
        in_specs=[pl.BlockSpec((tm, G), row),
                  pl.BlockSpec((G, 3), full),
                  pl.BlockSpec((1, 3), full),
                  pl.BlockSpec((tm, H), row),
                  pl.BlockSpec((1, H), full)],
        out_specs=[pl.BlockSpec((tm, 2), row),
                   pl.BlockSpec((tm, H), row)],
        out_shape=[jax.ShapeDtypeStruct((M, 2), jnp.float32),
                   jax.ShapeDtypeStruct((M, H), jnp.float32)],
        compiler_params=pltpu.CompilerParams(dimension_semantics=("parallel",)),
    )(gru2d, w_heads, b_heads, emb2d, mask_emb)


# -------------------- self-attention (per batch, heads sliced on lanes) -------
def _attn_kernel(qkv_ref, m_ref, o_ref):
    qkv = qkv_ref[0]                                  # (S, 3H) f32
    mask = m_ref[0]                                   # (1, S) additive
    scale = 1.0 / math.sqrt(D_HEAD)
    ctxs = []
    for h in range(N_HEADS):
        lo = h * D_HEAD
        q = qkv[:, lo:lo + D_HEAD].astype(jnp.bfloat16)
        k = qkv[:, H + lo:H + lo + D_HEAD].astype(jnp.bfloat16)
        v = qkv[:, 2 * H + lo:2 * H + lo + D_HEAD].astype(jnp.bfloat16)
        s = jax.lax.dot_general(q, k, (((1,), (1,)), ((), ())),
                                preferred_element_type=jnp.float32)   # (S, S)
        s = s * scale + mask
        s = s - jnp.max(s, axis=-1, keepdims=True)
        p = jnp.exp(s)
        p = p * pl.reciprocal(jnp.sum(p, axis=-1, keepdims=True), approx=True)
        ctxs.append(jnp.dot(p.astype(jnp.bfloat16), v,
                            preferred_element_type=jnp.float32))      # (S, dh)
    o_ref[0] = jnp.concatenate(ctxs, axis=-1)         # lane-dense (S, H) store


def attention(qkv_bsd, ext_mask):
    Bx, Sx, _ = qkv_bsd.shape
    return pl.pallas_call(
        _attn_kernel,
        grid=(Bx,),
        in_specs=[pl.BlockSpec((1, Sx, 3 * H), lambda b: (b, 0, 0)),
                  pl.BlockSpec((1, 1, Sx), lambda b: (b, 0, 0))],
        out_specs=pl.BlockSpec((1, Sx, H), lambda b: (b, 0, 0)),
        out_shape=jax.ShapeDtypeStruct((Bx, Sx, H), jnp.float32),
        compiler_params=pltpu.CompilerParams(dimension_semantics=("parallel",)),
    )(qkv_bsd, ext_mask)


# -------------------- fused attn-out linear + residual + LayerNorm ------------
def _attn_out_ln_kernel(c_ref, r_ref, w_ref, b_ref, g_ref, beta_ref, o_ref):
    c = c_ref[...].astype(jnp.bfloat16)
    y = jnp.dot(c, w_ref[...], preferred_element_type=jnp.float32) + b_ref[...]
    o_ref[...] = _ln(y + r_ref[...], g_ref[...], beta_ref[...])


def attn_out_ln(ctx2d, res2d, w, b, g, beta):
    M, Hx = ctx2d.shape
    tm = _row_tile(M)
    row = lambda i: (i, 0)
    full = lambda i: (0, 0)
    return pl.pallas_call(
        _attn_out_ln_kernel,
        grid=(M // tm,),
        in_specs=[pl.BlockSpec((tm, Hx), row),
                  pl.BlockSpec((tm, Hx), row),
                  pl.BlockSpec((Hx, Hx), full),
                  pl.BlockSpec((1, Hx), full),
                  pl.BlockSpec((1, Hx), full),
                  pl.BlockSpec((1, Hx), full)],
        out_specs=pl.BlockSpec((tm, Hx), row),
        out_shape=jax.ShapeDtypeStruct((M, Hx), jnp.float32),
        compiler_params=pltpu.CompilerParams(dimension_semantics=("parallel",)),
    )(ctx2d, res2d, w, b, g, beta)


# -------------------- fused FFN: gelu(x@Wi)@Wo + residual + LayerNorm ---------
def _ffn_ln_kernel(h_ref, wi_ref, bi_ref, wo_ref, bo_ref, g_ref, beta_ref, o_ref):
    h = h_ref[...]
    inter = jnp.dot(h.astype(jnp.bfloat16), wi_ref[...],
                    preferred_element_type=jnp.float32) + bi_ref[...]
    inter = _gelu(inter)
    y = jnp.dot(inter.astype(jnp.bfloat16), wo_ref[...],
                preferred_element_type=jnp.float32) + bo_ref[...]
    o_ref[...] = _ln(y + h, g_ref[...], beta_ref[...])


def ffn_ln(h2d, wi, bi, wo, bo, g, beta):
    M, Hx = h2d.shape
    tm = _row_tile(M)
    row = lambda i: (i, 0)
    full = lambda i: (0, 0)
    return pl.pallas_call(
        _ffn_ln_kernel,
        grid=(M // tm,),
        in_specs=[pl.BlockSpec((tm, Hx), row),
                  pl.BlockSpec((Hx, INTER), full),
                  pl.BlockSpec((1, INTER), full),
                  pl.BlockSpec((INTER, Hx), full),
                  pl.BlockSpec((1, Hx), full),
                  pl.BlockSpec((1, Hx), full),
                  pl.BlockSpec((1, Hx), full)],
        out_specs=pl.BlockSpec((tm, Hx), row),
        out_shape=jax.ShapeDtypeStruct((M, Hx), jnp.float32),
        compiler_params=pltpu.CompilerParams(dimension_semantics=("parallel",)),
    )(h2d, wi, bi, wo, bo, g, beta)


# -------------------- fused residual + vocab output projection ----------------
def _resid_out_kernel(h_ref, e_ref, w_ref, b_ref, o_ref):
    x = (h_ref[...] + e_ref[...]).astype(jnp.bfloat16)
    o_ref[...] = jnp.dot(x, w_ref[...], preferred_element_type=jnp.float32) + b_ref[...]


def resid_out(h2d, emb2d, w, b):
    M, Hx = h2d.shape
    N = w.shape[1]
    tm = _row_tile(M)
    row = lambda i: (i, 0)
    full = lambda i: (0, 0)
    return pl.pallas_call(
        _resid_out_kernel,
        grid=(M // tm,),
        in_specs=[pl.BlockSpec((tm, Hx), row),
                  pl.BlockSpec((tm, Hx), row),
                  pl.BlockSpec((Hx, N), full),
                  pl.BlockSpec((1, N), full)],
        out_specs=pl.BlockSpec((tm, N), row),
        out_shape=jax.ShapeDtypeStruct((M, N), jnp.float32),
        compiler_params=pltpu.CompilerParams(dimension_semantics=("parallel",)),
    )(h2d, emb2d, w, b)


# -------------------- bidirectional GRU recurrence (fwd + bwd in one call) ----
def _bigru_kernel(gf_ref, gb_ref, whh_ref, bhh_ref, of_ref, ob_ref, h_ref):
    @pl.when(pl.program_id(0) == 0)
    def _():
        h_ref[...] = jnp.zeros_like(h_ref)

    def step(gx, h, whh, bhh):
        # gx: (B, 3Dg) precomputed x@W_ih + b_ih (gate order r, z, n); h: (B, Dg)
        gh = jnp.dot(h.astype(jnp.bfloat16), whh,
                     preferred_element_type=jnp.float32) + bhh
        r = jax.nn.sigmoid(gx[:, :D_GRU] + gh[:, :D_GRU])
        z = jax.nn.sigmoid(gx[:, D_GRU:2 * D_GRU] + gh[:, D_GRU:2 * D_GRU])
        n = jnp.tanh(gx[:, 2 * D_GRU:] + r * gh[:, 2 * D_GRU:])
        return (1.0 - z) * n + z * h

    gx_f = gf_ref[0][:, :3 * D_GRU]          # forward-direction gates at time t
    gx_b = gb_ref[0][:, 3 * D_GRU:]          # backward-direction gates at time S-1-t
    h_f = step(gx_f, h_ref[0], whh_ref[0], bhh_ref[0])
    h_b = step(gx_b, h_ref[1], whh_ref[1], bhh_ref[1])
    h_ref[0] = h_f
    h_ref[1] = h_b
    of_ref[0] = h_f
    ob_ref[0] = h_b


def bigru(gates_sbg, whh, bhh):
    """gates_sbg: (S, B, 6*Dg) f32 (x·W_ih+b_ih for [fwd|bwd]); whh: (2,Dg,3Dg) bf16."""
    Sx, Bx, G6 = gates_sbg.shape
    Dg = G6 // 6
    fwd_map = lambda t: (t, 0, 0)
    bwd_map = lambda t: (Sx - 1 - t, 0, 0)
    full = lambda t: (0, 0, 0)
    return pl.pallas_call(
        _bigru_kernel,
        grid=(Sx,),
        in_specs=[pl.BlockSpec((1, Bx, G6), fwd_map),
                  pl.BlockSpec((1, Bx, G6), bwd_map),
                  pl.BlockSpec(whh.shape, full),
                  pl.BlockSpec(bhh.shape, full)],
        out_specs=[pl.BlockSpec((1, Bx, Dg), fwd_map),
                   pl.BlockSpec((1, Bx, Dg), bwd_map)],
        out_shape=[jax.ShapeDtypeStruct((Sx, Bx, Dg), jnp.float32),
                   jax.ShapeDtypeStruct((Sx, Bx, Dg), jnp.float32)],
        scratch_shapes=[pltpu.VMEM((2, Bx, Dg), jnp.float32)],
        compiler_params=pltpu.CompilerParams(dimension_semantics=("arbitrary",)),
    )(gates_sbg, gates_sbg, whh, bhh)


# -------------------- parameters (PyTorch layout) ------------------------------
def init_params(key):
    keys = iter(jax.random.split(key, 64))
    nrm = lambda shape: 0.02 * jax.random.normal(next(keys), shape, jnp.float32)
    p = {}
    # BertEmbeddings
    p["word_emb"] = nrm((VOCAB, H))
    p["pos_emb"] = nrm((MAX_POS, H))
    p["type_emb"] = nrm((TYPE_VOCAB, H))
    p["emb_ln_g"] = jnp.ones((H,), jnp.float32)
    p["emb_ln_b"] = jnp.zeros((H,), jnp.float32)
    # DetectionNetwork: bidirectional GRU + two dense heads (PyTorch r,z,n chunks)
    for d in ("fwd", "bwd"):
        p[f"gru_{d}_wih"] = nrm((3, D_GRU, H))
        p[f"gru_{d}_whh"] = nrm((3, D_GRU, D_GRU))
        p[f"gru_{d}_bih"] = jnp.zeros((3, D_GRU), jnp.float32)
        p[f"gru_{d}_bhh"] = jnp.zeros((3, D_GRU), jnp.float32)
    p["det_w"] = nrm((2, 2 * D_GRU))
    p["det_b"] = jnp.zeros((2,), jnp.float32)
    p["coef_w"] = nrm((1, 2 * D_GRU))
    p["coef_b"] = jnp.zeros((1,), jnp.float32)
    # BertEncoder layers
    p["layers"] = []
    for _ in range(N_LAYERS):
        p["layers"].append(dict(
            q_w=nrm((H, H)), q_b=jnp.zeros((H,), jnp.float32),
            k_w=nrm((H, H)), k_b=jnp.zeros((H,), jnp.float32),
            v_w=nrm((H, H)), v_b=jnp.zeros((H,), jnp.float32),
            ao_w=nrm((H, H)), ao_b=jnp.zeros((H,), jnp.float32),
            ln1_g=jnp.ones((H,), jnp.float32), ln1_b=jnp.zeros((H,), jnp.float32),
            i_w=nrm((INTER, H)), i_b=jnp.zeros((INTER,), jnp.float32),
            o_w=nrm((H, INTER)), o_b=jnp.zeros((H,), jnp.float32),
            ln2_g=jnp.ones((H,), jnp.float32), ln2_b=jnp.zeros((H,), jnp.float32),
        ))
    # NOTE: BertPooler parameters omitted — its output is discarded by forward().
    # correction output layer: hidden -> vocab
    p["out_w"] = nrm((VOCAB, H))
    p["out_b"] = jnp.zeros((VOCAB,), jnp.float32)
    return p


def prepare_params(p):
    """One-time repack: transpose to (K, N), fuse weights, cast matmul operands
    to bf16.  Biases / LN params stay f32 and are pre-shaped to (1, N)."""
    t_bf16 = lambda w: jnp.transpose(w).astype(jnp.bfloat16)
    row = lambda v: v.reshape(1, -1).astype(jnp.float32)

    q = {"word_emb": p["word_emb"], "pos_emb": p["pos_emb"], "type_emb": p["type_emb"],
         "emb_ln_g": row(p["emb_ln_g"]), "emb_ln_b": row(p["emb_ln_b"]),
         "mask_emb": p["word_emb"][MASK_ID].reshape(1, H)}

    # bi-GRU: hoisted input projections -> (H, 6*Dg); recurrent weights (2, Dg, 3Dg)
    wih, bih, whh, bhh = [], [], [], []
    for d in ("fwd", "bwd"):
        wih.append(jnp.transpose(p[f"gru_{d}_wih"].reshape(3 * D_GRU, H)))
        bih.append(p[f"gru_{d}_bih"].reshape(3 * D_GRU))
        whh.append(jnp.transpose(p[f"gru_{d}_whh"].reshape(3 * D_GRU, D_GRU)))
        bhh.append(p[f"gru_{d}_bhh"].reshape(1, 3 * D_GRU))
    q["gru_wih"] = jnp.concatenate(wih, axis=1).astype(jnp.bfloat16)    # (H, 6Dg)
    q["gru_bih"] = jnp.concatenate(bih, axis=0).reshape(1, 6 * D_GRU)
    q["gru_whh"] = jnp.stack(whh, axis=0).astype(jnp.bfloat16)          # (2, Dg, 3Dg)
    q["gru_bhh"] = jnp.stack(bhh, axis=0)                               # (2, 1, 3Dg)

    # detection + coefficient heads fused: columns = [det0, det1, coef]
    q["w_heads"] = jnp.concatenate(
        [jnp.transpose(p["det_w"]), jnp.transpose(p["coef_w"])], axis=1).astype(jnp.bfloat16)
    q["b_heads"] = jnp.concatenate([p["det_b"], p["coef_b"]]).reshape(1, 3)

    q["layers"] = []
    for lp in p["layers"]:
        q["layers"].append(dict(
            w_qkv=jnp.concatenate([jnp.transpose(lp["q_w"]), jnp.transpose(lp["k_w"]),
                                   jnp.transpose(lp["v_w"])], axis=1).astype(jnp.bfloat16),
            b_qkv=jnp.concatenate([lp["q_b"], lp["k_b"], lp["v_b"]]).reshape(1, 3 * H),
            w_ao=t_bf16(lp["ao_w"]), b_ao=row(lp["ao_b"]),
            ln1_g=row(lp["ln1_g"]), ln1_b=row(lp["ln1_b"]),
            w_i=t_bf16(lp["i_w"]), b_i=row(lp["i_b"]),
            w_o=t_bf16(lp["o_w"]), b_o=row(lp["o_b"]),
            ln2_g=row(lp["ln2_g"]), ln2_b=row(lp["ln2_b"]),
        ))
    q["w_out"] = t_bf16(p["out_w"])
    q["b_out"] = row(p["out_b"])
    return q


# -------------------- full forward ---------------------------------------------
def soft_masked_bert_forward(p, input_ids, attention_mask, token_type_ids, position_ids):
    input_ids = input_ids.astype(jnp.int32)
    attention_mask = attention_mask.astype(jnp.int32)
    token_type_ids = token_type_ids.astype(jnp.int32)
    position_ids = position_ids.astype(jnp.int32)
    Bx, Sx = input_ids.shape
    M = Bx * Sx

    # extended attention mask: (B, 1, S) additive, -10000 on padding
    ext_mask = (1.0 - attention_mask.astype(jnp.float32))[:, None, :] * -10000.0

    # BertEmbeddings: gathers stay as XLA glue; LayerNorm runs in Pallas
    emb = (jnp.take(p["word_emb"], input_ids, axis=0)
           + jnp.take(p["pos_emb"], position_ids, axis=0)
           + jnp.take(p["type_emb"], token_type_ids, axis=0))
    input_embeddings = layernorm(emb.reshape(M, H), p["emb_ln_g"], p["emb_ln_b"])  # (M, H)
    emb_bsh = input_embeddings.reshape(Bx, Sx, H)

    # DetectionNetwork: x·W_ih hoisted into one matmul (both directions), then the
    # sequential recurrence handles only h·W_hh (fwd + bwd in one pallas_call).
    x_sbh = jnp.transpose(emb_bsh, (1, 0, 2))                             # (S, B, H)
    gates = linear(x_sbh.reshape(Sx * Bx, H), p["gru_wih"], p["gru_bih"]) # (S*B, 6Dg)
    h_fwd, h_bwd = bigru(gates.reshape(Sx, Bx, 6 * D_GRU), p["gru_whh"], p["gru_bhh"])
    gru_out = jnp.concatenate([h_fwd, h_bwd], axis=-1)                    # (S, B, 2Dg)
    gru2d = jnp.transpose(gru_out, (1, 0, 2)).reshape(M, 2 * D_GRU)

    # detection head + coefficient head + sigmoid + soft mask, fused
    det2d, soft_masked = det_and_softmask(gru2d, p["w_heads"], p["b_heads"],
                                          input_embeddings, p["mask_emb"])
    detection_output = det2d.reshape(Bx, Sx, 2)

    # BertEncoder: 4 fused pallas_calls per layer
    hidden = soft_masked                                                  # (M, H)
    for lp in p["layers"]:
        qkv = linear(hidden, lp["w_qkv"], lp["b_qkv"])                    # (M, 3H)
        ctx = attention(qkv.reshape(Bx, Sx, 3 * H), ext_mask)             # (B, S, H)
        hidden = attn_out_ln(ctx.reshape(M, H), hidden,
                             lp["w_ao"], lp["b_ao"], lp["ln1_g"], lp["ln1_b"])
        hidden = ffn_ln(hidden, lp["w_i"], lp["b_i"], lp["w_o"], lp["b_o"],
                        lp["ln2_g"], lp["ln2_b"])

    # residual connection + correction output projection (hidden -> vocab), fused
    final_outputs = resid_out(hidden, input_embeddings,
                              p["w_out"], p["b_out"]).reshape(Bx, Sx, VOCAB)

    # NOTE: BertPooler tanh head intentionally dropped (result unused by forward()).
    return detection_output, final_outputs


# -------------------- driver -----------------------------------------------------
if __name__ == "__main__":
    key = jax.random.PRNGKey(0)
    kp, ki = jax.random.split(key)
    params = prepare_params(init_params(kp))

    input_ids = jax.random.randint(ki, (B, S), 0, VOCAB, dtype=jnp.int32)
    attention_mask = jnp.concatenate(
        [jnp.ones((B, S - 2), jnp.int32), jnp.zeros((B, 2), jnp.int32)], axis=1)
    token_type_ids = jnp.zeros((B, S), jnp.int32)
    position_ids = jnp.broadcast_to(jnp.arange(S, dtype=jnp.int32), (B, S))

    fwd = jax.jit(partial(soft_masked_bert_forward, params))
    det_out, final_out = fwd(input_ids, attention_mask, token_type_ids, position_ids)
    jax.block_until_ready((det_out, final_out))

    assert det_out.shape == (B, S, 2)
    assert final_out.shape == (B, S, VOCAB)
    assert bool(jnp.all(jnp.isfinite(det_out))) and bool(jnp.all(jnp.isfinite(final_out)))
    print("KERNEL_OK")
</pallas_src>

<mosaic_0001>
module attributes {stable_mosaic.version = 11 : i64} {
  func.func @_layernorm_kernel(%arg0: i32, %arg1: memref<8x32xf32, #tpu.memory_space<vmem>>, %arg2: memref<1x32xf32, #tpu.memory_space<vmem>>, %arg3: memref<1x32xf32, #tpu.memory_space<vmem>>, %arg4: memref<8x32xf32, #tpu.memory_space<vmem>>) attributes {dimension_semantics = [#tpu.dimension_semantics<parallel>], iteration_bounds = array<i64: 2>, scalar_prefetch = 0 : i64, scratch_operands = 0 : i64, tpu.core_type = #tpu.core_type<tc>, window_params = [{transform_indices = @transform_0, window_bounds = array<i64: 8, 32>}, {pipeline_mode = #tpu.pipeline_mode<synchronous>, transform_indices = @transform_1, window_bounds = array<i64: 1, 32>}, {pipeline_mode = #tpu.pipeline_mode<synchronous>, transform_indices = @transform_2, window_bounds = array<i64: 1, 32>}, {transform_indices = @transform_3, window_bounds = array<i64: 8, 32>}]} {
    %c0 = arith.constant 0 : index
    %c0_0 = arith.constant 0 : index
    %0 = vector.load %arg1[%c0, %c0_0] : memref<8x32xf32, #tpu.memory_space<vmem>>, vector<8x32xf32>
    %c0_1 = arith.constant 0 : index
    %c0_2 = arith.constant 0 : index
    %1 = vector.load %arg2[%c0_1, %c0_2] : memref<1x32xf32, #tpu.memory_space<vmem>>, vector<1x32xf32>
    %c0_3 = arith.constant 0 : index
    %c0_4 = arith.constant 0 : index
    %2 = vector.load %arg3[%c0_3, %c0_4] : memref<1x32xf32, #tpu.memory_space<vmem>>, vector<1x32xf32>
    %cst = arith.constant dense<0.000000e+00> : vector<8xf32>
    %3 = vector.multi_reduction <add>, %0, %cst [1] : vector<8x32xf32> to vector<8xf32>
    %4 = vector.shape_cast %3 : vector<8xf32> to vector<8x1xf32>
    %cst_5 = arith.constant 3.200000e+01 : f32
    %5 = vector.broadcast %cst_5 : f32 to vector<8x1xf32>
    %6 = arith.divf %4, %5 : vector<8x1xf32>
    %7 = vector.broadcast %6 : vector<8x1xf32> to vector<8x32xf32>
    %8 = arith.subf %0, %7 : vector<8x32xf32>
    %9 = arith.mulf %8, %8 : vector<8x32xf32>
    %cst_6 = arith.constant dense<0.000000e+00> : vector<8xf32>
    %10 = vector.multi_reduction <add>, %9, %cst_6 [1] : vector<8x32xf32> to vector<8xf32>
    %11 = vector.shape_cast %10 : vector<8xf32> to vector<8x1xf32>
    %cst_7 = arith.constant 3.200000e+01 : f32
    %12 = vector.broadcast %cst_7 : f32 to vector<8x1xf32>
    %13 = arith.divf %11, %12 : vector<8x1xf32>
    %14 = vector.broadcast %6 : vector<8x1xf32> to vector<8x32xf32>
    %15 = arith.subf %0, %14 : vector<8x32xf32>
    %cst_8 = arith.constant 9.99999996E-13 : f32
    %16 = vector.broadcast %cst_8 : f32 to vector<8x1xf32>
    %17 = arith.addf %13, %16 : vector<8x1xf32>
    %18 = math.rsqrt %17 : vector<8x1xf32>
    %19 = vector.broadcast %18 : vector<8x1xf32> to vector<8x32xf32>
    %20 = arith.mulf %15, %19 : vector<8x32xf32>
    %21 = vector.broadcast %1 : vector<1x32xf32> to vector<8x32xf32>
    %22 = arith.mulf %20, %21 : vector<8x32xf32>
    %23 = vector.broadcast %2 : vector<1x32xf32> to vector<8x32xf32>
    %24 = arith.addf %22, %23 : vector<8x32xf32>
    %c0_9 = arith.constant 0 : index
    %c0_10 = arith.constant 0 : index
    %25 = vector.load %arg4[%c0_9, %c0_10] : memref<8x32xf32, #tpu.memory_space<vmem>>, vector<8x32xf32>
    tpu.vector_store %arg4[%c0_9, %c0_10], %24 {strides = array<i32>} : memref<8x32xf32, #tpu.memory_space<vmem>>, vector<8x32xf32>,
    return
  }
  func.func @transform_0(%arg0: i32) -> (i32, i32) {
    %c0_i32 = arith.constant 0 : i32
    %c0_i32_0 = arith.constant 0 : i32
    return %arg0, %c0_i32 : i32, i32
  }
  func.func @transform_1(%arg0: i32) -> (i32, i32) {
    %c0_i32 = arith.constant 0 : i32
    %c0_i32_0 = arith.constant 0 : i32
    %c0_i32_1 = arith.constant 0 : i32
    return %c0_i32, %c0_i32_0 : i32, i32
  }
  func.func @transform_2(%arg0: i32) -> (i32, i32) {
    %c0_i32 = arith.constant 0 : i32
    %c0_i32_0 = arith.constant 0 : i32
    %c0_i32_1 = arith.constant 0 : i32
    return %c0_i32, %c0_i32_0 : i32, i32
  }
  func.func @transform_3(%arg0: i32) -> (i32, i32) {
    %c0_i32 = arith.constant 0 : i32
    %c0_i32_0 = arith.constant 0 : i32
    return %arg0, %c0_i32 : i32, i32
  }
}

module attributes {stable_mosaic.version = 11 : i64} {
  func.func @_linear_kernel(%arg0: i32, %arg1: memref<8x32xf32, #tpu.memory_space<vmem>>, %arg2: memref<32x96xbf16, #tpu.memory_space<vmem>>, %arg3: memref<1x96xf32, #tpu.memory_space<vmem>>, %arg4: memref<8x96xf32, #tpu.memory_space<vmem>>) attributes {dimension_semantics = [#tpu.dimension_semantics<parallel>], iteration_bounds = array<i64: 2>, scalar_prefetch = 0 : i64, scratch_operands = 0 : i64, tpu.core_type = #tpu.core_type<tc>, window_params = [{transform_indices = @transform_0, window_bounds = array<i64: 8, 32>}, {pipeline_mode = #tpu.pipeline_mode<synchronous>, transform_indices = @transform_1, window_bounds = array<i64: 32, 96>}, {pipeline_mode = #tpu.pipeline_mode<synchronous>, transform_indices = @transform_2, window_bounds = array<i64: 1, 96>}, {transform_indices = @transform_3, window_bounds = array<i64: 8, 96>}]} {
    %c0 = arith.constant 0 : index
    %c0_0 = arith.constant 0 : index
    %0 = vector.load %arg1[%c0, %c0_0] : memref<8x32xf32, #tpu.memory_space<vmem>>, vector<8x32xf32>
    %1 = arith.truncf %0 : vector<8x32xf32> to vector<8x32xbf16>
    %c0_1 = arith.constant 0 : index
    %c0_2 = arith.constant 0 : index
    %2 = vector.load %arg2[%c0_1, %c0_2] : memref<32x96xbf16, #tpu.memory_space<vmem>>, vector<32x96xbf16>
    %cst = arith.constant dense<0.000000e+00> : vector<8x96xf32>
    %3 = tpu.matmul %1, %2, %cst {dimension_numbers = #tpu.dot_dimension_numbers<[1], [0], [0], [1], [0, 0, 1, 1], [], []>} : vector<8x32xbf16>, vector<32x96xbf16>, vector<8x96xf32> -> vector<8x96xf32>
    %c0_3 = arith.constant 0 : index
    %c0_4 = arith.constant 0 : index
    %4 = vector.load %arg3[%c0_3, %c0_4] : memref<1x96xf32, #tpu.memory_space<vmem>>, vector<1x96xf32>
    %5 = vector.broadcast %4 : vector<1x96xf32> to vector<8x96xf32>
    %6 = arith.addf %3, %5 : vector<8x96xf32>
    %c0_5 = arith.constant 0 : index
    %c0_6 = arith.constant 0 : index
    %7 = vector.load %arg4[%c0_5, %c0_6] : memref<8x96xf32, #tpu.memory_space<vmem>>, vector<8x96xf32>
    tpu.vector_store %arg4[%c0_5, %c0_6], %6 {strides = array<i32>} : memref<8x96xf32, #tpu.memory_space<vmem>>, vector<8x96xf32>,
    return
  }
  func.func @transform_0(%arg0: i32) -> (i32, i32) {
    %c0_i32 = arith.constant 0 : i32
    %c0_i32_0 = arith.constant 0 : i32
    return %arg0, %c0_i32 : i32, i32
  }
  func.func @transform_1(%arg0: i32) -> (i32, i32) {
    %c0_i32 = arith.constant 0 : i32
    %c0_i32_0 = arith.constant 0 : i32
    %c0_i32_1 = arith.constant 0 : i32
    return %c0_i32, %c0_i32_0 : i32, i32
  }
  func.func @transform_2(%arg0: i32) -> (i32, i32) {
    %c0_i32 = arith.constant 0 : i32
    %c0_i32_0 = arith.constant 0 : i32
    %c0_i32_1 = arith.constant 0 : i32
    return %c0_i32, %c0_i32_0 : i32, i32
  }
  func.func @transform_3(%arg0: i32) -> (i32, i32) {
    %c0_i32 = arith.constant 0 : i32
    %c0_i32_0 = arith.constant 0 : i32
    return %arg0, %c0_i32 : i32, i32
  }
}

module attributes {stable_mosaic.version = 11 : i64} {
  func.func @_bigru_kernel(%arg0: i32, %arg1: memref<1x2x96xf32, #tpu.memory_space<vmem>>, %arg2: memref<1x2x96xf32, #tpu.memory_space<vmem>>, %arg3: memref<2x16x48xbf16, #tpu.memory_space<vmem>>, %arg4: memref<2x1x48xf32, #tpu.memory_space<vmem>>, %arg5: memref<1x2x16xf32, #tpu.memory_space<vmem>>, %arg6: memref<1x2x16xf32, #tpu.memory_space<vmem>>, %arg7: memref<2x2x16xf32, #tpu.memory_space<vmem>>) attributes {dimension_semantics = [#tpu.dimension_semantics<arbitrary>], iteration_bounds = array<i64: 8>, scalar_prefetch = 0 : i64, scratch_operands = 1 : i64, tpu.core_type = #tpu.core_type<tc>, window_params = [{transform_indices = @transform_0, window_bounds = array<i64: 1, 2, 96>}, {transform_indices = @transform_1, window_bounds = array<i64: 1, 2, 96>}, {pipeline_mode = #tpu.pipeline_mode<synchronous>, transform_indices = @transform_2, window_bounds = array<i64: 2, 16, 48>}, {pipeline_mode = #tpu.pipeline_mode<synchronous>, transform_indices = @transform_3, window_bounds = array<i64: 2, 1, 48>}, {transform_indices = @transform_4, window_bounds = array<i64: 1, 2, 16>}, {transform_indices = @transform_5, window_bounds = array<i64: 1, 2, 16>}]} {
    %c0_i32 = arith.constant 0 : i32
    %0 = arith.cmpi eq, %arg0, %c0_i32 : i32
    %1 = arith.extui %0 : i1 to i32
    %c0_i32_0 = arith.constant 0 : i32
    %2 = arith.cmpi ne, %1, %c0_i32_0 : i32
    scf.if %2 {
      %cst_42 = arith.constant 0.000000e+00 : f32
      %93 = vector.broadcast %cst_42 : f32 to vector<2x2x16xf32>
      %c0_43 = arith.constant 0 : index
      %c0_44 = arith.constant 0 : index
      %c0_45 = arith.constant 0 : index
      %94 = vector.load %arg7[%c0_43, %c0_44, %c0_45] : memref<2x2x16xf32, #tpu.memory_space<vmem>>, vector<2x2x16xf32>
      tpu.vector_store %arg7[%c0_43, %c0_44, %c0_45], %93 {strides = array<i32>} : memref<2x2x16xf32, #tpu.memory_space<vmem>>, vector<2x2x16xf32>,
    } else {
    }
    %c0 = arith.constant 0 : index
    %c0_1 = arith.constant 0 : index
    %c0_2 = arith.constant 0 : index
    %3 = vector.load %arg1[%c0, %c0_1, %c0_2] : memref<1x2x96xf32, #tpu.memory_space<vmem>>, vector<1x2x96xf32>
    %4 = vector.shape_cast %3 : vector<1x2x96xf32> to vector<2x96xf32>
    %5 = vector.extract_strided_slice %4 {offsets = [0, 0], sizes = [2, 48], strides = [1, 1]} : vector<2x96xf32> to vector<2x48xf32>
    %c0_3 = arith.constant 0 : index
    %c0_4 = arith.constant 0 : index
    %c0_5 = arith.constant 0 : index
    %6 = vector.load %arg2[%c0_3, %c0_4, %c0_5] : memref<1x2x96xf32, #tpu.memory_space<vmem>>, vector<1x2x96xf32>
    %7 = vector.shape_cast %6 : vector<1x2x96xf32> to vector<2x96xf32>
    %8 = vector.extract_strided_slice %7 {offsets = [0, 48], sizes = [2, 48], strides = [1, 1]} : vector<2x96xf32> to vector<2x48xf32>
    %c0_6 = arith.constant 0 : index
    %c0_7 = arith.constant 0 : index
    %c0_8 = arith.constant 0 : index
    %9 = vector.load %arg7[%c0_6, %c0_7, %c0_8] : memref<2x2x16xf32, #tpu.memory_space<vmem>>, vector<1x2x16xf32>
    %10 = vector.shape_cast %9 : vector<1x2x16xf32> to vector<2x16xf32>
    %c0_9 = arith.constant 0 : index
    %c0_10 = arith.constant 0 : index
    %c0_11 = arith.constant 0 : index
    %11 = vector.load %arg3[%c0_9, %c0_10, %c0_11] : memref<2x16x48xbf16, #tpu.memory_space<vmem>>, vector<1x16x48xbf16>
    %12 = vector.shape_cast %11 : vector<1x16x48xbf16> to vector<16x48xbf16>
    %c0_12 = arith.constant 0 : index
    %c0_13 = arith.constant 0 : index
    %c0_14 = arith.constant 0 : index
    %13 = vector.load %arg4[%c0_12, %c0_13, %c0_14] : memref<2x1x48xf32, #tpu.memory_space<vmem>>, vector<1x1x48xf32>
    %14 = vector.shape_cast %13 : vector<1x1x48xf32> to vector<1x48xf32>
    %15 = arith.truncf %10 : vector<2x16xf32> to vector<2x16xbf16>
    %cst = arith.constant dense<0.000000e+00> : vector<2x48xf32>
    %16 = tpu.matmul %15, %12, %cst {dimension_numbers = #tpu.dot_dimension_numbers<[1], [0], [0], [1], [0, 0, 1, 1], [], []>} : vector<2x16xbf16>, vector<16x48xbf16>, vector<2x48xf32> -> vector<2x48xf32>
    %17 = vector.broadcast %14 : vector<1x48xf32> to vector<2x48xf32>
    %18 = arith.addf %16, %17 : vector<2x48xf32>
    %19 = vector.extract_strided_slice %5 {offsets = [0, 0], sizes = [2, 16], strides = [1, 1]} : vector<2x48xf32> to vector<2x16xf32>
    %20 = vector.extract_strided_slice %18 {offsets = [0, 0], sizes = [2, 16], strides = [1, 1]} : vector<2x48xf32> to vector<2x16xf32>
    %21 = arith.addf %19, %20 : vector<2x16xf32>
    %22 = arith.negf %21 : vector<2x16xf32>
    %23 = math.exp %22 : vector<2x16xf32>
    %cst_15 = arith.constant 1.000000e+00 : f32
    %24 = vector.broadcast %cst_15 : f32 to vector<2x16xf32>
    %25 = arith.addf %24, %23 : vector<2x16xf32>
    %26 = arith.divf %24, %25 : vector<2x16xf32>
    %27 = vector.extract_strided_slice %5 {offsets = [0, 16], sizes = [2, 16], strides = [1, 1]} : vector<2x48xf32> to vector<2x16xf32>
    %28 = vector.extract_strided_slice %18 {offsets = [0, 16], sizes = [2, 16], strides = [1, 1]} : vector<2x48xf32> to vector<2x16xf32>
    %29 = arith.addf %27, %28 : vector<2x16xf32>
    %30 = arith.negf %29 : vector<2x16xf32>
    %31 = math.exp %30 : vector<2x16xf32>
    %cst_16 = arith.constant 1.000000e+00 : f32
    %32 = vector.broadcast %cst_16 : f32 to vector<2x16xf32>
    %33 = arith.addf %32, %31 : vector<2x16xf32>
    %34 = arith.divf %32, %33 : vector<2x16xf32>
    %35 = vector.extract_strided_slice %5 {offsets = [0, 32], sizes = [2, 16], strides = [1, 1]} : vector<2x48xf32> to vector<2x16xf32>
    %36 = vector.extract_strided_slice %18 {offsets = [0, 32], sizes = [2, 16], strides = [1, 1]} : vector<2x48xf32> to vector<2x16xf32>
    %37 = arith.mulf %26, %36 : vector<2x16xf32>
    %38 = arith.addf %35, %37 : vector<2x16xf32>
    %39 = math.tanh %38 : vector<2x16xf32>
    %cst_17 = arith.constant 1.000000e+00 : f32
    %40 = vector.broadcast %cst_17 : f32 to vector<2x16xf32>
    %41 = arith.subf %40, %34 : vector<2x16xf32>
    %42 = arith.mulf %41, %39 : vector<2x16xf32>
    %43 = arith.mulf %34, %10 : vector<2x16xf32>
    %44 = arith.addf %42, %43 : vector<2x16xf32>
    %c1 = arith.constant 1 : index
    %c0_18 = arith.constant 0 : index
    %c0_19 = arith.constant 0 : index
    %45 = vector.load %arg7[%c1, %c0_18, %c0_19] : memref<2x2x16xf32, #tpu.memory_space<vmem>>, vector<1x2x16xf32>
    %46 = vector.shape_cast %45 : vector<1x2x16xf32> to vector<2x16xf32>
    %c1_20 = arith.constant 1 : index
    %c0_21 = arith.constant 0 : index
    %c0_22 = arith.constant 0 : index
    %47 = vector.load %arg3[%c1_20, %c0_21, %c0_22] : memref<2x16x48xbf16, #tpu.memory_space<vmem>>, vector<1x16x48xbf16>
    %48 = vector.shape_cast %47 : vector<1x16x48xbf16> to vector<16x48xbf16>
    %c1_23 = arith.constant 1 : index
    %c0_24 = arith.constant 0 : index
    %c0_25 = arith.constant 0 : index
    %49 = vector.load %arg4[%c1_23, %c0_24, %c0_25] : memref<2x1x48xf32, #tpu.memory_space<vmem>>, vector<1x1x48xf32>
    %50 = vector.shape_cast %49 : vector<1x1x48xf32> to vector<1x48xf32>
    %51 = arith.truncf %46 : vector<2x16xf32> to vector<2x16xbf16>
    %cst_26 = arith.constant dense<0.000000e+00> : vector<2x48xf32>
    %52 = tpu.matmul %51, %48, %cst_26 {dimension_numbers = #tpu.dot_dimension_numbers<[1], [0], [0], [1], [0, 0, 1, 1], [], []>} : vector<2x16xbf16>, vector<16x48xbf16>, vector<2x48xf32> -> vector<2x48xf32>
    %53 = vector.broadcast %50 : vector<1x48xf32> to vector<2x48xf32>
    %54 = arith.addf %52, %53 : vector<2x48xf32>
    %55 = vector.extract_strided_slice %8 {offsets = [0, 0], sizes = [2, 16], strides = [1, 1]} : vector<2x48xf32> to vector<2x16xf32>
    %56 = vector.extract_strided_slice %54 {offsets = [0, 0], sizes = [2, 16], strides = [1, 1]} : vector<2x48xf32> to vector<2x16xf32>
    %57 = arith.addf %55, %56 : vector<2x16xf32>
    %58 = arith.negf %57 : vector<2x16xf32>
    %59 = math.exp %58 : vector<2x16xf32>
    %cst_27 = arith.constant 1.000000e+00 : f32
    %60 = vector.broadcast %cst_27 : f32 to vector<2x16xf32>
    %61 = arith.addf %60, %59 : vector<2x16xf32>
    %62 = arith.divf %60, %61 : vector<2x16xf32>
    %63 = vector.extract_strided_slice %8 {offsets = [0, 16], sizes = [2, 16], strides = [1, 1]} : vector<2x48xf32> to vector<2x16xf32>
    %64 = vector.extract_strided_slice %54 {offsets = [0, 16], sizes = [2, 16], strides = [1, 1]} : vector<2x48xf32> to vector<2x16xf32>
    %65 = arith.addf %63, %64 : vector<2x16xf32>
    %66 = arith.negf %65 : vector<2x16xf32>
    %67 = math.exp %66 : vector<2x16xf32>
    %cst_28 = arith.constant 1.000000e+00 : f32
    %68 = vector.broadcast %cst_28 : f32 to vector<2x16xf32>
    %69 = arith.addf %68, %67 : vector<2x16xf32>
    %70 = arith.divf %68, %69 : vector<2x16xf32>
    %71 = vector.extract_strided_slice %8 {offsets = [0, 32], sizes = [2, 16], strides = [1, 1]} : vector<2x48xf32> to vector<2x16xf32>
    %72 = vector.extract_strided_slice %54 {offsets = [0, 32], sizes = [2, 16], strides = [1, 1]} : vector<2x48xf32> to vector<2x16xf32>
    %73 = arith.mulf %62, %72 : vector<2x16xf32>
    %74 = arith.addf %71, %73 : vector<2x16xf32>
    %75 = math.tanh %74 : vector<2x16xf32>
    %cst_29 = arith.constant 1.000000e+00 : f32
    %76 = vector.broadcast %cst_29 : f32 to vector<2x16xf32>
    %77 = arith.subf %76, %70 : vector<2x16xf32>
    %78 = arith.mulf %77, %75 : vector<2x16xf32>
    %79 = arith.mulf %70, %46 : vector<2x16xf32>
    %80 = arith.addf %78, %79 : vector<2x16xf32>
    %c0_30 = arith.constant 0 : index
    %c0_31 = arith.constant 0 : index
    %c0_32 = arith.constant 0 : index
    %81 = vector.load %arg7[%c0_30, %c0_31, %c0_32] : memref<2x2x16xf32, #tpu.memory_space<vmem>>, vector<1x2x16xf32>
    %82 = vector.shape_cast %81 : vector<1x2x16xf32> to vector<2x16xf32>
    %83 = vector.shape_cast %44 : vector<2x16xf32> to vector<1x2x16xf32>
    tpu.vector_store %arg7[%c0_30, %c0_31, %c0_32], %83 {strides = array<i32>} : memref<2x2x16xf32, #tpu.memory_space<vmem>>, vector<1x2x16xf32>,
    %c1_33 = arith.constant 1 : index
    %c0_34 = arith.constant 0 : index
    %c0_35 = arith.constant 0 : index
    %84 = vector.load %arg7[%c1_33, %c0_34, %c0_35] : memref<2x2x16xf32, #tpu.memory_space<vmem>>, vector<1x2x16xf32>
    %85 = vector.shape_cast %84 : vector<1x2x16xf32> to vector<2x16xf32>
    %86 = vector.shape_cast %80 : vector<2x16xf32> to vector<1x2x16xf32>
    tpu.vector_store %arg7[%c1_33, %c0_34, %c0_35], %86 {strides = array<i32>} : memref<2x2x16xf32, #tpu.memory_space<vmem>>, vector<1x2x16xf32>,
    %c0_36 = arith.constant 0 : index
    %c0_37 = arith.constant 0 : index
    %c0_38 = arith.constant 0 : index
    %87 = vector.load %arg5[%c0_36, %c0_37, %c0_38] : memref<1x2x16xf32, #tpu.memory_space<vmem>>, vector<1x2x16xf32>
    %88 = vector.shape_cast %87 : vector<1x2x16xf32> to vector<2x16xf32>
    %89 = vector.shape_cast %44 : vector<2x16xf32> to vector<1x2x16xf32>
    tpu.vector_store %arg5[%c0_36, %c0_37, %c0_38], %89 {strides = array<i32>} : memref<1x2x16xf32, #tpu.memory_space<vmem>>, vector<1x2x16xf32>,
    %c0_39 = arith.constant 0 : index
    %c0_40 = arith.constant 0 : index
    %c0_41 = arith.constant 0 : index
    %90 = vector.load %arg6[%c0_39, %c0_40, %c0_41] : memref<1x2x16xf32, #tpu.memory_space<vmem>>, vector<1x2x16xf32>
    %91 = vector.shape_cast %90 : vector<1x2x16xf32> to vector<2x16xf32>
    %92 = vector.shape_cast %80 : vector<2x16xf32> to vector<1x2x16xf32>
    tpu.vector_store %arg6[%c0_39, %c0_40, %c0_41], %92 {strides = array<i32>} : memref<1x2x16xf32, #tpu.memory_space<vmem>>, vector<1x2x16xf32>,
    return
  }
  func.func @transform_0(%arg0: i32) -> (i32, i32, i32) {
    %c0_i32 = arith.constant 0 : i32
    %c0_i32_0 = arith.constant 0 : i32
    %c0_i32_1 = arith.constant 0 : i32
    return %arg0, %c0_i32, %c0_i32_0 : i32, i32, i32
  }
  func.func @transform_1(%arg0: i32) -> (i32, i32, i32) {
    %c7_i32 = arith.constant 7 : i32
    %0 = arith.subi %c7_i32, %arg0 : i32
    %c0_i32 = arith.constant 0 : i32
    %c0_i32_0 = arith.constant 0 : i32
    %c0_i32_1 = arith.constant 0 : i32
    return %0, %c0_i32, %c0_i32_0 : i32, i32, i32
  }
  func.func @transform_2(%arg0: i32) -> (i32, i32, i32) {
    %c0_i32 = arith.constant 0 : i32
    %c0_i32_0 = arith.constant 0 : i32
    %c0_i32_1 = arith.constant 0 : i32
    %c0_i32_2 = arith.constant 0 : i32
    return %c0_i32, %c0_i32_0, %c0_i32_1 : i32, i32, i32
  }
  func.func @transform_3(%arg0: i32) -> (i32, i32, i32) {
    %c0_i32 = arith.constant 0 : i32
    %c0_i32_0 = arith.constant 0 : i32
    %c0_i32_1 = arith.constant 0 : i32
    %c0_i32_2 = arith.constant 0 : i32
    return %c0_i32, %c0_i32_0, %c0_i32_1 : i32, i32, i32
  }
  func.func @transform_4(%arg0: i32) -> (i32, i32, i32) {
    %c0_i32 = arith.constant 0 : i32
    %c0_i32_0 = arith.constant 0 : i32
    %c0_i32_1 = arith.constant 0 : i32
    return %arg0, %c0_i32, %c0_i32_0 : i32, i32, i32
  }
  func.func @transform_5(%arg0: i32) -> (i32, i32, i32) {
    %c7_i32 = arith.constant 7 : i32
    %0 = arith.subi %c7_i32, %arg0 : i32
    %c0_i32 = arith.constant 0 : i32
    %c0_i32_0 = arith.constant 0 : i32
    %c0_i32_1 = arith.constant 0 : i32
    return %0, %c0_i32, %c0_i32_0 : i32, i32, i32
  }
}

module attributes {stable_mosaic.version = 11 : i64} {
  func.func @_det_softmask_kernel(%arg0: i32, %arg1: memref<8x32xf32, #tpu.memory_space<vmem>>, %arg2: memref<32x3xbf16, #tpu.memory_space<vmem>>, %arg3: memref<1x3xf32, #tpu.memory_space<vmem>>, %arg4: memref<8x32xf32, #tpu.memory_space<vmem>>, %arg5: memref<1x32xf32, #tpu.memory_space<vmem>>, %arg6: memref<8x2xf32, #tpu.memory_space<vmem>>, %arg7: memref<8x32xf32, #tpu.memory_space<vmem>>) attributes {dimension_semantics = [#tpu.dimension_semantics<parallel>], iteration_bounds = array<i64: 2>, scalar_prefetch = 0 : i64, scratch_operands = 0 : i64, tpu.core_type = #tpu.core_type<tc>, window_params = [{transform_indices = @transform_0, window_bounds = array<i64: 8, 32>}, {pipeline_mode = #tpu.pipeline_mode<synchronous>, transform_indices = @transform_1, window_bounds = array<i64: 32, 3>}, {pipeline_mode = #tpu.pipeline_mode<synchronous>, transform_indices = @transform_2, window_bounds = array<i64: 1, 3>}, {transform_indices = @transform_3, window_bounds = array<i64: 8, 32>}, {pipeline_mode = #tpu.pipeline_mode<synchronous>, transform_indices = @transform_4, window_bounds = array<i64: 1, 32>}, {transform_indices = @transform_5, window_bounds = array<i64: 8, 2>}, {transform_indices = @transform_6, window_bounds = array<i64: 8, 32>}]} {
    %c0 = arith.constant 0 : index
    %c0_0 = arith.constant 0 : index
    %0 = vector.load %arg1[%c0, %c0_0] : memref<8x32xf32, #tpu.memory_space<vmem>>, vector<8x32xf32>
    %1 = arith.truncf %0 : vector<8x32xf32> to vector<8x32xbf16>
    %c0_1 = arith.constant 0 : index
    %c0_2 = arith.constant 0 : index
    %2 = vector.load %arg2[%c0_1, %c0_2] : memref<32x3xbf16, #tpu.memory_space<vmem>>, vector<32x3xbf16>
    %cst = arith.constant dense<0.000000e+00> : vector<8x3xf32>
    %3 = tpu.matmul %1, %2, %cst {dimension_numbers = #tpu.dot_dimension_numbers<[1], [0], [0], [1], [0, 0, 1, 1], [], []>} : vector<8x32xbf16>, vector<32x3xbf16>, vector<8x3xf32> -> vector<8x3xf32>
    %c0_3 = arith.constant 0 : index
    %c0_4 = arith.constant 0 : index
    %4 = vector.load %arg3[%c0_3, %c0_4] : memref<1x3xf32, #tpu.memory_space<vmem>>, vector<1x3xf32>
    %5 = vector.broadcast %4 : vector<1x3xf32> to vector<8x3xf32>
    %6 = arith.addf %3, %5 : vector<8x3xf32>
    %7 = vector.extract_strided_slice %6 {offsets = [0, 0], sizes = [8, 2], strides = [1, 1]} : vector<8x3xf32> to vector<8x2xf32>
    %c0_5 = arith.constant 0 : index
    %c0_6 = arith.constant 0 : index
    %8 = vector.load %arg6[%c0_5, %c0_6] : memref<8x2xf32, #tpu.memory_space<vmem>>, vector<8x2xf32>
    tpu.vector_store %arg6[%c0_5, %c0_6], %7 {strides = array<i32>} : memref<8x2xf32, #tpu.memory_space<vmem>>, vector<8x2xf32>,
    %9 = vector.extract_strided_slice %6 {offsets = [0, 2], sizes = [8, 1], strides = [1, 1]} : vector<8x3xf32> to vector<8x1xf32>
    %10 = arith.negf %9 : vector<8x1xf32>
    %11 = math.exp %10 : vector<8x1xf32>
    %cst_7 = arith.constant 1.000000e+00 : f32
    %12 = vector.broadcast %cst_7 : f32 to vector<8x1xf32>
    %13 = arith.addf %12, %11 : vector<8x1xf32>
    %14 = arith.divf %12, %13 : vector<8x1xf32>
    %c0_8 = arith.constant 0 : index
    %c0_9 = arith.constant 0 : index
    %15 = vector.load %arg5[%c0_8, %c0_9] : memref<1x32xf32, #tpu.memory_space<vmem>>, vector<1x32xf32>
    %16 = vector.broadcast %14 : vector<8x1xf32> to vector<8x32xf32>
    %17 = vector.broadcast %15 : vector<1x32xf32> to vector<8x32xf32>
    %18 = arith.mulf %16, %17 : vector<8x32xf32>
    %cst_10 = arith.constant 1.000000e+00 : f32
    %19 = vector.broadcast %cst_10 : f32 to vector<8x1xf32>
    %20 = arith.subf %19, %14 : vector<8x1xf32>
    %c0_11 = arith.constant 0 : index
    %c0_12 = arith.constant 0 : index
    %21 = vector.load %arg4[%c0_11, %c0_12] : memref<8x32xf32, #tpu.memory_space<vmem>>, vector<8x32xf32>
    %22 = vector.broadcast %20 : vector<8x1xf32> to vector<8x32xf32>
    %23 = arith.mulf %22, %21 : vector<8x32xf32>
    %24 = arith.addf %18, %23 : vector<8x32xf32>
    %c0_13 = arith.constant 0 : index
    %c0_14 = arith.constant 0 : index
    %25 = vector.load %arg7[%c0_13, %c0_14] : memref<8x32xf32, #tpu.memory_space<vmem>>, vector<8x32xf32>
    tpu.vector_store %arg7[%c0_13, %c0_14], %24 {strides = array<i32>} : memref<8x32xf32, #tpu.memory_space<vmem>>, vector<8x32xf32>,
    return
  }
  func.func @transform_0(%arg0: i32) -> (i32, i32) {
    %c0_i32 = arith.constant 0 : i32
    %c0_i32_0 = arith.constant 0 : i32
    return %arg0, %c0_i32 : i32, i32
  }
  func.func @transform_1(%arg0: i32) -> (i32, i32) {
    %c0_i32 = arith.constant 0 : i32
    %c0_i32_0 = arith.constant 0 : i32
    %c0_i32_1 = arith.constant 0 : i32
    return %c0_i32, %c0_i32_0 : i32, i32
  }
  func.func @transform_2(%arg0: i32) -> (i32, i32) {
    %c0_i32 = arith.constant 0 : i32
    %c0_i32_0 = arith.constant 0 : i32
    %c0_i32_1 = arith.constant 0 : i32
    return %c0_i32, %c0_i32_0 : i32, i32
  }
  func.func @transform_3(%arg0: i32) -> (i32, i32) {
    %c0_i32 = arith.constant 0 : i32
    %c0_i32_0 = arith.constant 0 : i32
    return %arg0, %c0_i32 : i32, i32
  }
  func.func @transform_4(%arg0: i32) -> (i32, i32) {
    %c0_i32 = arith.constant 0 : i32
    %c0_i32_0 = arith.constant 0 : i32
    %c0_i32_1 = arith.constant 0 : i32
    return %c0_i32, %c0_i32_0 : i32, i32
  }
  func.func @transform_5(%arg0: i32) -> (i32, i32) {
    %c0_i32 = arith.constant 0 : i32
    %c0_i32_0 = arith.constant 0 : i32
    return %arg0, %c0_i32 : i32, i32
  }
  func.func @transform_6(%arg0: i32) -> (i32, i32) {
    %c0_i32 = arith.constant 0 : i32
    %c0_i32_0 = arith.constant 0 : i32
    return %arg0, %c0_i32 : i32, i32
  }
}

module attributes {stable_mosaic.version = 11 : i64} {
  func.func @_attn_kernel(%arg0: i32, %arg1: memref<1x8x96xf32, #tpu.memory_space<vmem>>, %arg2: memref<1x1x8xf32, #tpu.memory_space<vmem>>, %arg3: memref<1x8x32xf32, #tpu.memory_space<vmem>>) attributes {dimension_semantics = [#tpu.dimension_semantics<parallel>], iteration_bounds = array<i64: 2>, scalar_prefetch = 0 : i64, scratch_operands = 0 : i64, tpu.core_type = #tpu.core_type<tc>, window_params = [{transform_indices = @transform_0, window_bounds = array<i64: 1, 8, 96>}, {transform_indices = @transform_1, window_bounds = array<i64: 1, 1, 8>}, {transform_indices = @transform_2, window_bounds = array<i64: 1, 8, 32>}]} {
    %c0 = arith.constant 0 : index
    %c0_0 = arith.constant 0 : index
    %c0_1 = arith.constant 0 : index
    %0 = vector.load %arg1[%c0, %c0_0, %c0_1] : memref<1x8x96xf32, #tpu.memory_space<vmem>>, vector<1x8x96xf32>
    %1 = vector.shape_cast %0 : vector<1x8x96xf32> to vector<8x96xf32>
    %c0_2 = arith.constant 0 : index
    %c0_3 = arith.constant 0 : index
    %c0_4 = arith.constant 0 : index
    %2 = vector.load %arg2[%c0_2, %c0_3, %c0_4] : memref<1x1x8xf32, #tpu.memory_space<vmem>>, vector<1x1x8xf32>
    %3 = vector.shape_cast %2 : vector<1x1x8xf32> to vector<1x8xf32>
    %4 = vector.extract_strided_slice %1 {offsets = [0, 0], sizes = [8, 8], strides = [1, 1]} : vector<8x96xf32> to vector<8x8xf32>
    %5 = arith.truncf %4 : vector<8x8xf32> to vector<8x8xbf16>
    %6 = vector.extract_strided_slice %1 {offsets = [0, 32], sizes = [8, 8], strides = [1, 1]} : vector<8x96xf32> to vector<8x8xf32>
    %7 = arith.truncf %6 : vector<8x8xf32> to vector<8x8xbf16>
    %8 = vector.extract_strided_slice %1 {offsets = [0, 64], sizes = [8, 8], strides = [1, 1]} : vector<8x96xf32> to vector<8x8xf32>
    %9 = arith.truncf %8 : vector<8x8xf32> to vector<8x8xbf16>
    %cst = arith.constant dense<0.000000e+00> : vector<8x8xf32>
    %10 = tpu.matmul %5, %7, %cst {dimension_numbers = #tpu.dot_dimension_numbers<[1], [1], [0], [0], [0, 0, 1, 0], [], []>} : vector<8x8xbf16>, vector<8x8xbf16>, vector<8x8xf32> -> vector<8x8xf32>
    %cst_5 = arith.constant 0.353553385 : f32
    %11 = vector.broadcast %cst_5 : f32 to vector<8x8xf32>
    %12 = arith.mulf %10, %11 : vector<8x8xf32>
    %13 = vector.broadcast %3 : vector<1x8xf32> to vector<8x8xf32>
    %14 = arith.addf %12, %13 : vector<8x8xf32>
    %cst_6 = arith.constant dense<0xFF800000> : vector<8xf32>
    %15 = vector.multi_reduction <maximumf>, %14, %cst_6 [1] : vector<8x8xf32> to vector<8xf32>
    %16 = vector.shape_cast %15 : vector<8xf32> to vector<8x1xf32>
    %17 = vector.broadcast %16 : vector<8x1xf32> to vector<8x8xf32>
    %18 = arith.subf %14, %17 : vector<8x8xf32>
    %19 = math.exp %18 : vector<8x8xf32>
    %cst_7 = arith.constant dense<0.000000e+00> : vector<8xf32>
    %20 = vector.multi_reduction <add>, %19, %cst_7 [1] : vector<8x8xf32> to vector<8xf32>
    %21 = vector.shape_cast %20 : vector<8xf32> to vector<8x1xf32>
    %22 = tpu.reciprocal %21 {approx = true} : vector<8x1xf32> -> vector<8x1xf32>
    %23 = vector.broadcast %22 : vector<8x1xf32> to vector<8x8xf32>
    %24 = arith.mulf %19, %23 : vector<8x8xf32>
    %25 = arith.truncf %24 : vector<8x8xf32> to vector<8x8xbf16>
    %cst_8 = arith.constant dense<0.000000e+00> : vector<8x8xf32>
    %26 = tpu.matmul %25, %9, %cst_8 {dimension_numbers = #tpu.dot_dimension_numbers<[1], [0], [0], [1], [0, 0, 1, 1], [], []>} : vector<8x8xbf16>, vector<8x8xbf16>, vector<8x8xf32> -> vector<8x8xf32>
    %27 = vector.extract_strided_slice %1 {offsets = [0, 8], sizes = [8, 8], strides = [1, 1]} : vector<8x96xf32> to vector<8x8xf32>
    %28 = arith.truncf %27 : vector<8x8xf32> to vector<8x8xbf16>
    %29 = vector.extract_strided_slice %1 {offsets = [0, 40], sizes = [8, 8], strides = [1, 1]} : vector<8x96xf32> to vector<8x8xf32>
    %30 = arith.truncf %29 : vector<8x8xf32> to vector<8x8xbf16>
    %31 = vector.extract_strided_slice %1 {offsets = [0, 72], sizes = [8, 8], strides = [1, 1]} : vector<8x96xf32> to vector<8x8xf32>
    %32 = arith.truncf %31 : vector<8x8xf32> to vector<8x8xbf16>
    %cst_9 = arith.constant dense<0.000000e+00> : vector<8x8xf32>
    %33 = tpu.matmul %28, %30, %cst_9 {dimension_numbers = #tpu.dot_dimension_numbers<[1], [1], [0], [0], [0, 0, 1, 0], [], []>} : vector<8x8xbf16>, vector<8x8xbf16>, vector<8x8xf32> -> vector<8x8xf32>
    %cst_10 = arith.constant 0.353553385 : f32
    %34 = vector.broadcast %cst_10 : f32 to vector<8x8xf32>
    %35 = arith.mulf %33, %34 : vector<8x8xf32>
    %36 = vector.broadcast %3 : vector<1x8xf32> to vector<8x8xf32>
    %37 = arith.addf %35, %36 : vector<8x8xf32>
    %cst_11 = arith.constant dense<0xFF800000> : vector<8xf32>
    %38 = vector.multi_reduction <maximumf>, %37, %cst_11 [1] : vector<8x8xf32> to vector<8xf32>
    %39 = vector.shape_cast %38 : vector<8xf32> to vector<8x1xf32>
    %40 = vector.broadcast %39 : vector<8x1xf32> to vector<8x8xf32>
    %41 = arith.subf %37, %40 : vector<8x8xf32>
    %42 = math.exp %41 : vector<8x8xf32>
    %cst_12 = arith.constant dense<0.000000e+00> : vector<8xf32>
    %43 = vector.multi_reduction <add>, %42, %cst_12 [1] : vector<8x8xf32> to vector<8xf32>
    %44 = vector.shape_cast %43 : vector<8xf32> to vector<8x1xf32>
    %45 = tpu.reciprocal %44 {approx = true} : vector<8x1xf32> -> vector<8x1xf32>
    %46 = vector.broadcast %45 : vector<8x1xf32> to vector<8x8xf32>
    %47 = arith.mulf %42, %46 : vector<8x8xf32>
    %48 = arith.truncf %47 : vector<8x8xf32> to vector<8x8xbf16>
    %cst_13 = arith.constant dense<0.000000e+00> : vector<8x8xf32>
    %49 = tpu.matmul %48, %32, %cst_13 {dimension_numbers = #tpu.dot_dimension_numbers<[1], [0], [0], [1], [0, 0, 1, 1], [], []>} : vector<8x8xbf16>, vector<8x8xbf16>, vector<8x8xf32> -> vector<8x8xf32>
    %50 = vector.extract_strided_slice %1 {offsets = [0, 16], sizes = [8, 8], strides = [1, 1]} : vector<8x96xf32> to vector<8x8xf32>
    %51 = arith.truncf %50 : vector<8x8xf32> to vector<8x8xbf16>
    %52 = vector.extract_strided_slice %1 {offsets = [0, 48], sizes = [8, 8], strides = [1, 1]} : vector<8x96xf32> to vector<8x8xf32>
    %53 = arith.truncf %52 : vector<8x8xf32> to vector<8x8xbf16>
    %54 = vector.extract_strided_slice %1 {offsets = [0, 80], sizes = [8, 8], strides = [1, 1]} : vector<8x96xf32> to vector<8x8xf32>
    %55 = arith.truncf %54 : vector<8x8xf32> to vector<8x8xbf16>
    %cst_14 = arith.constant dense<0.000000e+00> : vector<8x8xf32>
    %56 = tpu.matmul %51, %53, %cst_14 {dimension_numbers = #tpu.dot_dimension_numbers<[1], [1], [0], [0], [0, 0, 1, 0], [], []>} : vector<8x8xbf16>, vector<8x8xbf16>, vector<8x8xf32> -> vector<8x8xf32>
    %cst_15 = arith.constant 0.353553385 : f32
    %57 = vector.broadcast %cst_15 : f32 to vector<8x8xf32>
    %58 = arith.mulf %56, %57 : vector<8x8xf32>
    %59 = vector.broadcast %3 : vector<1x8xf32> to vector<8x8xf32>
    %60 = arith.addf %58, %59 : vector<8x8xf32>
    %cst_16 = arith.constant dense<0xFF800000> : vector<8xf32>
    %61 = vector.multi_reduction <maximumf>, %60, %cst_16 [1] : vector<8x8xf32> to vector<8xf32>
    %62 = vector.shape_cast %61 : vector<8xf32> to vector<8x1xf32>
    %63 = vector.broadcast %62 : vector<8x1xf32> to vector<8x8xf32>
    %64 = arith.subf %60, %63 : vector<8x8xf32>
    %65 = math.exp %64 : vector<8x8xf32>
    %cst_17 = arith.constant dense<0.000000e+00> : vector<8xf32>
    %66 = vector.multi_reduction <add>, %65, %cst_17 [1] : vector<8x8xf32> to vector<8xf32>
    %67 = vector.shape_cast %66 : vector<8xf32> to vector<8x1xf32>
    %68 = tpu.reciprocal %67 {approx = true} : vector<8x1xf32> -> vector<8x1xf32>
    %69 = vector.broadcast %68 : vector<8x1xf32> to vector<8x8xf32>
    %70 = arith.mulf %65, %69 : vector<8x8xf32>
    %71 = arith.truncf %70 : vector<8x8xf32> to vector<8x8xbf16>
    %cst_18 = arith.constant dense<0.000000e+00> : vector<8x8xf32>
    %72 = tpu.matmul %71, %55, %cst_18 {dimension_numbers = #tpu.dot_dimension_numbers<[1], [0], [0], [1], [0, 0, 1, 1], [], []>} : vector<8x8xbf16>, vector<8x8xbf16>, vector<8x8xf32> -> vector<8x8xf32>
    %73 = vector.extract_strided_slice %1 {offsets = [0, 24], sizes = [8, 8], strides = [1, 1]} : vector<8x96xf32> to vector<8x8xf32>
    %74 = arith.truncf %73 : vector<8x8xf32> to vector<8x8xbf16>
    %75 = vector.extract_strided_slice %1 {offsets = [0, 56], sizes = [8, 8], strides = [1, 1]} : vector<8x96xf32> to vector<8x8xf32>
    %76 = arith.truncf %75 : vector<8x8xf32> to vector<8x8xbf16>
    %77 = vector.extract_strided_slice %1 {offsets = [0, 88], sizes = [8, 8], strides = [1, 1]} : vector<8x96xf32> to vector<8x8xf32>
    %78 = arith.truncf %77 : vector<8x8xf32> to vector<8x8xbf16>
    %cst_19 = arith.constant dense<0.000000e+00> : vector<8x8xf32>
    %79 = tpu.matmul %74, %76, %cst_19 {dimension_numbers = #tpu.dot_dimension_numbers<[1], [1], [0], [0], [0, 0, 1, 0], [], []>} : vector<8x8xbf16>, vector<8x8xbf16>, vector<8x8xf32> -> vector<8x8xf32>
    %cst_20 = arith.constant 0.353553385 : f32
    %80 = vector.broadcast %cst_20 : f32 to vector<8x8xf32>
    %81 = arith.mulf %79, %80 : vector<8x8xf32>
    %82 = vector.broadcast %3 : vector<1x8xf32> to vector<8x8xf32>
    %83 = arith.addf %81, %82 : vector<8x8xf32>
    %cst_21 = arith.constant dense<0xFF800000> : vector<8xf32>
    %84 = vector.multi_reduction <maximumf>, %83, %cst_21 [1] : vector<8x8xf32> to vector<8xf32>
    %85 = vector.shape_cast %84 : vector<8xf32> to vector<8x1xf32>
    %86 = vector.broadcast %85 : vector<8x1xf32> to vector<8x8xf32>
    %87 = arith.subf %83, %86 : vector<8x8xf32>
    %88 = math.exp %87 : vector<8x8xf32>
    %cst_22 = arith.constant dense<0.000000e+00> : vector<8xf32>
    %89 = vector.multi_reduction <add>, %88, %cst_22 [1] : vector<8x8xf32> to vector<8xf32>
    %90 = vector.shape_cast %89 : vector<8xf32> to vector<8x1xf32>
    %91 = tpu.reciprocal %90 {approx = true} : vector<8x1xf32> -> vector<8x1xf32>
    %92 = vector.broadcast %91 : vector<8x1xf32> to vector<8x8xf32>
    %93 = arith.mulf %88, %92 : vector<8x8xf32>
    %94 = arith.truncf %93 : vector<8x8xf32> to vector<8x8xbf16>
    %cst_23 = arith.constant dense<0.000000e+00> : vector<8x8xf32>
    %95 = tpu.matmul %94, %78, %cst_23 {dimension_numbers = #tpu.dot_dimension_numbers<[1], [0], [0], [1], [0, 0, 1, 1], [], []>} : vector<8x8xbf16>, vector<8x8xbf16>, vector<8x8xf32> -> vector<8x8xf32>
    %96 = tpu.concatenate %26, %49, %72, %95 in 1 : vector<8x8xf32>, vector<8x8xf32>, vector<8x8xf32>, vector<8x8xf32> -> vector<8x32xf32>
    %c0_24 = arith.constant 0 : index
    %c0_25 = arith.constant 0 : index
    %c0_26 = arith.constant 0 : index
    %97 = vector.load %arg3[%c0_24, %c0_25, %c0_26] : memref<1x8x32xf32, #tpu.memory_space<vmem>>, vector<1x8x32xf32>
    %98 = vector.shape_cast %97 : vector<1x8x32xf32> to vector<8x32xf32>
    %99 = vector.shape_cast %96 : vector<8x32xf32> to vector<1x8x32xf32>
    tpu.vector_store %arg3[%c0_24, %c0_25, %c0_26], %99 {strides = array<i32>} : memref<1x8x32xf32, #tpu.memory_space<vmem>>, vector<1x8x32xf32>,
    return
  }
  func.func @transform_0(%arg0: i32) -> (i32, i32, i32) {
    %c0_i32 = arith.constant 0 : i32
    %c0_i32_0 = arith.constant 0 : i32
    %c0_i32_1 = arith.constant 0 : i32
    return %arg0, %c0_i32, %c0_i32_0 : i32, i32, i32
  }
  func.func @transform_1(%arg0: i32) -> (i32, i32, i32) {
    %c0_i32 = arith.constant 0 : i32
    %c0_i32_0 = arith.constant 0 : i32
    %c0_i32_1 = arith.constant 0 : i32
    return %arg0, %c0_i32, %c0_i32_0 : i32, i32, i32
  }
  func.func @transform_2(%arg0: i32) -> (i32, i32, i32) {
    %c0_i32 = arith.constant 0 : i32
    %c0_i32_0 = arith.constant 0 : i32
    %c0_i32_1 = arith.constant 0 : i32
    return %arg0, %c0_i32, %c0_i32_0 : i32, i32, i32
  }
}

module attributes {stable_mosaic.version = 11 : i64} {
  func.func @_resid_out_kernel(%arg0: i32, %arg1: memref<8x32xf32, #tpu.memory_space<vmem>>, %arg2: memref<8x32xf32, #tpu.memory_space<vmem>>, %arg3: memref<32x128xbf16, #tpu.memory_space<vmem>>, %arg4: memref<1x128xf32, #tpu.memory_space<vmem>>, %arg5: memref<8x128xf32, #tpu.memory_space<vmem>>) attributes {dimension_semantics = [#tpu.dimension_semantics<parallel>], iteration_bounds = array<i64: 2>, scalar_prefetch = 0 : i64, scratch_operands = 0 : i64, tpu.core_type = #tpu.core_type<tc>, window_params = [{transform_indices = @transform_0, window_bounds = array<i64: 8, 32>}, {transform_indices = @transform_1, window_bounds = array<i64: 8, 32>}, {pipeline_mode = #tpu.pipeline_mode<synchronous>, transform_indices = @transform_2, window_bounds = array<i64: 32, 128>}, {pipeline_mode = #tpu.pipeline_mode<synchronous>, transform_indices = @transform_3, window_bounds = array<i64: 1, 128>}, {transform_indices = @transform_4, window_bounds = array<i64: 8, 128>}]} {
    %c0 = arith.constant 0 : index
    %c0_0 = arith.constant 0 : index
    %0 = vector.load %arg1[%c0, %c0_0] : memref<8x32xf32, #tpu.memory_space<vmem>>, vector<8x32xf32>
    %c0_1 = arith.constant 0 : index
    %c0_2 = arith.constant 0 : index
    %1 = vector.load %arg2[%c0_1, %c0_2] : memref<8x32xf32, #tpu.memory_space<vmem>>, vector<8x32xf32>
    %2 = arith.addf %0, %1 : vector<8x32xf32>
    %3 = arith.truncf %2 : vector<8x32xf32> to vector<8x32xbf16>
    %c0_3 = arith.constant 0 : index
    %c0_4 = arith.constant 0 : index
    %4 = vector.load %arg3[%c0_3, %c0_4] : memref<32x128xbf16, #tpu.memory_space<vmem>>, vector<32x128xbf16>
    %cst = arith.constant dense<0.000000e+00> : vector<8x128xf32>
    %5 = tpu.matmul %3, %4, %cst {dimension_numbers = #tpu.dot_dimension_numbers<[1], [0], [0], [1], [0, 0, 1, 1], [], []>} : vector<8x32xbf16>, vector<32x128xbf16>, vector<8x128xf32> -> vector<8x128xf32>
    %c0_5 = arith.constant 0 : index
    %c0_6 = arith.constant 0 : index
    %6 = vector.load %arg4[%c0_5, %c0_6] : memref<1x128xf32, #tpu.memory_space<vmem>>, vector<1x128xf32>
    %7 = vector.broadcast %6 : vector<1x128xf32> to vector<8x128xf32>
    %8 = arith.addf %5, %7 : vector<8x128xf32>
    %c0_7 = arith.constant 0 : index
    %c0_8 = arith.constant 0 : index
    %9 = vector.load %arg5[%c0_7, %c0_8] : memref<8x128xf32, #tpu.memory_space<vmem>>, vector<8x128xf32>
    tpu.vector_store %arg5[%c0_7, %c0_8], %8 {strides = array<i32>} : memref<8x128xf32, #tpu.memory_space<vmem>>, vector<8x128xf32>,
    return
  }
  func.func @transform_0(%arg0: i32) -> (i32, i32) {
    %c0_i32 = arith.constant 0 : i32
    %c0_i32_0 = arith.constant 0 : i32
    return %arg0, %c0_i32 : i32, i32
  }
  func.func @transform_1(%arg0: i32) -> (i32, i32) {
    %c0_i32 = arith.constant 0 : i32
    %c0_i32_0 = arith.constant 0 : i32
    return %arg0, %c0_i32 : i32, i32
  }
  func.func @transform_2(%arg0: i32) -> (i32, i32) {
    %c0_i32 = arith.constant 0 : i32
    %c0_i32_0 = arith.constant 0 : i32
    %c0_i32_1 = arith.constant 0 : i32
    return %c0_i32, %c0_i32_0 : i32, i32
  }
  func.func @transform_3(%arg0: i32) -> (i32, i32) {
    %c0_i32 = arith.constant 0 : i32
    %c0_i32_0 = arith.constant 0 : i32
    %c0_i32_1 = arith.constant 0 : i32
    return %c0_i32, %c0_i32_0 : i32, i32
  }
  func.func @transform_4(%arg0: i32) -> (i32, i32) {
    %c0_i32 = arith.constant 0 : i32
    %c0_i32_0 = arith.constant 0 : i32
    return %arg0, %c0_i32 : i32, i32
  }
}

module attributes {stable_mosaic.version = 11 : i64} {
  func.func @_ffn_ln_kernel(%arg0: i32, %arg1: memref<8x32xf32, #tpu.memory_space<vmem>>, %arg2: memref<32x64xbf16, #tpu.memory_space<vmem>>, %arg3: memref<1x64xf32, #tpu.memory_space<vmem>>, %arg4: memref<64x32xbf16, #tpu.memory_space<vmem>>, %arg5: memref<1x32xf32, #tpu.memory_space<vmem>>, %arg6: memref<1x32xf32, #tpu.memory_space<vmem>>, %arg7: memref<1x32xf32, #tpu.memory_space<vmem>>, %arg8: memref<8x32xf32, #tpu.memory_space<vmem>>) attributes {dimension_semantics = [#tpu.dimension_semantics<parallel>], iteration_bounds = array<i64: 2>, scalar_prefetch = 0 : i64, scratch_operands = 0 : i64, tpu.core_type = #tpu.core_type<tc>, window_params = [{transform_indices = @transform_0, window_bounds = array<i64: 8, 32>}, {pipeline_mode = #tpu.pipeline_mode<synchronous>, transform_indices = @transform_1, window_bounds = array<i64: 32, 64>}, {pipeline_mode = #tpu.pipeline_mode<synchronous>, transform_indices = @transform_2, window_bounds = array<i64: 1, 64>}, {pipeline_mode = #tpu.pipeline_mode<synchronous>, transform_indices = @transform_3, window_bounds = array<i64: 64, 32>}, {pipeline_mode = #tpu.pipeline_mode<synchronous>, transform_indices = @transform_4, window_bounds = array<i64: 1, 32>}, {pipeline_mode = #tpu.pipeline_mode<synchronous>, transform_indices = @transform_5, window_bounds = array<i64: 1, 32>}, {pipeline_mode = #tpu.pipeline_mode<synchronous>, transform_indices = @transform_6, window_bounds = array<i64: 1, 32>}, {transform_indices = @transform_7, window_bounds = array<i64: 8, 32>}]} {
    %c0 = arith.constant 0 : index
    %c0_0 = arith.constant 0 : index
    %0 = vector.load %arg1[%c0, %c0_0] : memref<8x32xf32, #tpu.memory_space<vmem>>, vector<8x32xf32>
    %1 = arith.truncf %0 : vector<8x32xf32> to vector<8x32xbf16>
    %c0_1 = arith.constant 0 : index
    %c0_2 = arith.constant 0 : index
    %2 = vector.load %arg2[%c0_1, %c0_2] : memref<32x64xbf16, #tpu.memory_space<vmem>>, vector<32x64xbf16>
    %cst = arith.constant dense<0.000000e+00> : vector<8x64xf32>
    %3 = tpu.matmul %1, %2, %cst {dimension_numbers = #tpu.dot_dimension_numbers<[1], [0], [0], [1], [0, 0, 1, 1], [], []>} : vector<8x32xbf16>, vector<32x64xbf16>, vector<8x64xf32> -> vector<8x64xf32>
    %c0_3 = arith.constant 0 : index
    %c0_4 = arith.constant 0 : index
    %4 = vector.load %arg3[%c0_3, %c0_4] : memref<1x64xf32, #tpu.memory_space<vmem>>, vector<1x64xf32>
    %5 = vector.broadcast %4 : vector<1x64xf32> to vector<8x64xf32>
    %6 = arith.addf %3, %5 : vector<8x64xf32>
    %cst_5 = arith.constant 5.000000e-01 : f32
    %7 = vector.broadcast %cst_5 : f32 to vector<8x64xf32>
    %8 = arith.mulf %7, %6 : vector<8x64xf32>
    %cst_6 = arith.constant 4.471500e-02 : f32
    %9 = vector.broadcast %cst_6 : f32 to vector<8x64xf32>
    %10 = arith.mulf %9, %6 : vector<8x64xf32>
    %11 = arith.mulf %10, %6 : vector<8x64xf32>
    %12 = arith.mulf %11, %6 : vector<8x64xf32>
    %13 = arith.addf %6, %12 : vector<8x64xf32>
    %cst_7 = arith.constant 0.797884583 : f32
    %14 = vector.broadcast %cst_7 : f32 to vector<8x64xf32>
    %15 = arith.mulf %14, %13 : vector<8x64xf32>
    %16 = math.tanh %15 : vector<8x64xf32>
    %cst_8 = arith.constant 1.000000e+00 : f32
    %17 = vector.broadcast %cst_8 : f32 to vector<8x64xf32>
    %18 = arith.addf %17, %16 : vector<8x64xf32>
    %19 = arith.mulf %8, %18 : vector<8x64xf32>
    %20 = arith.truncf %19 : vector<8x64xf32> to vector<8x64xbf16>
    %c0_9 = arith.constant 0 : index
    %c0_10 = arith.constant 0 : index
    %21 = vector.load %arg4[%c0_9, %c0_10] : memref<64x32xbf16, #tpu.memory_space<vmem>>, vector<64x32xbf16>
    %cst_11 = arith.constant dense<0.000000e+00> : vector<8x32xf32>
    %22 = tpu.matmul %20, %21, %cst_11 {dimension_numbers = #tpu.dot_dimension_numbers<[1], [0], [0], [1], [0, 0, 1, 1], [], []>} : vector<8x64xbf16>, vector<64x32xbf16>, vector<8x32xf32> -> vector<8x32xf32>
    %c0_12 = arith.constant 0 : index
    %c0_13 = arith.constant 0 : index
    %23 = vector.load %arg5[%c0_12, %c0_13] : memref<1x32xf32, #tpu.memory_space<vmem>>, vector<1x32xf32>
    %24 = vector.broadcast %23 : vector<1x32xf32> to vector<8x32xf32>
    %25 = arith.addf %22, %24 : vector<8x32xf32>
    %26 = arith.addf %25, %0 : vector<8x32xf32>
    %c0_14 = arith.constant 0 : index
    %c0_15 = arith.constant 0 : index
    %27 = vector.load %arg6[%c0_14, %c0_15] : memref<1x32xf32, #tpu.memory_space<vmem>>, vector<1x32xf32>
    %c0_16 = arith.constant 0 : index
    %c0_17 = arith.constant 0 : index
    %28 = vector.load %arg7[%c0_16, %c0_17] : memref<1x32xf32, #tpu.memory_space<vmem>>, vector<1x32xf32>
    %cst_18 = arith.constant dense<0.000000e+00> : vector<8xf32>
    %29 = vector.multi_reduction <add>, %26, %cst_18 [1] : vector<8x32xf32> to vector<8xf32>
    %30 = vector.shape_cast %29 : vector<8xf32> to vector<8x1xf32>
    %cst_19 = arith.constant 3.200000e+01 : f32
    %31 = vector.broadcast %cst_19 : f32 to vector<8x1xf32>
    %32 = arith.divf %30, %31 : vector<8x1xf32>
    %33 = vector.broadcast %32 : vector<8x1xf32> to vector<8x32xf32>
    %34 = arith.subf %26, %33 : vector<8x32xf32>
    %35 = arith.mulf %34, %34 : vector<8x32xf32>
    %cst_20 = arith.constant dense<0.000000e+00> : vector<8xf32>
    %36 = vector.multi_reduction <add>, %35, %cst_20 [1] : vector<8x32xf32> to vector<8xf32>
    %37 = vector.shape_cast %36 : vector<8xf32> to vector<8x1xf32>
    %cst_21 = arith.constant 3.200000e+01 : f32
    %38 = vector.broadcast %cst_21 : f32 to vector<8x1xf32>
    %39 = arith.divf %37, %38 : vector<8x1xf32>
    %40 = vector.broadcast %32 : vector<8x1xf32> to vector<8x32xf32>
    %41 = arith.subf %26, %40 : vector<8x32xf32>
    %cst_22 = arith.constant 9.99999996E-13 : f32
    %42 = vector.broadcast %cst_22 : f32 to vector<8x1xf32>
    %43 = arith.addf %39, %42 : vector<8x1xf32>
    %44 = math.rsqrt %43 : vector<8x1xf32>
    %45 = vector.broadcast %44 : vector<8x1xf32> to vector<8x32xf32>
    %46 = arith.mulf %41, %45 : vector<8x32xf32>
    %47 = vector.broadcast %27 : vector<1x32xf32> to vector<8x32xf32>
    %48 = arith.mulf %46, %47 : vector<8x32xf32>
    %49 = vector.broadcast %28 : vector<1x32xf32> to vector<8x32xf32>
    %50 = arith.addf %48, %49 : vector<8x32xf32>
    %c0_23 = arith.constant 0 : index
    %c0_24 = arith.constant 0 : index
    %51 = vector.load %arg8[%c0_23, %c0_24] : memref<8x32xf32, #tpu.memory_space<vmem>>, vector<8x32xf32>
    tpu.vector_store %arg8[%c0_23, %c0_24], %50 {strides = array<i32>} : memref<8x32xf32, #tpu.memory_space<vmem>>, vector<8x32xf32>,
    return
  }
  func.func @transform_0(%arg0: i32) -> (i32, i32) {
    %c0_i32 = arith.constant 0 : i32
    %c0_i32_0 = arith.constant 0 : i32
    return %arg0, %c0_i32 : i32, i32
  }
  func.func @transform_1(%arg0: i32) -> (i32, i32) {
    %c0_i32 = arith.constant 0 : i32
    %c0_i32_0 = arith.constant 0 : i32
    %c0_i32_1 = arith.constant 0 : i32
    return %c0_i32, %c0_i32_0 : i32, i32
  }
  func.func @transform_2(%arg0: i32) -> (i32, i32) {
    %c0_i32 = arith.constant 0 : i32
    %c0_i32_0 = arith.constant 0 : i32
    %c0_i32_1 = arith.constant 0 : i32
    return %c0_i32, %c0_i32_0 : i32, i32
  }
  func.func @transform_3(%arg0: i32) -> (i32, i32) {
    %c0_i32 = arith.constant 0 : i32
    %c0_i32_0 = arith.constant 0 : i32
    %c0_i32_1 = arith.constant 0 : i32
    return %c0_i32, %c0_i32_0 : i32, i32
  }
  func.func @transform_4(%arg0: i32) -> (i32, i32) {
    %c0_i32 = arith.constant 0 : i32
    %c0_i32_0 = arith.constant 0 : i32
    %c0_i32_1 = arith.constant 0 : i32
    return %c0_i32, %c0_i32_0 : i32, i32
  }
  func.func @transform_5(%arg0: i32) -> (i32, i32) {
    %c0_i32 = arith.constant 0 : i32
    %c0_i32_0 = arith.constant 0 : i32
    %c0_i32_1 = arith.constant 0 : i32
    return %c0_i32, %c0_i32_0 : i32, i32
  }
  func.func @transform_6(%arg0: i32) -> (i32, i32) {
    %c0_i32 = arith.constant 0 : i32
    %c0_i32_0 = arith.constant 0 : i32
    %c0_i32_1 = arith.constant 0 : i32
    return %c0_i32, %c0_i32_0 : i32, i32
  }
  func.func @transform_7(%arg0: i32) -> (i32, i32) {
    %c0_i32 = arith.constant 0 : i32
    %c0_i32_0 = arith.constant 0 : i32
    return %arg0, %c0_i32 : i32, i32
  }
}

module attributes {stable_mosaic.version = 11 : i64} {
  func.func @_attn_out_ln_kernel(%arg0: i32, %arg1: memref<8x32xf32, #tpu.memory_space<vmem>>, %arg2: memref<8x32xf32, #tpu.memory_space<vmem>>, %arg3: memref<32x32xbf16, #tpu.memory_space<vmem>>, %arg4: memref<1x32xf32, #tpu.memory_space<vmem>>, %arg5: memref<1x32xf32, #tpu.memory_space<vmem>>, %arg6: memref<1x32xf32, #tpu.memory_space<vmem>>, %arg7: memref<8x32xf32, #tpu.memory_space<vmem>>) attributes {dimension_semantics = [#tpu.dimension_semantics<parallel>], iteration_bounds = array<i64: 2>, scalar_prefetch = 0 : i64, scratch_operands = 0 : i64, tpu.core_type = #tpu.core_type<tc>, window_params = [{transform_indices = @transform_0, window_bounds = array<i64: 8, 32>}, {transform_indices = @transform_1, window_bounds = array<i64: 8, 32>}, {pipeline_mode = #tpu.pipeline_mode<synchronous>, transform_indices = @transform_2, window_bounds = array<i64: 32, 32>}, {pipeline_mode = #tpu.pipeline_mode<synchronous>, transform_indices = @transform_3, window_bounds = array<i64: 1, 32>}, {pipeline_mode = #tpu.pipeline_mode<synchronous>, transform_indices = @transform_4, window_bounds = array<i64: 1, 32>}, {pipeline_mode = #tpu.pipeline_mode<synchronous>, transform_indices = @transform_5, window_bounds = array<i64: 1, 32>}, {transform_indices = @transform_6, window_bounds = array<i64: 8, 32>}]} {
    %c0 = arith.constant 0 : index
    %c0_0 = arith.constant 0 : index
    %0 = vector.load %arg1[%c0, %c0_0] : memref<8x32xf32, #tpu.memory_space<vmem>>, vector<8x32xf32>
    %1 = arith.truncf %0 : vector<8x32xf32> to vector<8x32xbf16>
    %c0_1 = arith.constant 0 : index
    %c0_2 = arith.constant 0 : index
    %2 = vector.load %arg3[%c0_1, %c0_2] : memref<32x32xbf16, #tpu.memory_space<vmem>>, vector<32x32xbf16>
    %cst = arith.constant dense<0.000000e+00> : vector<8x32xf32>
    %3 = tpu.matmul %1, %2, %cst {dimension_numbers = #tpu.dot_dimension_numbers<[1], [0], [0], [1], [0, 0, 1, 1], [], []>} : vector<8x32xbf16>, vector<32x32xbf16>, vector<8x32xf32> -> vector<8x32xf32>
    %c0_3 = arith.constant 0 : index
    %c0_4 = arith.constant 0 : index
    %4 = vector.load %arg4[%c0_3, %c0_4] : memref<1x32xf32, #tpu.memory_space<vmem>>, vector<1x32xf32>
    %5 = vector.broadcast %4 : vector<1x32xf32> to vector<8x32xf32>
    %6 = arith.addf %3, %5 : vector<8x32xf32>
    %c0_5 = arith.constant 0 : index
    %c0_6 = arith.constant 0 : index
    %7 = vector.load %arg2[%c0_5, %c0_6] : memref<8x32xf32, #tpu.memory_space<vmem>>, vector<8x32xf32>
    %8 = arith.addf %6, %7 : vector<8x32xf32>
    %c0_7 = arith.constant 0 : index
    %c0_8 = arith.constant 0 : index
    %9 = vector.load %arg5[%c0_7, %c0_8] : memref<1x32xf32, #tpu.memory_space<vmem>>, vector<1x32xf32>
    %c0_9 = arith.constant 0 : index
    %c0_10 = arith.constant 0 : index
    %10 = vector.load %arg6[%c0_9, %c0_10] : memref<1x32xf32, #tpu.memory_space<vmem>>, vector<1x32xf32>
    %cst_11 = arith.constant dense<0.000000e+00> : vector<8xf32>
    %11 = vector.multi_reduction <add>, %8, %cst_11 [1] : vector<8x32xf32> to vector<8xf32>
    %12 = vector.shape_cast %11 : vector<8xf32> to vector<8x1xf32>
    %cst_12 = arith.constant 3.200000e+01 : f32
    %13 = vector.broadcast %cst_12 : f32 to vector<8x1xf32>
    %14 = arith.divf %12, %13 : vector<8x1xf32>
    %15 = vector.broadcast %14 : vector<8x1xf32> to vector<8x32xf32>
    %16 = arith.subf %8, %15 : vector<8x32xf32>
    %17 = arith.mulf %16, %16 : vector<8x32xf32>
    %cst_13 = arith.constant dense<0.000000e+00> : vector<8xf32>
    %18 = vector.multi_reduction <add>, %17, %cst_13 [1] : vector<8x32xf32> to vector<8xf32>
    %19 = vector.shape_cast %18 : vector<8xf32> to vector<8x1xf32>
    %cst_14 = arith.constant 3.200000e+01 : f32
    %20 = vector.broadcast %cst_14 : f32 to vector<8x1xf32>
    %21 = arith.divf %19, %20 : vector<8x1xf32>
    %22 = vector.broadcast %14 : vector<8x1xf32> to vector<8x32xf32>
    %23 = arith.subf %8, %22 : vector<8x32xf32>
    %cst_15 = arith.constant 9.99999996E-13 : f32
    %24 = vector.broadcast %cst_15 : f32 to vector<8x1xf32>
    %25 = arith.addf %21, %24 : vector<8x1xf32>
    %26 = math.rsqrt %25 : vector<8x1xf32>
    %27 = vector.broadcast %26 : vector<8x1xf32> to vector<8x32xf32>
    %28 = arith.mulf %23, %27 : vector<8x32xf32>
    %29 = vector.broadcast %9 : vector<1x32xf32> to vector<8x32xf32>
    %30 = arith.mulf %28, %29 : vector<8x32xf32>
    %31 = vector.broadcast %10 : vector<1x32xf32> to vector<8x32xf32>
    %32 = arith.addf %30, %31 : vector<8x32xf32>
    %c0_16 = arith.constant 0 : index
    %c0_17 = arith.constant 0 : index
    %33 = vector.load %arg7[%c0_16, %c0_17] : memref<8x32xf32, #tpu.memory_space<vmem>>, vector<8x32xf32>
    tpu.vector_store %arg7[%c0_16, %c0_17], %32 {strides = array<i32>} : memref<8x32xf32, #tpu.memory_space<vmem>>, vector<8x32xf32>,
    return
  }
  func.func @transform_0(%arg0: i32) -> (i32, i32) {
    %c0_i32 = arith.constant 0 : i32
    %c0_i32_0 = arith.constant 0 : i32
    return %arg0, %c0_i32 : i32, i32
  }
  func.func @transform_1(%arg0: i32) -> (i32, i32) {
    %c0_i32 = arith.constant 0 : i32
    %c0_i32_0 = arith.constant 0 : i32
    return %arg0, %c0_i32 : i32, i32
  }
  func.func @transform_2(%arg0: i32) -> (i32, i32) {
    %c0_i32 = arith.constant 0 : i32
    %c0_i32_0 = arith.constant 0 : i32
    %c0_i32_1 = arith.constant 0 : i32
    return %c0_i32, %c0_i32_0 : i32, i32
  }
  func.func @transform_3(%arg0: i32) -> (i32, i32) {
    %c0_i32 = arith.constant 0 : i32
    %c0_i32_0 = arith.constant 0 : i32
    %c0_i32_1 = arith.constant 0 : i32
    return %c0_i32, %c0_i32_0 : i32, i32
  }
  func.func @transform_4(%arg0: i32) -> (i32, i32) {
    %c0_i32 = arith.constant 0 : i32
    %c0_i32_0 = arith.constant 0 : i32
    %c0_i32_1 = arith.constant 0 : i32
    return %c0_i32, %c0_i32_0 : i32, i32
  }
  func.func @transform_5(%arg0: i32) -> (i32, i32) {
    %c0_i32 = arith.constant 0 : i32
    %c0_i32_0 = arith.constant 0 : i32
    %c0_i32_1 = arith.constant 0 : i32
    return %c0_i32, %c0_i32_0 : i32, i32
  }
  func.func @transform_6(%arg0: i32) -> (i32, i32) {
    %c0_i32 = arith.constant 0 : i32
    %c0_i32_0 = arith.constant 0 : i32
    return %arg0, %c0_i32 : i32, i32
  }
}

</mosaic_0001>

<llo_original>
// kernel: soft_masked_bert_forward.13
$region0: #{soft_masked_bert_forward.13}
  #allocation0 [shape = 'u32[]', space=smem, size = 0x4, offset = 0x4, fixed_abs, tag = 'smem constant byte address 0x4 - core index']
  #allocation1 [shape = 'u32[144,128]{1,0:T(1,128)}', space=vmem, size = 0x12000, scoped, tag = 'internal scratch']
  %s0 = inlined_call_operand.vmem [shape: f32[16,32], index: 0, kind: input, shape index: {}]
  %s1 = inlined_call_operand.vmem [shape: f32[1,32], index: 1, kind: input, shape index: {}]
  %s2 = inlined_call_operand.vmem [shape: f32[1,32], index: 2, kind: input, shape index: {}]
  %s3 = inlined_call_operand.vmem [shape: f32[16,32], index: 3, kind: output, shape index: {}]
  %s4 = sld [smem:[#allocation0]]
  $region45: #{soft_masked_bert_forward.13} parent=0
    _
  %s6 = ssub.s32 1, %s4
  %s7 = scalar_select 0, %s6, %s4
  loop: start=0, step=1, limit=4
  $region2: #{soft_masked_bert_forward.13} parent=0 // loop_pre_header
    _
  $region3: #{soft_masked_bert_forward.13} parent=0 // loop_header
    %s9 = sphi 0, %s13
    %p10 = scmp.ge.s32.totalorder %s9, 4
    %s19 = sphi 0, %s21
    %s22 = sphi 0, %s19
    %s23 = sphi 0, %s22
    %s39 = sphi 0, %s23
    %s43 = sphi 0, %s43
    %s45 = sphi 0, %s43
    %s46 = sphi 0, %s45
    %s60 = sphi 0, %s46
    %s64 = sphi 0, %s64
    %s66 = sphi 0, %s64
    %s67 = sphi 0, %s66
    %s81 = sphi 0, %s67
    %s87 = sphi 0, %s89
    %s90 = sphi 0, %s87
    %s91 = sphi 0, %s90
    %s107 = sphi 0, %s91
  $region4: #{soft_masked_bert_forward.13} parent=0 // loop_header_branch
    %12 = sbr.rel (%p10) target = $region8
  $region5: #{soft_masked_bert_forward.13} parent=0 // loop_body
    %s14 = ssub.s32 %s9, 1
    %s15 = ssub.s32 %s9, 2
    %s16 = sadd.s32 %s9, 1
    %s17 = ssub.s32 %s9, %s16
    %p18 = scmp.eq.s32.totalorder %s17, 0
    %s20 = sadd.s32 %s19, 1
    %s21 = scalar_select %p18, %s19, %s20
    %p24 = pneg %p18
    %p25 = scmp.eq.s32.totalorder %s9, 1
    %p26 = por %p24, %p25
    %p27 = scmp.ne.s32.totalorder %s19, %s22
    %p28 = scmp.eq.s32.totalorder %s9, 0
    %p29 = por %p27, %p28
    %p30 = scmp.ne.s32.totalorder %s19, %s22
    %p31 = scmp.eq.s32.totalorder %s14, 1
    %p32 = por %p30, %p31
    %p33 = scmp.ne.s32.totalorder %s22, %s23
    %p34 = scmp.eq.s32.totalorder %s14, 0
    %p35 = por %p33, %p34
    %p36 = scmp.ne.s32.totalorder %s22, %s23
    %p37 = scmp.eq.s32.totalorder %s15, 1
    %p38 = por %p36, %p37
    %p40 = scmp.ne.s32.totalorder %s23, %s39
    %p41 = scmp.eq.s32.totalorder %s15, 0
    %p42 = por %p40, %p41
    %s44 = sadd.s32 %s43, 1
    %p47 = scmp.eq.s32.totalorder %s9, 1
    %p48 = scmp.ne.s32.totalorder %s43, %s45
    %p49 = scmp.eq.s32.totalorder %s9, 0
    %p50 = por %p48, %p49
    %p51 = scmp.ne.s32.totalorder %s43, %s45
    %p52 = scmp.eq.s32.totalorder %s14, 1
    %p53 = por %p51, %p52
    %p54 = scmp.ne.s32.totalorder %s45, %s46
    %p55 = scmp.eq.s32.totalorder %s14, 0
    %p56 = por %p54, %p55
    %p57 = scmp.ne.s32.totalorder %s45, %s46
    %p58 = scmp.eq.s32.totalorder %s15, 1
    %p59 = por %p57, %p58
    %p61 = scmp.ne.s32.totalorder %s46, %s60
    %p62 = scmp.eq.s32.totalorder %s15, 0
    %p63 = por %p61, %p62
    %s65 = sadd.s32 %s64, 1
    %p68 = scmp.eq.s32.totalorder %s9, 1
    %p69 = scmp.ne.s32.totalorder %s64, %s66
    %p70 = scmp.eq.s32.totalorder %s9, 0
    %p71 = por %p69, %p70
    %p72 = scmp.ne.s32.totalorder %s64, %s66
    %p73 = scmp.eq.s32.totalorder %s14, 1
    %p74 = por %p72, %p73
    %p75 = scmp.ne.s32.totalorder %s66, %s67
    %p76 = scmp.eq.s32.totalorder %s14, 0
    %p77 = por %p75, %p76
    %p78 = scmp.ne.s32.totalorder %s66, %s67
    %p79 = scmp.eq.s32.totalorder %s15, 1
    %p80 = por %p78, %p79
    %p82 = scmp.ne.s32.totalorder %s67, %s81
    %p83 = scmp.eq.s32.totalorder %s15, 0
    %p84 = por %p82, %p83
    %s85 = ssub.s32 %s9, %s16
    %p86 = scmp.eq.s32.totalorder %s85, 0
    %s88 = sadd.s32 %s87, 1
    %s89 = scalar_select %p86, %s87, %s88
    %p92 = pneg %p86
    %p93 = scmp.eq.s32.totalorder %s9, 1
    %p94 = por %p92, %p93
    %p95 = scmp.ne.s32.totalorder %s87, %s90
    %p96 = scmp.eq.s32.totalorder %s9, 0
    %p97 = por %p95, %p96
    %p98 = scmp.ne.s32.totalorder %s87, %s90
    %p99 = scmp.eq.s32.totalorder %s14, 1
    %p100 = por %p98, %p99
    %p101 = scmp.ne.s32.totalorder %s90, %s91
    %p102 = scmp.eq.s32.totalorder %s14, 0
    %p103 = por %p101, %p102
    %p104 = scmp.ne.s32.totalorder %s90, %s91
    %p105 = scmp.eq.s32.totalorder %s15, 1
    %p106 = por %p104, %p105
    %p108 = scmp.ne.s32.totalorder %s91, %s107
    %p109 = scmp.eq.s32.totalorder %s15, 0
    %p110 = por %p108, %p109
    %p111 = scmp.le.s32.totalorder 1, %s9
    %p112 = scmp.lt.s32.totalorder %s9, 3
    %p113 = pnand %p111, %p112
    %p114 = pneg %p113
    // Predicated region
    $region9: #{soft_masked_bert_forward.13} parent=5 // pred_check
      _
    $region10: #{soft_masked_bert_forward.13} parent=5 // pred_check_branch
      %116 = sbr.rel (%p113) target = $region12
    $region11: #{soft_masked_bert_forward.13} parent=5 // pred_region
      %s117 = ssub.s32 %s9, 1
      // Predicated region
      $region13: #{soft_masked_bert_forward.13} parent=11 // pred_check
        %p118 = pneg %p56
      $region14: #{soft_masked_bert_forward.13} parent=11 // pred_check_branch
        %120 = sbr.rel (%p118) target = $region16
      $region15: #{soft_masked_bert_forward.13} parent=11 // pred_region
        _
      $region16: #{soft_masked_bert_forward.13} parent=11 // pred_fallthru
        _
      // Predicated region
      $region17: #{soft_masked_bert_forward.13} parent=11 // pred_check
        %p121 = pneg %p77
      $region18: #{soft_masked_bert_forward.13} parent=11 // pred_check_branch
        %123 = sbr.rel (%p121) target = $region20
      $region19: #{soft_masked_bert_forward.13} parent=11 // pred_region
        _
      $region20: #{soft_masked_bert_forward.13} parent=11 // pred_fallthru
        _
    $region12: #{soft_masked_bert_forward.13} parent=5 // pred_fallthru
      _
    %p124 = scmp.lt.s32.totalorder %s9, 2
    // Predicated region
    $region21: #{soft_masked_bert_forward.13} parent=5 // pred_check
      %p125 = pneg %p124
    $region22: #{soft_masked_bert_forward.13} parent=5 // pred_check_branch
      %127 = sbr.rel (%p125) target = $region24
    $region23: #{soft_masked_bert_forward.13} parent=5 // pred_region
      // Predicated region
      $region25: #{soft_masked_bert_forward.13} parent=23 // pred_check
        %p128 = pneg %p29
      $region26: #{soft_masked_bert_forward.13} parent=23 // pred_check_branch
        %130 = sbr.rel (%p128) target = $region28
      $region27: #{soft_masked_bert_forward.13} parent=23 // pred_region
        %p131 = scmp.lt.s32.totalorder %s9, 1
        %s132 = scalar_select %p131, %s9, 1
        %s133 = smul.addr %s132, 8
        %s134 = scalar_lea.vmem %s0, %s133
      $region28: #{soft_masked_bert_forward.13} parent=23 // pred_fallthru
        _
    $region24: #{soft_masked_bert_forward.13} parent=5 // pred_fallthru
      _
    %p135 = scmp.le.s32.totalorder 1, %s9
    %p136 = scmp.lt.s32.totalorder %s9, 3
    %p137 = pnand %p135, %p136
    %p138 = pneg %p137
    // Predicated region
    $region29: #{soft_masked_bert_forward.13} parent=5 // pred_check
      _
    $region30: #{soft_masked_bert_forward.13} parent=5 // pred_check_branch
      %140 = sbr.rel (%p137) target = $region32
    $region31: #{soft_masked_bert_forward.13} parent=5 // pred_region
      %s141 = ssub.s32 %s9, 1
      %p142 = scmp.lt.s32.totalorder %s14, 1
      %s143 = scalar_select %p142, %s14, 1
      %s144 = smul.addr %s143, 8
      %s145 = scalar_lea.vmem %s0, %s144
      %p146 = pneg %p35
      %p147 = pneg %p32
      %p148 = pneg %p56
      %p149 = pneg %p53
      %p150 = pneg %p77
      %p151 = pneg %p74
      %p152 = pneg %p103
      %p153 = pneg %p100
      %p154 = scmp.lt.s32.totalorder %s14, 1
      %s155 = scalar_select %p154, %s14, 1
      %s156 = smul.addr %s155, 8
      %s157 = scalar_lea.vmem %s3, %s156
      %p158 = scmp.lt.s32.totalorder %s14, 1
      %s159 = scalar_select %p158, %s14, 1
      %s160 = smul.addr %s159, 8
      %s161 = scalar_lea.vmem %s0, %s160
      %p162 = scmp.lt.s32.totalorder %s14, 1
      %s163 = scalar_select %p162, %s14, 1
      %s164 = smul.addr %s163, 8
      %s165 = scalar_lea.vmem %s3, %s164
      %v166 = vld [vmem:[%s161] sm:$0xff]
      %v167 = vld [vmem:[%s1] sm:$0x1]
      %v168 = vld [vmem:[%s2] sm:$0x1]
      %vm169 = vcmask 261120
      %v170 = vsel %vm169, %v166, 0.0
      %171 = vadd.xlane.f32.xlu0 %v170
      %v172 = vpop.xlane.xlu0 %171
      %v173 = vrcp.pop 32.0
      %v174 = vmul.f32 %v172, %v173
      %v175 = vsub.f32 %v166, %v174
      %v176 = vmul.f32 %v175, %v175
      %v177 = vsel %vm169, %v176, 0.0
      %178 = vadd.xlane.f32.xlu0 %v177
      %v179 = vpop.xlane.xlu0 %178
      %v180 = vmul.f32 %v179, %v173
      %v181 = vadd.f32 %v180, 1e-12
      %v182 = vrsqrt.pop %v181
      %v183 = vmul.f32 %v175, %v182
      %v185 = vlaneseq
      %v186 = vshrl.u32 %v185, 7
      %v187 = vsub.s32 0, %v186
      %v188 = vrot.slane %v167, %v187
      %v190 = vmul.f32 %v183, %v188
      %v192 = vlaneseq
      %v193 = vshrl.u32 %v192, 7
      %v194 = vsub.s32 0, %v193
      %v195 = vrot.slane %v168, %v194
      %v197 = vadd.f32 %v190, %v195
      %198 = vst.msk [vmem:[%s165] sm:$0xff] %vm169, %v197
      %p199 = scmp.lt.s32.totalorder %s14, 1
      %s200 = scalar_select %p199, %s14, 1
      %s201 = smul.addr %s200, 8
      %s202 = scalar_lea.vmem %s3, %s201
      // Predicated region
      $region33: #{soft_masked_bert_forward.13} parent=31 // pred_check
        %p203 = pneg %p100
      $region34: #{soft_masked_bert_forward.13} parent=31 // pred_check_branch
        %205 = sbr.rel (%p203) target = $region36
      $region35: #{soft_masked_bert_forward.13} parent=31 // pred_region
        _
      $region36: #{soft_masked_bert_forward.13} parent=31 // pred_fallthru
        _
    $region32: #{soft_masked_bert_forward.13} parent=5 // pred_fallthru
      _
    %p206 = scmp.le.s32.totalorder 2, %s9
    // Predicated region
    $region37: #{soft_masked_bert_forward.13} parent=5 // pred_check
      %p207 = pneg %p206
    $region38: #{soft_masked_bert_forward.13} parent=5 // pred_check_branch
      %209 = sbr.rel (%p207) target = $region40
    $region39: #{soft_masked_bert_forward.13} parent=5 // pred_region
      %s210 = ssub.s32 %s9, 2
      // Predicated region
      $region41: #{soft_masked_bert_forward.13} parent=39 // pred_check
        %p211 = pneg %p106
      $region42: #{soft_masked_bert_forward.13} parent=39 // pred_check_branch
        %213 = sbr.rel (%p211) target = $region44
      $region43: #{soft_masked_bert_forward.13} parent=39 // pred_region
        %p214 = scmp.lt.s32.totalorder %s15, 1
        %s215 = scalar_select %p214, %s15, 1
        %s216 = smul.addr %s215, 8
        %s217 = scalar_lea.vmem %s3, %s216
      $region44: #{soft_masked_bert_forward.13} parent=39 // pred_fallthru
        _
    $region40: #{soft_masked_bert_forward.13} parent=5 // pred_fallthru
      _
  $region6: #{soft_masked_bert_forward.13} parent=0 // loop_footer
    %s13 = sadd.s32 1, %s9
  $region7: #{soft_masked_bert_forward.13} parent=0 // loop_footer_branch
    %8 = sbr.rel target = $region3
  $region8: #{soft_masked_bert_forward.13} parent=0 // loop_exit
    _

// kernel: soft_masked_bert_forward.14
$region0: #{soft_masked_bert_forward.14}
  #allocation0 [shape = 'u32[]', space=smem, size = 0x4, offset = 0x4, fixed_abs, tag = 'smem constant byte address 0x4 - core index']
  #allocation1 [shape = 'u32[144,128]{1,0:T(1,128)}', space=vmem, size = 0x12000, scoped, tag = 'internal scratch']
  %s0 = inlined_call_operand.vmem [shape: f32[16,32], index: 0, kind: input, shape index: {}]
  %s1 = inlined_call_operand.vmem [shape: bf16[32,96], index: 1, kind: input, shape index: {}]
  %s2 = inlined_call_operand.vmem [shape: f32[1,96], index: 2, kind: input, shape index: {}]
  %s3 = inlined_call_operand.vmem [shape: f32[16,96], index: 3, kind: output, shape index: {}]
  %s4 = sld [smem:[#allocation0]]
  $region45: #{soft_masked_bert_forward.14} parent=0
    _
  %s6 = ssub.s32 1, %s4
  %s7 = scalar_select 0, %s6, %s4
  loop: start=0, step=1, limit=4
  $region2: #{soft_masked_bert_forward.14} parent=0 // loop_pre_header
    _
  $region3: #{soft_masked_bert_forward.14} parent=0 // loop_header
    %s9 = sphi 0, %s13
    %p10 = scmp.ge.s32.totalorder %s9, 4
    %s19 = sphi 0, %s21
    %s22 = sphi 0, %s19
    %s23 = sphi 0, %s22
    %s39 = sphi 0, %s23
    %s43 = sphi 0, %s43
    %s45 = sphi 0, %s43
    %s46 = sphi 0, %s45
    %s60 = sphi 0, %s46
    %s64 = sphi 0, %s64
    %s66 = sphi 0, %s64
    %s67 = sphi 0, %s66
    %s81 = sphi 0, %s67
    %s87 = sphi 0, %s89
    %s90 = sphi 0, %s87
    %s91 = sphi 0, %s90
    %s107 = sphi 0, %s91
  $region4: #{soft_masked_bert_forward.14} parent=0 // loop_header_branch
    %12 = sbr.rel (%p10) target = $region8
  $region5: #{soft_masked_bert_forward.14} parent=0 // loop_body
    %s14 = ssub.s32 %s9, 1
    %s15 = ssub.s32 %s9, 2
    %s16 = sadd.s32 %s9, 1
    %s17 = ssub.s32 %s9, %s16
    %p18 = scmp.eq.s32.totalorder %s17, 0
    %s20 = sadd.s32 %s19, 1
    %s21 = scalar_select %p18, %s19, %s20
    %p24 = pneg %p18
    %p25 = scmp.eq.s32.totalorder %s9, 1
    %p26 = por %p24, %p25
    %p27 = scmp.ne.s32.totalorder %s19, %s22
    %p28 = scmp.eq.s32.totalorder %s9, 0
    %p29 = por %p27, %p28
    %p30 = scmp.ne.s32.totalorder %s19, %s22
    %p31 = scmp.eq.s32.totalorder %s14, 1
    %p32 = por %p30, %p31
    %p33 = scmp.ne.s32.totalorder %s22, %s23
    %p34 = scmp.eq.s32.totalorder %s14, 0
    %p35 = por %p33, %p34
    %p36 = scmp.ne.s32.totalorder %s22, %s23
    %p37 = scmp.eq.s32.totalorder %s15, 1
    %p38 = por %p36, %p37
    %p40 = scmp.ne.s32.totalorder %s23, %s39
    %p41 = scmp.eq.s32.totalorder %s15, 0
    %p42 = por %p40, %p41
    %s44 = sadd.s32 %s43, 1
    %p47 = scmp.eq.s32.totalorder %s9, 1
    %p48 = scmp.ne.s32.totalorder %s43, %s45
    %p49 = scmp.eq.s32.totalorder %s9, 0
    %p50 = por %p48, %p49
    %p51 = scmp.ne.s32.totalorder %s43, %s45
    %p52 = scmp.eq.s32.totalorder %s14, 1
    %p53 = por %p51, %p52
    %p54 = scmp.ne.s32.totalorder %s45, %s46
    %p55 = scmp.eq.s32.totalorder %s14, 0
    %p56 = por %p54, %p55
    %p57 = scmp.ne.s32.totalorder %s45, %s46
    %p58 = scmp.eq.s32.totalorder %s15, 1
    %p59 = por %p57, %p58
    %p61 = scmp.ne.s32.totalorder %s46, %s60
    %p62 = scmp.eq.s32.totalorder %s15, 0
    %p63 = por %p61, %p62
    %s65 = sadd.s32 %s64, 1
    %p68 = scmp.eq.s32.totalorder %s9, 1
    %p69 = scmp.ne.s32.totalorder %s64, %s66
    %p70 = scmp.eq.s32.totalorder %s9, 0
    %p71 = por %p69, %p70
    %p72 = scmp.ne.s32.totalorder %s64, %s66
    %p73 = scmp.eq.s32.totalorder %s14, 1
    %p74 = por %p72, %p73
    %p75 = scmp.ne.s32.totalorder %s66, %s67
    %p76 = scmp.eq.s32.totalorder %s14, 0
    %p77 = por %p75, %p76
    %p78 = scmp.ne.s32.totalorder %s66, %s67
    %p79 = scmp.eq.s32.totalorder %s15, 1
    %p80 = por %p78, %p79
    %p82 = scmp.ne.s32.totalorder %s67, %s81
    %p83 = scmp.eq.s32.totalorder %s15, 0
    %p84 = por %p82, %p83
    %s85 = ssub.s32 %s9, %s16
    %p86 = scmp.eq.s32.totalorder %s85, 0
    %s88 = sadd.s32 %s87, 1
    %s89 = scalar_select %p86, %s87, %s88
    %p92 = pneg %p86
    %p93 = scmp.eq.s32.totalorder %s9, 1
    %p94 = por %p92, %p93
    %p95 = scmp.ne.s32.totalorder %s87, %s90
    %p96 = scmp.eq.s32.totalorder %s9, 0
    %p97 = por %p95, %p96
    %p98 = scmp.ne.s32.totalorder %s87, %s90
    %p99 = scmp.eq.s32.totalorder %s14, 1
    %p100 = por %p98, %p99
    %p101 = scmp.ne.s32.totalorder %s90, %s91
    %p102 = scmp.eq.s32.totalorder %s14, 0
    %p103 = por %p101, %p102
    %p104 = scmp.ne.s32.totalorder %s90, %s91
    %p105 = scmp.eq.s32.totalorder %s15, 1
    %p106 = por %p104, %p105
    %p108 = scmp.ne.s32.totalorder %s91, %s107
    %p109 = scmp.eq.s32.totalorder %s15, 0
    %p110 = por %p108, %p109
    %p111 = scmp.le.s32.totalorder 1, %s9
    %p112 = scmp.lt.s32.totalorder %s9, 3
    %p113 = pnand %p111, %p112
    %p114 = pneg %p113
    // Predicated region
    $region9: #{soft_masked_bert_forward.14} parent=5 // pred_check
      _
    $region10: #{soft_masked_bert_forward.14} parent=5 // pred_check_branch
      %116 = sbr.rel (%p113) target = $region12
    $region11: #{soft_masked_bert_forward.14} parent=5 // pred_region
      %s117 = ssub.s32 %s9, 1
      // Predicated region
      $region13: #{soft_masked_bert_forward.14} parent=11 // pred_check
        %p118 = pneg %p56
      $region14: #{soft_masked_bert_forward.14} parent=11 // pred_check_branch
        %120 = sbr.rel (%p118) target = $region16
      $region15: #{soft_masked_bert_forward.14} parent=11 // pred_region
        _
      $region16: #{soft_masked_bert_forward.14} parent=11 // pred_fallthru
        _
      // Predicated region
      $region17: #{soft_masked_bert_forward.14} parent=11 // pred_check
        %p121 = pneg %p77
      $region18: #{soft_masked_bert_forward.14} parent=11 // pred_check_branch
        %123 = sbr.rel (%p121) target = $region20
      $region19: #{soft_masked_bert_forward.14} parent=11 // pred_region
        _
      $region20: #{soft_masked_bert_forward.14} parent=11 // pred_fallthru
        _
    $region12: #{soft_masked_bert_forward.14} parent=5 // pred_fallthru
      _
    %p124 = scmp.lt.s32.totalorder %s9, 2
    // Predicated region
    $region21: #{soft_masked_bert_forward.14} parent=5 // pred_check
      %p125 = pneg %p124
    $region22: #{soft_masked_bert_forward.14} parent=5 // pred_check_branch
      %127 = sbr.rel (%p125) target = $region24
    $region23: #{soft_masked_bert_forward.14} parent=5 // pred_region
      // Predicated region
      $region25: #{soft_masked_bert_forward.14} parent=23 // pred_check
        %p128 = pneg %p29
      $region26: #{soft_masked_bert_forward.14} parent=23 // pred_check_branch
        %130 = sbr.rel (%p128) target = $region28
      $region27: #{soft_masked_bert_forward.14} parent=23 // pred_region
        %p131 = scmp.lt.s32.totalorder %s9, 1
        %s132 = scalar_select %p131, %s9, 1
        %s133 = smul.addr %s132, 8
        %s134 = scalar_lea.vmem %s0, %s133
      $region28: #{soft_masked_bert_forward.14} parent=23 // pred_fallthru
        _
    $region24: #{soft_masked_bert_forward.14} parent=5 // pred_fallthru
      _
    %p135 = scmp.le.s32.totalorder 1, %s9
    %p136 = scmp.lt.s32.totalorder %s9, 3
    %p137 = pnand %p135, %p136
    %p138 = pneg %p137
    // Predicated region
    $region29: #{soft_masked_bert_forward.14} parent=5 // pred_check
      _
    $region30: #{soft_masked_bert_forward.14} parent=5 // pred_check_branch
      %140 = sbr.rel (%p137) target = $region32
    $region31: #{soft_masked_bert_forward.14} parent=5 // pred_region
      %s141 = ssub.s32 %s9, 1
      %p142 = scmp.lt.s32.totalorder %s14, 1
      %s143 = scalar_select %p142, %s14, 1
      %s144 = smul.addr %s143, 8
      %s145 = scalar_lea.vmem %s0, %s144
      %p146 = pneg %p35
      %p147 = pneg %p32
      %p148 = pneg %p56
      %p149 = pneg %p53
      %p150 = pneg %p77
      %p151 = pneg %p74
      %p152 = pneg %p103
      %p153 = pneg %p100
      %p154 = scmp.lt.s32.totalorder %s14, 1
      %s155 = scalar_select %p154, %s14, 1
      %s156 = smul.addr %s155, 8
      %s157 = scalar_lea.vmem %s3, %s156
      %p158 = scmp.lt.s32.totalorder %s14, 1
      %s159 = scalar_select %p158, %s14, 1
      %s160 = smul.addr %s159, 8
      %s161 = scalar_lea.vmem %s0, %s160
      %p162 = scmp.lt.s32.totalorder %s14, 1
      %s163 = scalar_select %p162, %s14, 1
      %s164 = smul.addr %s163, 8
      %s165 = scalar_lea.vmem %s3, %s164
      %v167 = vld [vmem:[%s161] sm:$0xff]
      %v168 = vpack.c.bf16 %v167, %v167
      %v169 = vld [vmem:[%s1] sm:$0xf]
      %v170 = vld [vmem:[%s1 + $0x4] sm:$0xf]
      %v171 = vld [vmem:[%s1 + $0x8] sm:$0xf]
      %v172 = vld [vmem:[%s1 + $0xc] sm:$0xf]
      %v173 = vld [vmem:[%s2] sm:$0x1]
      %v175 = vlaneseq
      %v176 = vshrl.u32 %v175, 7
      %v177 = vsub.s32 0, %v176
      %v178 = vrot.slane %v173, %v177
      %v184 = vunpack.c.l.b16 %v169
      %v185 = vunpack.c.l.b16 %v170
      %v186 = vunpack.c.l.b16 %v171
      %v187 = vunpack.c.l.b16 %v172
      %v188 = vpack.c.b16 %v185, %v184
      %v189 = vpack.c.b16 %v187, %v186
      %vm192 = vcmask 261120
      %v194 = vsel %vm192, %v168, 0
      %196 = vmatprep.subr.bf16.mxu0 0
      %197 = vmatpush1.bf16.msra.mxu0 %v188
      %198 = vmatprep.subr.bf16.mxu0 0
      %199 = vmatpush1.bf16.msra.mxu0 %v189
      %200 = vmatprep.subr.bf16.mxu0 0
      %201 = vmatpush1.bf16.msra.mxu0 0
      %202 = vmatprep.subr.bf16.mxu0 0
      %203 = vmatpush1.bf16.msra.mxu0 0
      %204 = vmatprep.subr.bf16.mxu0 0
      %205 = vmatpush1.bf16.msra.mxu0 0
      %206 = vmatprep.subr.bf16.mxu0 0
      %207 = vmatpush1.bf16.msra.mxu0 0
      %208 = vmatprep.subr.bf16.mxu0 0
      %209 = vmatpush1.bf16.msra.mxu0 0
      %210 = vmatprep.subr.bf16.mxu0 0
      %211 = vmatpush1.bf16.msra.mxu0 0
      %212 = vmatprep.subr.bf16.mxu0 0
      %213 = vmatpush1.bf16.msra.mxu0 0
      %214 = vmatprep.subr.bf16.mxu0 0
      %215 = vmatpush1.bf16.msra.mxu0 0
      %216 = vmatprep.subr.bf16.mxu0 0
      %217 = vmatpush1.bf16.msra.mxu0 0
      %218 = vmatprep.subr.bf16.mxu0 0
      %219 = vmatpush1.bf16.msra.mxu0 0
      %220 = vmatprep.subr.bf16.mxu0 0
      %221 = vmatpush1.bf16.msra.mxu0 0
      %222 = vmatprep.subr.bf16.mxu0 0
      %223 = vmatpush1.bf16.msra.mxu0 0
      %224 = vmatprep.subr.bf16.mxu0 0
      %225 = vmatpush1.bf16.msra.mxu0 0
      %226 = vmatprep.subr.bf16.mxu0 0
      %227 = vmatpush1.bf16.msra.mxu0 0
      %228 = vmatprep.mubr.bf16.mxu0 0
      %229 = vmatmul.mubr.bf16.gmra.mrb[0].mxu0 %v194
      %v230 = vpop.f32.mrb[0].mxu0
      %v231 = vadd.f32 %v178, %v230
      %v232 = vpop.f32.mrb[0].mxu0
      %v233 = vpop.f32.mrb[0].mxu0
      %v234 = vpop.f32.mrb[0].mxu0
      %235 = vdwg.mxu0
      %vm236 = vcmask 785408
      %237 = vst.msk [vmem:[%s165] sm:$0xff] %vm236, %v231
      %p238 = scmp.lt.s32.totalorder %s14, 1
      %s239 = scalar_select %p238, %s14, 1
      %s240 = smul.addr %s239, 8
      %s241 = scalar_lea.vmem %s3, %s240
      // Predicated region
      $region33: #{soft_masked_bert_forward.14} parent=31 // pred_check
        %p242 = pneg %p100
      $region34: #{soft_masked_bert_forward.14} parent=31 // pred_check_branch
        %244 = sbr.rel (%p242) target = $region36
      $region35: #{soft_masked_bert_forward.14} parent=31 // pred_region
        _
      $region36: #{soft_masked_bert_forward.14} parent=31 // pred_fallthru
        _
    $region32: #{soft_masked_bert_forward.14} parent=5 // pred_fallthru
      _
    %p245 = scmp.le.s32.totalorder 2, %s9
    // Predicated region
    $region37: #{soft_masked_bert_forward.14} parent=5 // pred_check
      %p246 = pneg %p245
    $region38: #{soft_masked_bert_forward.14} parent=5 // pred_check_branch
      %248 = sbr.rel (%p246) target = $region40
    $region39: #{soft_masked_bert_forward.14} parent=5 // pred_region
      %s249 = ssub.s32 %s9, 2
      // Predicated region
      $region41: #{soft_masked_bert_forward.14} parent=39 // pred_check
        %p250 = pneg %p106
      $region42: #{soft_masked_bert_forward.14} parent=39 // pred_check_branch
        %252 = sbr.rel (%p250) target = $region44
      $region43: #{soft_masked_bert_forward.14} parent=39 // pred_region
        %p253 = scmp.lt.s32.totalorder %s15, 1
        %s254 = scalar_select %p253, %s15, 1
        %s255 = smul.addr %s254, 8
        %s256 = scalar_lea.vmem %s3, %s255
      $region44: #{soft_masked_bert_forward.14} parent=39 // pred_fallthru
        _
    $region40: #{soft_masked_bert_forward.14} parent=5 // pred_fallthru
      _
  $region6: #{soft_masked_bert_forward.14} parent=0 // loop_footer
    %s13 = sadd.s32 1, %s9
  $region7: #{soft_masked_bert_forward.14} parent=0 // loop_footer_branch
    %8 = sbr.rel target = $region3
  $region8: #{soft_masked_bert_forward.14} parent=0 // loop_exit
    _

// kernel: soft_masked_bert_forward.15
$region0: #{soft_masked_bert_forward.15}
  #allocation0 [shape = 'u32[]', space=smem, size = 0x4, offset = 0x4, fixed_abs, tag = 'smem constant byte address 0x4 - core index']
  #allocation1 [shape = 'u32[144,128]{1,0:T(1,128)}', space=vmem, size = 0x12000, scoped, tag = 'internal scratch']
  #allocation2 [shape = 'f32[2,2,16]{2,1,0:T(2,128)}', space=vmem, size = 0x800, scoped, tag = 'scratch operand']
  %s0 = inlined_call_operand.vmem [shape: f32[8,2,96], index: 0, kind: input, shape index: {}, may-alias: {0,1}]
  %s1 = inlined_call_operand.vmem [shape: f32[8,2,96], index: 1, kind: input, shape index: {}, may-alias: {0,1}]
  %s2 = inlined_call_operand.vmem [shape: bf16[2,16,48], index: 2, kind: input, shape index: {}]
  %s3 = inlined_call_operand.vmem [shape: f32[2,1,48], index: 3, kind: input, shape index: {}]
  %s4 = inlined_call_operand.vmem [shape: f32[8,2,16], index: 4, kind: output, shape index: {0}]
  %s5 = inlined_call_operand.vmem [shape: f32[8,2,16], index: 5, kind: output, shape index: {1}]
  %6 = xla_tuple %s4, %s5
  %s7 = sld [smem:[#allocation0]]
  $region61: #{soft_masked_bert_forward.15} parent=0
    _
  %s9 = ssub.s32 1, %s7
  %s10 = scalar_select 0, %s9, %s7
  loop: start=0, step=1, limit=10
  $region2: #{soft_masked_bert_forward.15} parent=0 // loop_pre_header
    _
  $region3: #{soft_masked_bert_forward.15} parent=0 // loop_header
    %s12 = sphi 0, %s16
    %p13 = scmp.ge.s32.totalorder %s12, 10
    %s22 = sphi 0, %s24
    %s25 = sphi 0, %s22
    %s26 = sphi 0, %s25
    %s42 = sphi 0, %s26
    %s50 = sphi 0, %s52
    %s53 = sphi 0, %s50
    %s54 = sphi 0, %s53
    %s70 = sphi 0, %s54
    %s74 = sphi 0, %s74
    %s76 = sphi 0, %s74
    %s77 = sphi 0, %s76
    %s91 = sphi 0, %s77
    %s95 = sphi 0, %s95
    %s97 = sphi 0, %s95
    %s98 = sphi 0, %s97
    %s112 = sphi 0, %s98
    %s118 = sphi 0, %s120
    %s121 = sphi 0, %s118
    %s122 = sphi 0, %s121
    %s138 = sphi 0, %s122
    %s146 = sphi 0, %s148
    %s149 = sphi 0, %s146
    %s150 = sphi 0, %s149
    %s166 = sphi 0, %s150
  $region4: #{soft_masked_bert_forward.15} parent=0 // loop_header_branch
    %15 = sbr.rel (%p13) target = $region8
  $region5: #{soft_masked_bert_forward.15} parent=0 // loop_body
    %s17 = ssub.s32 %s12, 1
    %s18 = ssub.s32 %s12, 2
    %s19 = sadd.s32 %s12, 1
    %s20 = ssub.s32 %s12, %s19
    %p21 = scmp.eq.s32.totalorder %s20, 0
    %s23 = sadd.s32 %s22, 1
    %s24 = scalar_select %p21, %s22, %s23
    %p27 = pneg %p21
    %p28 = scmp.eq.s32.totalorder %s12, 7
    %p29 = por %p27, %p28
    %p30 = scmp.ne.s32.totalorder %s22, %s25
    %p31 = scmp.eq.s32.totalorder %s12, 0
    %p32 = por %p30, %p31
    %p33 = scmp.ne.s32.totalorder %s22, %s25
    %p34 = scmp.eq.s32.totalorder %s17, 7
    %p35 = por %p33, %p34
    %p36 = scmp.ne.s32.totalorder %s25, %s26
    %p37 = scmp.eq.s32.totalorder %s17, 0
    %p38 = por %p36, %p37
    %p39 = scmp.ne.s32.totalorder %s25, %s26
    %p40 = scmp.eq.s32.totalorder %s18, 7
    %p41 = por %p39, %p40
    %p43 = scmp.ne.s32.totalorder %s26, %s42
    %p44 = scmp.eq.s32.totalorder %s18, 0
    %p45 = por %p43, %p44
    %s46 = ssub.s32 7, %s12
    %s47 = ssub.s32 7, %s19
    %s48 = ssub.s32 %s46, %s47
    %p49 = scmp.eq.s32.totalorder %s48, 0
    %s51 = sadd.s32 %s50, 1
    %s52 = scalar_select %p49, %s50, %s51
    %p55 = pneg %p49
    %p56 = scmp.eq.s32.totalorder %s12, 7
    %p57 = por %p55, %p56
    %p58 = scmp.ne.s32.totalorder %s50, %s53
    %p59 = scmp.eq.s32.totalorder %s12, 0
    %p60 = por %p58, %p59
    %p61 = scmp.ne.s32.totalorder %s50, %s53
    %p62 = scmp.eq.s32.totalorder %s17, 7
    %p63 = por %p61, %p62
    %p64 = scmp.ne.s32.totalorder %s53, %s54
    %p65 = scmp.eq.s32.totalorder %s17, 0
    %p66 = por %p64, %p65
    %p67 = scmp.ne.s32.totalorder %s53, %s54
    %p68 = scmp.eq.s32.totalorder %s18, 7
    %p69 = por %p67, %p68
    %p71 = scmp.ne.s32.totalorder %s54, %s70
    %p72 = scmp.eq.s32.totalorder %s18, 0
    %p73 = por %p71, %p72
    %s75 = sadd.s32 %s74, 1
    %p78 = scmp.eq.s32.totalorder %s12, 7
    %p79 = scmp.ne.s32.totalorder %s74, %s76
    %p80 = scmp.eq.s32.totalorder %s12, 0
    %p81 = por %p79, %p80
    %p82 = scmp.ne.s32.totalorder %s74, %s76
    %p83 = scmp.eq.s32.totalorder %s17, 7
    %p84 = por %p82, %p83
    %p85 = scmp.ne.s32.totalorder %s76, %s77
    %p86 = scmp.eq.s32.totalorder %s17, 0
    %p87 = por %p85, %p86
    %p88 = scmp.ne.s32.totalorder %s76, %s77
    %p89 = scmp.eq.s32.totalorder %s18, 7
    %p90 = por %p88, %p89
    %p92 = scmp.ne.s32.totalorder %s77, %s91
    %p93 = scmp.eq.s32.totalorder %s18, 0
    %p94 = por %p92, %p93
    %s96 = sadd.s32 %s95, 1
    %p99 = scmp.eq.s32.totalorder %s12, 7
    %p100 = scmp.ne.s32.totalorder %s95, %s97
    %p101 = scmp.eq.s32.totalorder %s12, 0
    %p102 = por %p100, %p101
    %p103 = scmp.ne.s32.totalorder %s95, %s97
    %p104 = scmp.eq.s32.totalorder %s17, 7
    %p105 = por %p103, %p104
    %p106 = scmp.ne.s32.totalorder %s97, %s98
    %p107 = scmp.eq.s32.totalorder %s17, 0
    %p108 = por %p106, %p107
    %p109 = scmp.ne.s32.totalorder %s97, %s98
    %p110 = scmp.eq.s32.totalorder %s18, 7
    %p111 = por %p109, %p110
    %p113 = scmp.ne.s32.totalorder %s98, %s112
    %p114 = scmp.eq.s32.totalorder %s18, 0
    %p115 = por %p113, %p114
    %s116 = ssub.s32 %s12, %s19
    %p117 = scmp.eq.s32.totalorder %s116, 0
    %s119 = sadd.s32 %s118, 1
    %s120 = scalar_select %p117, %s118, %s119
    %p123 = pneg %p117
    %p124 = scmp.eq.s32.totalorder %s12, 7
    %p125 = por %p123, %p124
    %p126 = scmp.ne.s32.totalorder %s118, %s121
    %p127 = scmp.eq.s32.totalorder %s12, 0
    %p128 = por %p126, %p127
    %p129 = scmp.ne.s32.totalorder %s118, %s121
    %p130 = scmp.eq.s32.totalorder %s17, 7
    %p131 = por %p129, %p130
    %p132 = scmp.ne.s32.totalorder %s121, %s122
    %p133 = scmp.eq.s32.totalorder %s17, 0
    %p134 = por %p132, %p133
    %p135 = scmp.ne.s32.totalorder %s121, %s122
    %p136 = scmp.eq.s32.totalorder %s18, 7
    %p137 = por %p135, %p136
    %p139 = scmp.ne.s32.totalorder %s122, %s138
    %p140 = scmp.eq.s32.totalorder %s18, 0
    %p141 = por %p139, %p140
    %s142 = ssub.s32 7, %s12
    %s143 = ssub.s32 7, %s19
    %s144 = ssub.s32 %s142, %s143
    %p145 = scmp.eq.s32.totalorder %s144, 0
    %s147 = sadd.s32 %s146, 1
    %s148 = scalar_select %p145, %s146, %s147
    %p151 = pneg %p145
    %p152 = scmp.eq.s32.totalorder %s12, 7
    %p153 = por %p151, %p152
    %p154 = scmp.ne.s32.totalorder %s146, %s149
    %p155 = scmp.eq.s32.totalorder %s12, 0
    %p156 = por %p154, %p155
    %p157 = scmp.ne.s32.totalorder %s146, %s149
    %p158 = scmp.eq.s32.totalorder %s17, 7
    %p159 = por %p157, %p158
    %p160 = scmp.ne.s32.totalorder %s149, %s150
    %p161 = scmp.eq.s32.totalorder %s17, 0
    %p162 = por %p160, %p161
    %p163 = scmp.ne.s32.totalorder %s149, %s150
    %p164 = scmp.eq.s32.totalorder %s18, 7
    %p165 = por %p163, %p164
    %p167 = scmp.ne.s32.totalorder %s150, %s166
    %p168 = scmp.eq.s32.totalorder %s18, 0
    %p169 = por %p167, %p168
    %p170 = scmp.le.s32.totalorder 1, %s12
    %p171 = scmp.lt.s32.totalorder %s12, 9
    %p172 = pnand %p170, %p171
    %p173 = pneg %p172
    // Predicated region
    $region9: #{soft_masked_bert_forward.15} parent=5 // pred_check
      _
    $region10: #{soft_masked_bert_forward.15} parent=5 // pred_check_branch
      %175 = sbr.rel (%p172) target = $region12
    $region11: #{soft_masked_bert_forward.15} parent=5 // pred_region
      %s176 = ssub.s32 %s12, 1
      // Predicated region
      $region13: #{soft_masked_bert_forward.15} parent=11 // pred_check
        %p177 = pneg %p87
      $region14: #{soft_masked_bert_forward.15} parent=11 // pred_check_branch
        %179 = sbr.rel (%p177) target = $region16
      $region15: #{soft_masked_bert_forward.15} parent=11 // pred_region
        _
      $region16: #{soft_masked_bert_forward.15} parent=11 // pred_fallthru
        _
      // Predicated region
      $region17: #{soft_masked_bert_forward.15} parent=11 // pred_check
        %p180 = pneg %p108
      $region18: #{soft_masked_bert_forward.15} parent=11 // pred_check_branch
        %182 = sbr.rel (%p180) target = $region20
      $region19: #{soft_masked_bert_forward.15} parent=11 // pred_region
        _
      $region20: #{soft_masked_bert_forward.15} parent=11 // pred_fallthru
        _
    $region12: #{soft_masked_bert_forward.15} parent=5 // pred_fallthru
      _
    %p183 = scmp.lt.s32.totalorder %s12, 8
    // Predicated region
    $region21: #{soft_masked_bert_forward.15} parent=5 // pred_check
      %p184 = pneg %p183
    $region22: #{soft_masked_bert_forward.15} parent=5 // pred_check_branch
      %186 = sbr.rel (%p184) target = $region24
    $region23: #{soft_masked_bert_forward.15} parent=5 // pred_region
      // Predicated region
      $region25: #{soft_masked_bert_forward.15} parent=23 // pred_check
        %p187 = pneg %p32
      $region26: #{soft_masked_bert_forward.15} parent=23 // pred_check_branch
        %189 = sbr.rel (%p187) target = $region28
      $region27: #{soft_masked_bert_forward.15} parent=23 // pred_region
        %p190 = scmp.lt.s32.totalorder %s12, 7
        %s191 = scalar_select %p190, %s12, 7
        %s192 = smul.addr %s191, 2
        %s193 = scalar_lea.vmem %s0, %s192
      $region28: #{soft_masked_bert_forward.15} parent=23 // pred_fallthru
        _
      // Predicated region
      $region29: #{soft_masked_bert_forward.15} parent=23 // pred_check
        %p194 = pneg %p60
      $region30: #{soft_masked_bert_forward.15} parent=23 // pred_check_branch
        %196 = sbr.rel (%p194) target = $region32
      $region31: #{soft_masked_bert_forward.15} parent=23 // pred_region
        %s197 = ssub.s32 7, %s12
        %p198 = scmp.lt.s32.totalorder %s197, 7
        %s199 = scalar_select %p198, %s197, 7
        %s200 = smul.addr %s199, 2
        %s201 = scalar_lea.vmem %s1, %s200
        %s202 = ssub.s32 7, %s12
      $region32: #{soft_masked_bert_forward.15} parent=23 // pred_fallthru
        _
    $region24: #{soft_masked_bert_forward.15} parent=5 // pred_fallthru
      _
    %p203 = scmp.le.s32.totalorder 1, %s12
    %p204 = scmp.lt.s32.totalorder %s12, 9
    %p205 = pnand %p203, %p204
    %p206 = pneg %p205
    // Predicated region
    $region33: #{soft_masked_bert_forward.15} parent=5 // pred_check
      _
    $region34: #{soft_masked_bert_forward.15} parent=5 // pred_check_branch
      %208 = sbr.rel (%p205) target = $region36
    $region35: #{soft_masked_bert_forward.15} parent=5 // pred_region
      %s209 = ssub.s32 %s12, 1
      %p210 = scmp.lt.s32.totalorder %s17, 7
      %s211 = scalar_select %p210, %s17, 7
      %s212 = smul.addr %s211, 2
      %s213 = scalar_lea.vmem %s0, %s212
      %p214 = pneg %p38
      %p215 = pneg %p35
      %s216 = ssub.s32 7, %s17
      %p217 = scmp.lt.s32.totalorder %s216, 7
      %s218 = scalar_select %p217, %s216, 7
      %s219 = smul.addr %s218, 2
      %s220 = scalar_lea.vmem %s1, %s219
      %p221 = pneg %p66
      %p222 = pneg %p63
      %p223 = pneg %p87
      %p224 = pneg %p84
      %p225 = pneg %p108
      %p226 = pneg %p105
      %p227 = pneg %p134
      %p228 = pneg %p131
      %p229 = scmp.lt.s32.totalorder %s17, 7
      %s230 = scalar_select %p229, %s17, 7
      %s231 = smul.addr %s230, 2
      %s232 = scalar_lea.vmem %s4, %s231
      %p233 = pneg %p162
      %p234 = pneg %p159
      %s235 = ssub.s32 7, %s17
      %p236 = scmp.lt.s32.totalorder %s235, 7
      %s237 = scalar_select %p236, %s235, 7
      %s238 = smul.addr %s237, 2
      %s239 = scalar_lea.vmem %s5, %s238
      %p240 = scmp.lt.s32.totalorder %s17, 7
      %s241 = scalar_select %p240, %s17, 7
      %s242 = smul.addr %s241, 2
      %s243 = scalar_lea.vmem %s0, %s242
      %s244 = ssub.s32 7, %s17
      %p245 = scmp.lt.s32.totalorder %s244, 7
      %s246 = scalar_select %p245, %s244, 7
      %s247 = smul.addr %s246, 2
      %s248 = scalar_lea.vmem %s1, %s247
      %s249 = ssub.s32 7, %s17
      %p250 = scmp.lt.s32.totalorder %s17, 7
      %s251 = scalar_select %p250, %s17, 7
      %s252 = smul.addr %s251, 2
      %s253 = scalar_lea.vmem %s4, %s252
      %s254 = ssub.s32 7, %s17
      %p255 = scmp.lt.s32.totalorder %s254, 7
      %s256 = scalar_select %p255, %s254, 7
      %s257 = smul.addr %s256, 2
      %s258 = scalar_lea.vmem %s5, %s257
      %s259 = ssub.s32 7, %s17
      %p261 = scmp.eq.s32.totalorder %s17, 0
      // Predicated region
      $region37: #{soft_masked_bert_forward.15} parent=35 // pred_check
        %p262 = pneg %p261
      $region38: #{soft_masked_bert_forward.15} parent=35 // pred_check_branch
        %264 = sbr.rel (%p262) target = $region40
      $region39: #{soft_masked_bert_forward.15} parent=35 // pred_region
        %vm265 = vcmask 123904
        %266 = vst.msk [vmem:[#allocation2] sm:$0x3] %vm265, 0.0
        %267 = vst.msk [vmem:[#allocation2 + $0x2] sm:$0x3] %vm265, 0.0
      $region40: #{soft_masked_bert_forward.15} parent=35 // pred_fallthru
        _
      %v268 = vld [vmem:[%s243] sm:$0x3]
      %v269 = vld [vmem:[%s248] sm:$0x3]
      %v270 = vld [vmem:[#allocation2] sm:$0x3]
      %v271 = vld [vmem:[%s2] sm:$0xf]
      %v272 = vld [vmem:[%s2 + $0x4] sm:$0xf]
      %v273 = vld [vmem:[%s3] sm:$0x1]
      %v274 = vpack.c.bf16 %v270, %v270
      %v276 = vlaneseq
      %v277 = vshrl.u32 %v276, 7
      %v278 = vsub.s32 0, %v277
      %v279 = vrot.slane %v273, %v278
      %v283 = vunpack.c.l.b16 %v271
      %v284 = vunpack.c.l.b16 %v272
      %v285 = vpack.c.b16 %v284, %v283
      %vm287 = vcmask 130048
      %v289 = vsel %vm287, %v274, 0
      %291 = vmatprep.subr.bf16.mxu0 0
      %292 = vmatpush1.bf16.msra.mxu0 %v285
      %293 = vmatprep.subr.bf16.mxu0 0
      %294 = vmatpush1.bf16.msra.mxu0 0
      %295 = vmatprep.subr.bf16.mxu0 0
      %296 = vmatpush1.bf16.msra.mxu0 0
      %297 = vmatprep.subr.bf16.mxu0 0
      %298 = vmatpush1.bf16.msra.mxu0 0
      %299 = vmatprep.subr.bf16.mxu0 0
      %300 = vmatpush1.bf16.msra.mxu0 0
      %301 = vmatprep.subr.bf16.mxu0 0
      %302 = vmatpush1.bf16.msra.mxu0 0
      %303 = vmatprep.subr.bf16.mxu0 0
      %304 = vmatpush1.bf16.msra.mxu0 0
      %305 = vmatprep.subr.bf16.mxu0 0
      %306 = vmatpush1.bf16.msra.mxu0 0
      %307 = vmatprep.subr.bf16.mxu0 0
      %308 = vmatpush1.bf16.msra.mxu0 0
      %309 = vmatprep.subr.bf16.mxu0 0
      %310 = vmatpush1.bf16.msra.mxu0 0
      %311 = vmatprep.subr.bf16.mxu0 0
      %312 = vmatpush1.bf16.msra.mxu0 0
      %313 = vmatprep.subr.bf16.mxu0 0
      %314 = vmatpush1.bf16.msra.mxu0 0
      %315 = vmatprep.subr.bf16.mxu0 0
      %316 = vmatpush1.bf16.msra.mxu0 0
      %317 = vmatprep.subr.bf16.mxu0 0
      %318 = vmatpush1.bf16.msra.mxu0 0
      %319 = vmatprep.subr.bf16.mxu0 0
      %320 = vmatpush1.bf16.msra.mxu0 0
      %321 = vmatprep.subr.bf16.mxu0 0
      %322 = vmatpush1.bf16.msra.mxu0 0
      %323 = vmatprep.mubr.bf16.mxu0 0
      %324 = vmatmul.mubr.bf16.gmra.mrb[0].mxu0 %v289
      %v325 = vpop.f32.mrb[0].mxu0
      %v326 = vadd.f32 %v279, %v325
      %v327 = vpop.f32.mrb[0].mxu0
      %v328 = vpop.f32.mrb[0].mxu0
      %v329 = vpop.f32.mrb[0].mxu0
      %330 = vdwg.mxu0
      %v331 = vadd.f32 %v268, %v326
      %v332 = vxor.u32 %v331, 2147483648
      %v333 = vmul.f32 %v332, 1.442695
      %v334 = vpow.pop %v333
      %v335 = vadd.f32 %v334, 1.0
      %v336 = vrcp.pop %v335
      %v337 = vmul.f32 1.0, %v336
      %339 = vrot.lane.b32.xlu0 %v326, 96
      %v340 = vpop.permute.xlu0 %339
      %v342 = vmul.f32 %v337, %v340
      %344 = vrot.lane.b32.xlu0 %v342, 32
      %v345 = vpop.permute.xlu0 %344
      %v347 = vadd.f32 %v268, %v345
      %v348 = vtanh.pop %v347
      %v349 = vsub.f32 1.0, %v337
      %351 = vrot.lane.b32.xlu0 %v348, 112
      %v352 = vpop.permute.xlu0 %351
      %v354 = vmul.f32 %v349, %v352
      %356 = vrot.lane.b32.xlu0 %v270, 16
      %v357 = vpop.permute.xlu0 %356
      %v359 = vmul.f32 %v337, %v357
      %v360 = vadd.f32 %v354, %v359
      %s361 = scalar_lea.vmem [#allocation2], 2
      %v362 = vld [vmem:[%s361] sm:$0x3]
      %s363 = scalar_lea.vmem %s2, 8
      %v364 = vld [vmem:[%s363] sm:$0xf]
      %v365 = vld [vmem:[%s363 + $0x4] sm:$0xf]
      %s366 = scalar_lea.vmem %s3, 1
      %v367 = vld [vmem:[%s366] sm:$0x1]
      %v368 = vpack.c.bf16 %v362, %v362
      %v370 = vlaneseq
      %v371 = vshrl.u32 %v370, 7
      %v372 = vsub.s32 0, %v371
      %v373 = vrot.slane %v367, %v372
      %v377 = vunpack.c.l.b16 %v364
      %v378 = vunpack.c.l.b16 %v365
      %v379 = vpack.c.b16 %v378, %v377
      %v382 = vsel %vm287, %v368, 0
      %384 = vmatprep.subr.bf16.mxu0 0
      %385 = vmatpush1.bf16.msra.mxu0 %v379
      %386 = vmatprep.subr.bf16.mxu0 0
      %387 = vmatpush1.bf16.msra.mxu0 0
      %388 = vmatprep.subr.bf16.mxu0 0
      %389 = vmatpush1.bf16.msra.mxu0 0
      %390 = vmatprep.subr.bf16.mxu0 0
      %391 = vmatpush1.bf16.msra.mxu0 0
      %392 = vmatprep.subr.bf16.mxu0 0
      %393 = vmatpush1.bf16.msra.mxu0 0
      %394 = vmatprep.subr.bf16.mxu0 0
      %395 = vmatpush1.bf16.msra.mxu0 0
      %396 = vmatprep.subr.bf16.mxu0 0
      %397 = vmatpush1.bf16.msra.mxu0 0
      %398 = vmatprep.subr.bf16.mxu0 0
      %399 = vmatpush1.bf16.msra.mxu0 0
      %400 = vmatprep.subr.bf16.mxu0 0
      %401 = vmatpush1.bf16.msra.mxu0 0
      %402 = vmatprep.subr.bf16.mxu0 0
      %403 = vmatpush1.bf16.msra.mxu0 0
      %404 = vmatprep.subr.bf16.mxu0 0
      %405 = vmatpush1.bf16.msra.mxu0 0
      %406 = vmatprep.subr.bf16.mxu0 0
      %407 = vmatpush1.bf16.msra.mxu0 0
      %408 = vmatprep.subr.bf16.mxu0 0
      %409 = vmatpush1.bf16.msra.mxu0 0
      %410 = vmatprep.subr.bf16.mxu0 0
      %411 = vmatpush1.bf16.msra.mxu0 0
      %412 = vmatprep.subr.bf16.mxu0 0
      %413 = vmatpush1.bf16.msra.mxu0 0
      %414 = vmatprep.subr.bf16.mxu0 0
      %415 = vmatpush1.bf16.msra.mxu0 0
      %416 = vmatprep.mubr.bf16.mxu0 0
      %417 = vmatmul.mubr.bf16.gmra.mrb[0].mxu0 %v382
      %v418 = vpop.f32.mrb[0].mxu0
      %v419 = vadd.f32 %v373, %v418
      %v420 = vpop.f32.mrb[0].mxu0
      %v421 = vpop.f32.mrb[0].mxu0
      %v422 = vpop.f32.mrb[0].mxu0
      %423 = vdwg.mxu0
      %425 = vrot.lane.b32.xlu0 %v419, 48
      %v426 = vpop.permute.xlu0 %425
      %v428 = vadd.f32 %v269, %v426
      %v429 = vxor.u32 %v428, 2147483648
      %v430 = vmul.f32 %v429, 1.442695
      %v431 = vpow.pop %v430
      %v432 = vadd.f32 %v431, 1.0
      %v433 = vrcp.pop %v432
      %v434 = vmul.f32 1.0, %v433
      %435 = vrot.lane.b32.xlu0 %v419, 16
      %v436 = vpop.permute.xlu0 %435
      %v438 = vmul.f32 %v434, %v436
      %440 = vrot.lane.b32.xlu0 %v438, 32
      %v441 = vpop.permute.xlu0 %440
      %v443 = vadd.f32 %v269, %v441
      %v444 = vtanh.pop %v443
      %v445 = vsub.f32 1.0, %v434
      %447 = vrot.lane.b32.xlu0 %v444, 112
      %v448 = vpop.permute.xlu0 %447
      %v450 = vmul.f32 %v445, %v448
      %452 = vrot.lane.b32.xlu0 %v362, 64
      %v453 = vpop.permute.xlu0 %452
      %v455 = vmul.f32 %v434, %v453
      %v456 = vadd.f32 %v450, %v455
      %458 = vrot.lane.b32.xlu0 %v360, 112
      %v459 = vpop.permute.xlu0 %458
      %vm461 = vcmask 123904
      %462 = vst.msk [vmem:[#allocation2] sm:$0x3] %vm461, %v459
      %464 = vrot.lane.b32.xlu0 %v456, 64
      %v465 = vpop.permute.xlu0 %464
      %467 = vst.msk [vmem:[%s361] sm:$0x3] %vm461, %v465
      %468 = vst.msk [vmem:[%s253] sm:$0x3] %vm461, %v459
      %469 = vst.msk [vmem:[%s258] sm:$0x3] %vm461, %v465
      %p470 = scmp.lt.s32.totalorder %s17, 7
      %s471 = scalar_select %p470, %s17, 7
      %s472 = smul.addr %s471, 2
      %s473 = scalar_lea.vmem %s4, %s472
      %s474 = ssub.s32 7, %s17
      %p475 = scmp.lt.s32.totalorder %s474, 7
      %s476 = scalar_select %p475, %s474, 7
      %s477 = smul.addr %s476, 2
      %s478 = scalar_lea.vmem %s5, %s477
      // Predicated region
      $region41: #{soft_masked_bert_forward.15} parent=35 // pred_check
        %p479 = pneg %p131
      $region42: #{soft_masked_bert_forward.15} parent=35 // pred_check_branch
        %481 = sbr.rel (%p479) target = $region44
      $region43: #{soft_masked_bert_forward.15} parent=35 // pred_region
        _
      $region44: #{soft_masked_bert_forward.15} parent=35 // pred_fallthru
        _
      // Predicated region
      $region45: #{soft_masked_bert_forward.15} parent=35 // pred_check
        %p482 = pneg %p159
      $region46: #{soft_masked_bert_forward.15} parent=35 // pred_check_branch
        %484 = sbr.rel (%p482) target = $region48
      $region47: #{soft_masked_bert_forward.15} parent=35 // pred_region
        %s485 = ssub.s32 7, %s17
      $region48: #{soft_masked_bert_forward.15} parent=35 // pred_fallthru
        _
    $region36: #{soft_masked_bert_forward.15} parent=5 // pred_fallthru
      _
    %p486 = scmp.le.s32.totalorder 2, %s12
    // Predicated region
    $region49: #{soft_masked_bert_forward.15} parent=5 // pred_check
      %p487 = pneg %p486
    $region50: #{soft_masked_bert_forward.15} parent=5 // pred_check_branch
      %489 = sbr.rel (%p487) target = $region52
    $region51: #{soft_masked_bert_forward.15} parent=5 // pred_region
      %s490 = ssub.s32 %s12, 2
      // Predicated region
      $region53: #{soft_masked_bert_forward.15} parent=51 // pred_check
        %p491 = pneg %p137
      $region54: #{soft_masked_bert_forward.15} parent=51 // pred_check_branch
        %493 = sbr.rel (%p491) target = $region56
      $region55: #{soft_masked_bert_forward.15} parent=51 // pred_region
        %p494 = scmp.lt.s32.totalorder %s18, 7
        %s495 = scalar_select %p494, %s18, 7
        %s496 = smul.addr %s495, 2
        %s497 = scalar_lea.vmem %s4, %s496
      $region56: #{soft_masked_bert_forward.15} parent=51 // pred_fallthru
        _
      // Predicated region
      $region57: #{soft_masked_bert_forward.15} parent=51 // pred_check
        %p498 = pneg %p165
      $region58: #{soft_masked_bert_forward.15} parent=51 // pred_check_branch
        %500 = sbr.rel (%p498) target = $region60
      $region59: #{soft_masked_bert_forward.15} parent=51 // pred_region
        %s501 = ssub.s32 7, %s18
        %p502 = scmp.lt.s32.totalorder %s501, 7
        %s503 = scalar_select %p502, %s501, 7
        %s504 = smul.addr %s503, 2
        %s505 = scalar_lea.vmem %s5, %s504
      $region60: #{soft_masked_bert_forward.15} parent=51 // pred_fallthru
        _
    $region52: #{soft_masked_bert_forward.15} parent=5 // pred_fallthru
      _
  $region6: #{soft_masked_bert_forward.15} parent=0 // loop_footer
    %s16 = sadd.s32 1, %s12
  $region7: #{soft_masked_bert_forward.15} parent=0 // loop_footer_branch
    %11 = sbr.rel target = $region3
  $region8: #{soft_masked_bert_forward.15} parent=0 // loop_exit
    _

// kernel: soft_masked_bert_forward.16
$region0: #{soft_masked_bert_forward.16}
  #allocation0 [shape = 'u32[]', space=smem, size = 0x4, offset = 0x4, fixed_abs, tag = 'smem constant byte address 0x4 - core index']
  #allocation1 [shape = 'u32[144,128]{1,0:T(1,128)}', space=vmem, size = 0x12000, scoped, tag = 'internal scratch']
  %s0 = inlined_call_operand.vmem [shape: f32[16,32], index: 0, kind: input, shape index: {}]
  %s1 = inlined_call_operand.vmem [shape: bf16[32,3], index: 1, kind: input, shape index: {}]
  %s2 = inlined_call_operand.vmem [shape: f32[1,3], index: 2, kind: input, shape index: {}]
  %s3 = inlined_call_operand.vmem [shape: f32[16,32], index: 3, kind: input, shape index: {}]
  %s4 = inlined_call_operand.vmem [shape: f32[1,32], index: 4, kind: input, shape index: {}]
  %s5 = inlined_call_operand.vmem [shape: f32[16,2], index: 5, kind: output, shape index: {0}]
  %s6 = inlined_call_operand.vmem [shape: f32[16,32], index: 6, kind: output, shape index: {1}]
  %7 = xla_tuple %s5, %s6
  %s8 = sld [smem:[#allocation0]]
  $region61: #{soft_masked_bert_forward.16} parent=0
    _
  %s10 = ssub.s32 1, %s8
  %s11 = scalar_select 0, %s10, %s8
  loop: start=0, step=1, limit=4
  $region2: #{soft_masked_bert_forward.16} parent=0 // loop_pre_header
    _
  $region3: #{soft_masked_bert_forward.16} parent=0 // loop_header
    %s13 = sphi 0, %s17
    %p14 = scmp.ge.s32.totalorder %s13, 4
    %s23 = sphi 0, %s25
    %s26 = sphi 0, %s23
    %s27 = sphi 0, %s26
    %s43 = sphi 0, %s27
    %s47 = sphi 0, %s47
    %s49 = sphi 0, %s47
    %s50 = sphi 0, %s49
    %s64 = sphi 0, %s50
    %s68 = sphi 0, %s68
    %s70 = sphi 0, %s68
    %s71 = sphi 0, %s70
    %s85 = sphi 0, %s71
    %s91 = sphi 0, %s93
    %s94 = sphi 0, %s91
    %s95 = sphi 0, %s94
    %s111 = sphi 0, %s95
    %s115 = sphi 0, %s115
    %s117 = sphi 0, %s115
    %s118 = sphi 0, %s117
    %s132 = sphi 0, %s118
    %s138 = sphi 0, %s140
    %s141 = sphi 0, %s138
    %s142 = sphi 0, %s141
    %s158 = sphi 0, %s142
    %s164 = sphi 0, %s166
    %s167 = sphi 0, %s164
    %s168 = sphi 0, %s167
    %s184 = sphi 0, %s168
  $region4: #{soft_masked_bert_forward.16} parent=0 // loop_header_branch
    %16 = sbr.rel (%p14) target = $region8
  $region5: #{soft_masked_bert_forward.16} parent=0 // loop_body
    %s18 = ssub.s32 %s13, 1
    %s19 = ssub.s32 %s13, 2
    %s20 = sadd.s32 %s13, 1
    %s21 = ssub.s32 %s13, %s20
    %p22 = scmp.eq.s32.totalorder %s21, 0
    %s24 = sadd.s32 %s23, 1
    %s25 = scalar_select %p22, %s23, %s24
    %p28 = pneg %p22
    %p29 = scmp.eq.s32.totalorder %s13, 1
    %p30 = por %p28, %p29
    %p31 = scmp.ne.s32.totalorder %s23, %s26
    %p32 = scmp.eq.s32.totalorder %s13, 0
    %p33 = por %p31, %p32
    %p34 = scmp.ne.s32.totalorder %s23, %s26
    %p35 = scmp.eq.s32.totalorder %s18, 1
    %p36 = por %p34, %p35
    %p37 = scmp.ne.s32.totalorder %s26, %s27
    %p38 = scmp.eq.s32.totalorder %s18, 0
    %p39 = por %p37, %p38
    %p40 = scmp.ne.s32.totalorder %s26, %s27
    %p41 = scmp.eq.s32.totalorder %s19, 1
    %p42 = por %p40, %p41
    %p44 = scmp.ne.s32.totalorder %s27, %s43
    %p45 = scmp.eq.s32.totalorder %s19, 0
    %p46 = por %p44, %p45
    %s48 = sadd.s32 %s47, 1
    %p51 = scmp.eq.s32.totalorder %s13, 1
    %p52 = scmp.ne.s32.totalorder %s47, %s49
    %p53 = scmp.eq.s32.totalorder %s13, 0
    %p54 = por %p52, %p53
    %p55 = scmp.ne.s32.totalorder %s47, %s49
    %p56 = scmp.eq.s32.totalorder %s18, 1
    %p57 = por %p55, %p56
    %p58 = scmp.ne.s32.totalorder %s49, %s50
    %p59 = scmp.eq.s32.totalorder %s18, 0
    %p60 = por %p58, %p59
    %p61 = scmp.ne.s32.totalorder %s49, %s50
    %p62 = scmp.eq.s32.totalorder %s19, 1
    %p63 = por %p61, %p62
    %p65 = scmp.ne.s32.totalorder %s50, %s64
    %p66 = scmp.eq.s32.totalorder %s19, 0
    %p67 = por %p65, %p66
    %s69 = sadd.s32 %s68, 1
    %p72 = scmp.eq.s32.totalorder %s13, 1
    %p73 = scmp.ne.s32.totalorder %s68, %s70
    %p74 = scmp.eq.s32.totalorder %s13, 0
    %p75 = por %p73, %p74
    %p76 = scmp.ne.s32.totalorder %s68, %s70
    %p77 = scmp.eq.s32.totalorder %s18, 1
    %p78 = por %p76, %p77
    %p79 = scmp.ne.s32.totalorder %s70, %s71
    %p80 = scmp.eq.s32.totalorder %s18, 0
    %p81 = por %p79, %p80
    %p82 = scmp.ne.s32.totalorder %s70, %s71
    %p83 = scmp.eq.s32.totalorder %s19, 1
    %p84 = por %p82, %p83
    %p86 = scmp.ne.s32.totalorder %s71, %s85
    %p87 = scmp.eq.s32.totalorder %s19, 0
    %p88 = por %p86, %p87
    %s89 = ssub.s32 %s13, %s20
    %p90 = scmp.eq.s32.totalorder %s89, 0
    %s92 = sadd.s32 %s91, 1
    %s93 = scalar_select %p90, %s91, %s92
    %p96 = pneg %p90
    %p97 = scmp.eq.s32.totalorder %s13, 1
    %p98 = por %p96, %p97
    %p99 = scmp.ne.s32.totalorder %s91, %s94
    %p100 = scmp.eq.s32.totalorder %s13, 0
    %p101 = por %p99, %p100
    %p102 = scmp.ne.s32.totalorder %s91, %s94
    %p103 = scmp.eq.s32.totalorder %s18, 1
    %p104 = por %p102, %p103
    %p105 = scmp.ne.s32.totalorder %s94, %s95
    %p106 = scmp.eq.s32.totalorder %s18, 0
    %p107 = por %p105, %p106
    %p108 = scmp.ne.s32.totalorder %s94, %s95
    %p109 = scmp.eq.s32.totalorder %s19, 1
    %p110 = por %p108, %p109
    %p112 = scmp.ne.s32.totalorder %s95, %s111
    %p113 = scmp.eq.s32.totalorder %s19, 0
    %p114 = por %p112, %p113
    %s116 = sadd.s32 %s115, 1
    %p119 = scmp.eq.s32.totalorder %s13, 1
    %p120 = scmp.ne.s32.totalorder %s115, %s117
    %p121 = scmp.eq.s32.totalorder %s13, 0
    %p122 = por %p120, %p121
    %p123 = scmp.ne.s32.totalorder %s115, %s117
    %p124 = scmp.eq.s32.totalorder %s18, 1
    %p125 = por %p123, %p124
    %p126 = scmp.ne.s32.totalorder %s117, %s118
    %p127 = scmp.eq.s32.totalorder %s18, 0
    %p128 = por %p126, %p127
    %p129 = scmp.ne.s32.totalorder %s117, %s118
    %p130 = scmp.eq.s32.totalorder %s19, 1
    %p131 = por %p129, %p130
    %p133 = scmp.ne.s32.totalorder %s118, %s132
    %p134 = scmp.eq.s32.totalorder %s19, 0
    %p135 = por %p133, %p134
    %s136 = ssub.s32 %s13, %s20
    %p137 = scmp.eq.s32.totalorder %s136, 0
    %s139 = sadd.s32 %s138, 1
    %s140 = scalar_select %p137, %s138, %s139
    %p143 = pneg %p137
    %p144 = scmp.eq.s32.totalorder %s13, 1
    %p145 = por %p143, %p144
    %p146 = scmp.ne.s32.totalorder %s138, %s141
    %p147 = scmp.eq.s32.totalorder %s13, 0
    %p148 = por %p146, %p147
    %p149 = scmp.ne.s32.totalorder %s138, %s141
    %p150 = scmp.eq.s32.totalorder %s18, 1
    %p151 = por %p149, %p150
    %p152 = scmp.ne.s32.totalorder %s141, %s142
    %p153 = scmp.eq.s32.totalorder %s18, 0
    %p154 = por %p152, %p153
    %p155 = scmp.ne.s32.totalorder %s141, %s142
    %p156 = scmp.eq.s32.totalorder %s19, 1
    %p157 = por %p155, %p156
    %p159 = scmp.ne.s32.totalorder %s142, %s158
    %p160 = scmp.eq.s32.totalorder %s19, 0
    %p161 = por %p159, %p160
    %s162 = ssub.s32 %s13, %s20
    %p163 = scmp.eq.s32.totalorder %s162, 0
    %s165 = sadd.s32 %s164, 1
    %s166 = scalar_select %p163, %s164, %s165
    %p169 = pneg %p163
    %p170 = scmp.eq.s32.totalorder %s13, 1
    %p171 = por %p169, %p170
    %p172 = scmp.ne.s32.totalorder %s164, %s167
    %p173 = scmp.eq.s32.totalorder %s13, 0
    %p174 = por %p172, %p173
    %p175 = scmp.ne.s32.totalorder %s164, %s167
    %p176 = scmp.eq.s32.totalorder %s18, 1
    %p177 = por %p175, %p176
    %p178 = scmp.ne.s32.totalorder %s167, %s168
    %p179 = scmp.eq.s32.totalorder %s18, 0
    %p180 = por %p178, %p179
    %p181 = scmp.ne.s32.totalorder %s167, %s168
    %p182 = scmp.eq.s32.totalorder %s19, 1
    %p183 = por %p181, %p182
    %p185 = scmp.ne.s32.totalorder %s168, %s184
    %p186 = scmp.eq.s32.totalorder %s19, 0
    %p187 = por %p185, %p186
    %p188 = scmp.le.s32.totalorder 1, %s13
    %p189 = scmp.lt.s32.totalorder %s13, 3
    %p190 = pnand %p188, %p189
    %p191 = pneg %p190
    // Predicated region
    $region9: #{soft_masked_bert_forward.16} parent=5 // pred_check
      _
    $region10: #{soft_masked_bert_forward.16} parent=5 // pred_check_branch
      %193 = sbr.rel (%p190) target = $region12
    $region11: #{soft_masked_bert_forward.16} parent=5 // pred_region
      %s194 = ssub.s32 %s13, 1
      // Predicated region
      $region13: #{soft_masked_bert_forward.16} parent=11 // pred_check
        %p195 = pneg %p60
      $region14: #{soft_masked_bert_forward.16} parent=11 // pred_check_branch
        %197 = sbr.rel (%p195) target = $region16
      $region15: #{soft_masked_bert_forward.16} parent=11 // pred_region
        _
      $region16: #{soft_masked_bert_forward.16} parent=11 // pred_fallthru
        _
      // Predicated region
      $region17: #{soft_masked_bert_forward.16} parent=11 // pred_check
        %p198 = pneg %p81
      $region18: #{soft_masked_bert_forward.16} parent=11 // pred_check_branch
        %200 = sbr.rel (%p198) target = $region20
      $region19: #{soft_masked_bert_forward.16} parent=11 // pred_region
        _
      $region20: #{soft_masked_bert_forward.16} parent=11 // pred_fallthru
        _
      // Predicated region
      $region21: #{soft_masked_bert_forward.16} parent=11 // pred_check
        %p201 = pneg %p128
      $region22: #{soft_masked_bert_forward.16} parent=11 // pred_check_branch
        %203 = sbr.rel (%p201) target = $region24
      $region23: #{soft_masked_bert_forward.16} parent=11 // pred_region
        _
      $region24: #{soft_masked_bert_forward.16} parent=11 // pred_fallthru
        _
    $region12: #{soft_masked_bert_forward.16} parent=5 // pred_fallthru
      _
    %p204 = scmp.lt.s32.totalorder %s13, 2
    // Predicated region
    $region25: #{soft_masked_bert_forward.16} parent=5 // pred_check
      %p205 = pneg %p204
    $region26: #{soft_masked_bert_forward.16} parent=5 // pred_check_branch
      %207 = sbr.rel (%p205) target = $region28
    $region27: #{soft_masked_bert_forward.16} parent=5 // pred_region
      // Predicated region
      $region29: #{soft_masked_bert_forward.16} parent=27 // pred_check
        %p208 = pneg %p33
      $region30: #{soft_masked_bert_forward.16} parent=27 // pred_check_branch
        %210 = sbr.rel (%p208) target = $region32
      $region31: #{soft_masked_bert_forward.16} parent=27 // pred_region
        %p211 = scmp.lt.s32.totalorder %s13, 1
        %s212 = scalar_select %p211, %s13, 1
        %s213 = smul.addr %s212, 8
        %s214 = scalar_lea.vmem %s0, %s213
      $region32: #{soft_masked_bert_forward.16} parent=27 // pred_fallthru
        _
      // Predicated region
      $region33: #{soft_masked_bert_forward.16} parent=27 // pred_check
        %p215 = pneg %p101
      $region34: #{soft_masked_bert_forward.16} parent=27 // pred_check_branch
        %217 = sbr.rel (%p215) target = $region36
      $region35: #{soft_masked_bert_forward.16} parent=27 // pred_region
        %p218 = scmp.lt.s32.totalorder %s13, 1
        %s219 = scalar_select %p218, %s13, 1
        %s220 = smul.addr %s219, 8
        %s221 = scalar_lea.vmem %s3, %s220
      $region36: #{soft_masked_bert_forward.16} parent=27 // pred_fallthru
        _
    $region28: #{soft_masked_bert_forward.16} parent=5 // pred_fallthru
      _
    %p222 = scmp.le.s32.totalorder 1, %s13
    %p223 = scmp.lt.s32.totalorder %s13, 3
    %p224 = pnand %p222, %p223
    %p225 = pneg %p224
    // Predicated region
    $region37: #{soft_masked_bert_forward.16} parent=5 // pred_check
      _
    $region38: #{soft_masked_bert_forward.16} parent=5 // pred_check_branch
      %227 = sbr.rel (%p224) target = $region40
    $region39: #{soft_masked_bert_forward.16} parent=5 // pred_region
      %s228 = ssub.s32 %s13, 1
      %p229 = scmp.lt.s32.totalorder %s18, 1
      %s230 = scalar_select %p229, %s18, 1
      %s231 = smul.addr %s230, 8
      %s232 = scalar_lea.vmem %s0, %s231
      %p233 = pneg %p39
      %p234 = pneg %p36
      %p235 = pneg %p60
      %p236 = pneg %p57
      %p237 = pneg %p81
      %p238 = pneg %p78
      %p239 = scmp.lt.s32.totalorder %s18, 1
      %s240 = scalar_select %p239, %s18, 1
      %s241 = smul.addr %s240, 8
      %s242 = scalar_lea.vmem %s3, %s241
      %p243 = pneg %p107
      %p244 = pneg %p104
      %p245 = pneg %p128
      %p246 = pneg %p125
      %p247 = pneg %p154
      %p248 = pneg %p151
      %p249 = scmp.lt.s32.totalorder %s18, 1
      %s250 = scalar_select %p249, %s18, 1
      %s251 = smul.addr %s250, 8
      %s252 = scalar_lea.vmem %s5, %s251
      %p253 = pneg %p180
      %p254 = pneg %p177
      %p255 = scmp.lt.s32.totalorder %s18, 1
      %s256 = scalar_select %p255, %s18, 1
      %s257 = smul.addr %s256, 8
      %s258 = scalar_lea.vmem %s6, %s257
      %p259 = scmp.lt.s32.totalorder %s18, 1
      %s260 = scalar_select %p259, %s18, 1
      %s261 = smul.addr %s260, 8
      %s262 = scalar_lea.vmem %s0, %s261
      %p263 = scmp.lt.s32.totalorder %s18, 1
      %s264 = scalar_select %p263, %s18, 1
      %s265 = smul.addr %s264, 8
      %s266 = scalar_lea.vmem %s3, %s265
      %p267 = scmp.lt.s32.totalorder %s18, 1
      %s268 = scalar_select %p267, %s18, 1
      %s269 = smul.addr %s268, 8
      %s270 = scalar_lea.vmem %s5, %s269
      %p271 = scmp.lt.s32.totalorder %s18, 1
      %s272 = scalar_select %p271, %s18, 1
      %s273 = smul.addr %s272, 8
      %s274 = scalar_lea.vmem %s6, %s273
      %v276 = vld [vmem:[%s262] sm:$0xff]
      %v277 = vpack.c.bf16 %v276, %v276
      %v278 = vld [vmem:[%s1] sm:$0xf]
      %v279 = vld [vmem:[%s1 + $0x4] sm:$0xf]
      %v280 = vld [vmem:[%s1 + $0x8] sm:$0xf]
      %v281 = vld [vmem:[%s1 + $0xc] sm:$0xf]
      %v282 = vld [vmem:[%s2] sm:$0x1]
      %v284 = vlaneseq
      %v285 = vshrl.u32 %v284, 7
      %v286 = vsub.s32 0, %v285
      %v287 = vrot.slane %v282, %v286
      %v293 = vunpack.c.l.b16 %v278
      %v294 = vunpack.c.l.b16 %v279
      %v295 = vunpack.c.l.b16 %v280
      %v296 = vunpack.c.l.b16 %v281
      %v297 = vpack.c.b16 %v294, %v293
      %v298 = vpack.c.b16 %v296, %v295
      %vm301 = vcmask 261120
      %v303 = vsel %vm301, %v277, 0
      %305 = vmatprep.subr.bf16.mxu0 0
      %306 = vmatpush1.bf16.msra.mxu0 %v297
      %307 = vmatprep.subr.bf16.mxu0 0
      %308 = vmatpush1.bf16.msra.mxu0 %v298
      %309 = vmatprep.subr.bf16.mxu0 0
      %310 = vmatpush1.bf16.msra.mxu0 0
      %311 = vmatprep.subr.bf16.mxu0 0
      %312 = vmatpush1.bf16.msra.mxu0 0
      %313 = vmatprep.subr.bf16.mxu0 0
      %314 = vmatpush1.bf16.msra.mxu0 0
      %315 = vmatprep.subr.bf16.mxu0 0
      %316 = vmatpush1.bf16.msra.mxu0 0
      %317 = vmatprep.subr.bf16.mxu0 0
      %318 = vmatpush1.bf16.msra.mxu0 0
      %319 = vmatprep.subr.bf16.mxu0 0
      %320 = vmatpush1.bf16.msra.mxu0 0
      %321 = vmatprep.subr.bf16.mxu0 0
      %322 = vmatpush1.bf16.msra.mxu0 0
      %323 = vmatprep.subr.bf16.mxu0 0
      %324 = vmatpush1.bf16.msra.mxu0 0
      %325 = vmatprep.subr.bf16.mxu0 0
      %326 = vmatpush1.bf16.msra.mxu0 0
      %327 = vmatprep.subr.bf16.mxu0 0
      %328 = vmatpush1.bf16.msra.mxu0 0
      %329 = vmatprep.subr.bf16.mxu0 0
      %330 = vmatpush1.bf16.msra.mxu0 0
      %331 = vmatprep.subr.bf16.mxu0 0
      %332 = vmatpush1.bf16.msra.mxu0 0
      %333 = vmatprep.subr.bf16.mxu0 0
      %334 = vmatpush1.bf16.msra.mxu0 0
      %335 = vmatprep.subr.bf16.mxu0 0
      %336 = vmatpush1.bf16.msra.mxu0 0
      %337 = vmatprep.mubr.bf16.mxu0 0
      %338 = vmatmul.mubr.bf16.gmra.mrb[0].mxu0 %v303
      %v339 = vpop.f32.mrb[0].mxu0
      %v340 = vadd.f32 %v287, %v339
      %v341 = vpop.f32.mrb[0].mxu0
      %v342 = vpop.f32.mrb[0].mxu0
      %v343 = vpop.f32.mrb[0].mxu0
      %344 = vdwg.mxu0
      %vm345 = vcmask 15360
      %346 = vst.msk [vmem:[%s270] sm:$0xff] %vm345, %v340
      %v347 = vxor.u32 %v340, 2147483648
      %v348 = vmul.f32 %v347, 1.442695
      %v349 = vpow.pop %v348
      %v350 = vadd.f32 %v349, 1.0
      %v351 = vrcp.pop %v350
      %v352 = vmul.f32 1.0, %v351
      %v353 = vld [vmem:[%s4] sm:$0x1]
      %355 = vset.pattern.permute.xlu0 2
      %356 = vperm.xlu0 %355, %v352
      %v357 = vpop.permute.xlu0 %356
      %v360 = vlaneseq
      %v361 = vshrl.u32 %v360, 7
      %v362 = vsub.s32 0, %v361
      %v363 = vrot.slane %v353, %v362
      %v365 = vmul.f32 %v357, %v363
      %v366 = vsub.f32 1.0, %v352
      %v367 = vld [vmem:[%s266] sm:$0xff]
      %369 = vset.pattern.permute.xlu0 2
      %370 = vperm.xlu0 %369, %v366
      %v371 = vpop.permute.xlu0 %370
      %v373 = vmul.f32 %v371, %v367
      %v374 = vadd.f32 %v365, %v373
      %375 = vst.msk [vmem:[%s274] sm:$0xff] %vm301, %v374
      %p376 = scmp.lt.s32.totalorder %s18, 1
      %s377 = scalar_select %p376, %s18, 1
      %s378 = smul.addr %s377, 8
      %s379 = scalar_lea.vmem %s5, %s378
      %p380 = scmp.lt.s32.totalorder %s18, 1
      %s381 = scalar_select %p380, %s18, 1
      %s382 = smul.addr %s381, 8
      %s383 = scalar_lea.vmem %s6, %s382
      // Predicated region
      $region41: #{soft_masked_bert_forward.16} parent=39 // pred_check
        %p384 = pneg %p151
      $region42: #{soft_masked_bert_forward.16} parent=39 // pred_check_branch
        %386 = sbr.rel (%p384) target = $region44
      $region43: #{soft_masked_bert_forward.16} parent=39 // pred_region
        _
      $region44: #{soft_masked_bert_forward.16} parent=39 // pred_fallthru
        _
      // Predicated region
      $region45: #{soft_masked_bert_forward.16} parent=39 // pred_check
        %p387 = pneg %p177
      $region46: #{soft_masked_bert_forward.16} parent=39 // pred_check_branch
        %389 = sbr.rel (%p387) target = $region48
      $region47: #{soft_masked_bert_forward.16} parent=39 // pred_region
        _
      $region48: #{soft_masked_bert_forward.16} parent=39 // pred_fallthru
        _
    $region40: #{soft_masked_bert_forward.16} parent=5 // pred_fallthru
      _
    %p390 = scmp.le.s32.totalorder 2, %s13
    // Predicated region
    $region49: #{soft_masked_bert_forward.16} parent=5 // pred_check
      %p391 = pneg %p390
    $region50: #{soft_masked_bert_forward.16} parent=5 // pred_check_branch
      %393 = sbr.rel (%p391) target = $region52
    $region51: #{soft_masked_bert_forward.16} parent=5 // pred_region
      %s394 = ssub.s32 %s13, 2
      // Predicated region
      $region53: #{soft_masked_bert_forward.16} parent=51 // pred_check
        %p395 = pneg %p157
      $region54: #{soft_masked_bert_forward.16} parent=51 // pred_check_branch
        %397 = sbr.rel (%p395) target = $region56
      $region55: #{soft_masked_bert_forward.16} parent=51 // pred_region
        %p398 = scmp.lt.s32.totalorder %s19, 1
        %s399 = scalar_select %p398, %s19, 1
        %s400 = smul.addr %s399, 8
        %s401 = scalar_lea.vmem %s5, %s400
      $region56: #{soft_masked_bert_forward.16} parent=51 // pred_fallthru
        _
      // Predicated region
      $region57: #{soft_masked_bert_forward.16} parent=51 // pred_check
        %p402 = pneg %p183
      $region58: #{soft_masked_bert_forward.16} parent=51 // pred_check_branch
        %404 = sbr.rel (%p402) target = $region60
      $region59: #{soft_masked_bert_forward.16} parent=51 // pred_region
        %p405 = scmp.lt.s32.totalorder %s19, 1
        %s406 = scalar_select %p405, %s19, 1
        %s407 = smul.addr %s406, 8
        %s408 = scalar_lea.vmem %s6, %s407
      $region60: #{soft_masked_bert_forward.16} parent=51 // pred_fallthru
        _
    $region52: #{soft_masked_bert_forward.16} parent=5 // pred_fallthru
      _
  $region6: #{soft_masked_bert_forward.16} parent=0 // loop_footer
    %s17 = sadd.s32 1, %s13
  $region7: #{soft_masked_bert_forward.16} parent=0 // loop_footer_branch
    %12 = sbr.rel target = $region3
  $region8: #{soft_masked_bert_forward.16} parent=0 // loop_exit
    _

// kernel: soft_masked_bert_forward.25
$region0: #{soft_masked_bert_forward.25}
  #allocation0 [shape = 'u32[]', space=smem, size = 0x4, offset = 0x4, fixed_abs, tag = 'smem constant byte address 0x4 - core index']
  #allocation1 [shape = 'u32[144,128]{1,0:T(1,128)}', space=vmem, size = 0x12000, scoped, tag = 'internal scratch']
  %s0 = inlined_call_operand.vmem [shape: f32[16,32], index: 0, kind: input, shape index: {}]
  %s1 = inlined_call_operand.vmem [shape: f32[16,32], index: 1, kind: input, shape index: {}]
  %s2 = inlined_call_operand.vmem [shape: bf16[32,128], index: 2, kind: input, shape index: {}]
  %s3 = inlined_call_operand.vmem [shape: f32[1,128], index: 3, kind: input, shape index: {}]
  %s4 = inlined_call_operand.hbm [shape: f32[16,128], index: 4, kind: output, shape index: {}]
  %s5 = sld [smem:[#allocation0]]
  $region49: #{soft_masked_bert_forward.25} parent=0
    _
  %s7 = ssub.s32 1, %s5
  %s8 = scalar_select 0, %s7, %s5
  $region1: #{soft_masked_bert_forward.25} parent=0
    #allocation2 [shape = 'u8[8192]{0}', space=vmem, size = 0x2000, scoped, tag = 'output window, operand 0']
    #allocation3 [shape = 's32[2]{0}', space=sflag, size = 0x8, scoped, tag = 'scoped memory for soft_masked_bert_forward.25']
    %9 = vsyncpa [#allocation3], 0
    %s10 = scalar_lea.sflag [#allocation3], 1
    %11 = vsyncpa %s10, 0
    loop: start=0, step=1, limit=4
    $region2: #{soft_masked_bert_forward.25} parent=1 // loop_pre_header
      _
    $region3: #{soft_masked_bert_forward.25} parent=1 // loop_header
      %s13 = sphi 0, %s17
      %p14 = scmp.ge.s32.totalorder %s13, 4
      %s23 = sphi 0, %s25
      %s26 = sphi 0, %s23
      %s27 = sphi 0, %s26
      %s43 = sphi 0, %s27
      %s49 = sphi 0, %s51
      %s52 = sphi 0, %s49
      %s53 = sphi 0, %s52
      %s69 = sphi 0, %s53
      %s73 = sphi 0, %s73
      %s75 = sphi 0, %s73
      %s76 = sphi 0, %s75
      %s90 = sphi 0, %s76
      %s94 = sphi 0, %s94
      %s96 = sphi 0, %s94
      %s97 = sphi 0, %s96
      %s111 = sphi 0, %s97
      %s117 = sphi 0, %s119
      %s120 = sphi 0, %s117
      %s121 = sphi 0, %s120
      %s137 = sphi 0, %s121
    $region4: #{soft_masked_bert_forward.25} parent=1 // loop_header_branch
      %16 = sbr.rel (%p14) target = $region8
    $region5: #{soft_masked_bert_forward.25} parent=1 // loop_body
      %s18 = ssub.s32 %s13, 1
      %s19 = ssub.s32 %s13, 2
      %s20 = sadd.s32 %s13, 1
      %s21 = ssub.s32 %s13, %s20
      %p22 = scmp.eq.s32.totalorder %s21, 0
      %s24 = sadd.s32 %s23, 1
      %s25 = scalar_select %p22, %s23, %s24
      %p28 = pneg %p22
      %p29 = scmp.eq.s32.totalorder %s13, 1
      %p30 = por %p28, %p29
      %p31 = scmp.ne.s32.totalorder %s23, %s26
      %p32 = scmp.eq.s32.totalorder %s13, 0
      %p33 = por %p31, %p32
      %p34 = scmp.ne.s32.totalorder %s23, %s26
      %p35 = scmp.eq.s32.totalorder %s18, 1
      %p36 = por %p34, %p35
      %p37 = scmp.ne.s32.totalorder %s26, %s27
      %p38 = scmp.eq.s32.totalorder %s18, 0
      %p39 = por %p37, %p38
      %p40 = scmp.ne.s32.totalorder %s26, %s27
      %p41 = scmp.eq.s32.totalorder %s19, 1
      %p42 = por %p40, %p41
      %p44 = scmp.ne.s32.totalorder %s27, %s43
      %p45 = scmp.eq.s32.totalorder %s19, 0
      %p46 = por %p44, %p45
      %s47 = ssub.s32 %s13, %s20
      %p48 = scmp.eq.s32.totalorder %s47, 0
      %s50 = sadd.s32 %s49, 1
      %s51 = scalar_select %p48, %s49, %s50
      %p54 = pneg %p48
      %p55 = scmp.eq.s32.totalorder %s13, 1
      %p56 = por %p54, %p55
      %p57 = scmp.ne.s32.totalorder %s49, %s52
      %p58 = scmp.eq.s32.totalorder %s13, 0
      %p59 = por %p57, %p58
      %p60 = scmp.ne.s32.totalorder %s49, %s52
      %p61 = scmp.eq.s32.totalorder %s18, 1
      %p62 = por %p60, %p61
      %p63 = scmp.ne.s32.totalorder %s52, %s53
      %p64 = scmp.eq.s32.totalorder %s18, 0
      %p65 = por %p63, %p64
      %p66 = scmp.ne.s32.totalorder %s52, %s53
      %p67 = scmp.eq.s32.totalorder %s19, 1
      %p68 = por %p66, %p67
      %p70 = scmp.ne.s32.totalorder %s53, %s69
      %p71 = scmp.eq.s32.totalorder %s19, 0
      %p72 = por %p70, %p71
      %s74 = sadd.s32 %s73, 1
      %p77 = scmp.eq.s32.totalorder %s13, 1
      %p78 = scmp.ne.s32.totalorder %s73, %s75
      %p79 = scmp.eq.s32.totalorder %s13, 0
      %p80 = por %p78, %p79
      %p81 = scmp.ne.s32.totalorder %s73, %s75
      %p82 = scmp.eq.s32.totalorder %s18, 1
      %p83 = por %p81, %p82
      %p84 = scmp.ne.s32.totalorder %s75, %s76
      %p85 = scmp.eq.s32.totalorder %s18, 0
      %p86 = por %p84, %p85
      %p87 = scmp.ne.s32.totalorder %s75, %s76
      %p88 = scmp.eq.s32.totalorder %s19, 1
      %p89 = por %p87, %p88
      %p91 = scmp.ne.s32.totalorder %s76, %s90
      %p92 = scmp.eq.s32.totalorder %s19, 0
      %p93 = por %p91, %p92
      %s95 = sadd.s32 %s94, 1
      %p98 = scmp.eq.s32.totalorder %s13, 1
      %p99 = scmp.ne.s32.totalorder %s94, %s96
      %p100 = scmp.eq.s32.totalorder %s13, 0
      %p101 = por %p99, %p100
      %p102 = scmp.ne.s32.totalorder %s94, %s96
      %p103 = scmp.eq.s32.totalorder %s18, 1
      %p104 = por %p102, %p103
      %p105 = scmp.ne.s32.totalorder %s96, %s97
      %p106 = scmp.eq.s32.totalorder %s18, 0
      %p107 = por %p105, %p106
      %p108 = scmp.ne.s32.totalorder %s96, %s97
      %p109 = scmp.eq.s32.totalorder %s19, 1
      %p110 = por %p108, %p109
      %p112 = scmp.ne.s32.totalorder %s97, %s111
      %p113 = scmp.eq.s32.totalorder %s19, 0
      %p114 = por %p112, %p113
      %s115 = ssub.s32 %s13, %s20
      %p116 = scmp.eq.s32.totalorder %s115, 0
      %s118 = sadd.s32 %s117, 1
      %s119 = scalar_select %p116, %s117, %s118
      %p122 = pneg %p116
      %p123 = scmp.eq.s32.totalorder %s13, 1
      %p124 = por %p122, %p123
      %p125 = scmp.ne.s32.totalorder %s117, %s120
      %p126 = scmp.eq.s32.totalorder %s13, 0
      %p127 = por %p125, %p126
      %p128 = scmp.ne.s32.totalorder %s117, %s120
      %p129 = scmp.eq.s32.totalorder %s18, 1
      %p130 = por %p128, %p129
      %p131 = scmp.ne.s32.totalorder %s120, %s121
      %p132 = scmp.eq.s32.totalorder %s18, 0
      %p133 = por %p131, %p132
      %p134 = scmp.ne.s32.totalorder %s120, %s121
      %p135 = scmp.eq.s32.totalorder %s19, 1
      %p136 = por %p134, %p135
      %p138 = scmp.ne.s32.totalorder %s121, %s137
      %p139 = scmp.eq.s32.totalorder %s19, 0
      %p140 = por %p138, %p139
      %p141 = scmp.le.s32.totalorder 1, %s13
      %p142 = scmp.lt.s32.totalorder %s13, 3
      %p143 = pnand %p141, %p142
      %p144 = pneg %p143
      // Predicated region
      $region9: #{soft_masked_bert_forward.25} parent=5 // pred_check
        _
      $region10: #{soft_masked_bert_forward.25} parent=5 // pred_check_branch
        %146 = sbr.rel (%p143) target = $region12
      $region11: #{soft_masked_bert_forward.25} parent=5 // pred_region
        %s147 = ssub.s32 %s13, 1
        // Predicated region
        $region13: #{soft_masked_bert_forward.25} parent=11 // pred_check
          %p148 = pneg %p86
        $region14: #{soft_masked_bert_forward.25} parent=11 // pred_check_branch
          %150 = sbr.rel (%p148) target = $region16
        $region15: #{soft_masked_bert_forward.25} parent=11 // pred_region
          _
        $region16: #{soft_masked_bert_forward.25} parent=11 // pred_fallthru
          _
        // Predicated region
        $region17: #{soft_masked_bert_forward.25} parent=11 // pred_check
          %p151 = pneg %p107
        $region18: #{soft_masked_bert_forward.25} parent=11 // pred_check_branch
          %153 = sbr.rel (%p151) target = $region20
        $region19: #{soft_masked_bert_forward.25} parent=11 // pred_region
          _
        $region20: #{soft_masked_bert_forward.25} parent=11 // pred_fallthru
          _
      $region12: #{soft_masked_bert_forward.25} parent=5 // pred_fallthru
        _
      %p154 = scmp.lt.s32.totalorder %s13, 2
      // Predicated region
      $region21: #{soft_masked_bert_forward.25} parent=5 // pred_check
        %p155 = pneg %p154
      $region22: #{soft_masked_bert_forward.25} parent=5 // pred_check_branch
        %157 = sbr.rel (%p155) target = $region24
      $region23: #{soft_masked_bert_forward.25} parent=5 // pred_region
        // Predicated region
        $region25: #{soft_masked_bert_forward.25} parent=23 // pred_check
          %p158 = pneg %p33
        $region26: #{soft_masked_bert_forward.25} parent=23 // pred_check_branch
          %160 = sbr.rel (%p158) target = $region28
        $region27: #{soft_masked_bert_forward.25} parent=23 // pred_region
          %p161 = scmp.lt.s32.totalorder %s13, 1
          %s162 = scalar_select %p161, %s13, 1
          %s163 = smul.addr %s162, 8
          %s164 = scalar_lea.vmem %s0, %s163
        $region28: #{soft_masked_bert_forward.25} parent=23 // pred_fallthru
          _
        // Predicated region
        $region29: #{soft_masked_bert_forward.25} parent=23 // pred_check
          %p165 = pneg %p59
        $region30: #{soft_masked_bert_forward.25} parent=23 // pred_check_branch
          %167 = sbr.rel (%p165) target = $region32
        $region31: #{soft_masked_bert_forward.25} parent=23 // pred_region
          %p168 = scmp.lt.s32.totalorder %s13, 1
          %s169 = scalar_select %p168, %s13, 1
          %s170 = smul.addr %s169, 8
          %s171 = scalar_lea.vmem %s1, %s170
        $region32: #{soft_masked_bert_forward.25} parent=23 // pred_fallthru
          _
      $region24: #{soft_masked_bert_forward.25} parent=5 // pred_fallthru
        _
      %p172 = scmp.le.s32.totalorder 1, %s13
      %p173 = scmp.lt.s32.totalorder %s13, 3
      %p174 = pnand %p172, %p173
      %p175 = pneg %p174
      // Predicated region
      $region33: #{soft_masked_bert_forward.25} parent=5 // pred_check
        _
      $region34: #{soft_masked_bert_forward.25} parent=5 // pred_check_branch
        %177 = sbr.rel (%p174) target = $region36
      $region35: #{soft_masked_bert_forward.25} parent=5 // pred_region
        %s178 = ssub.s32 %s13, 1
        %p179 = scmp.lt.s32.totalorder %s18, 1
        %s180 = scalar_select %p179, %s18, 1
        %s181 = smul.addr %s180, 8
        %s182 = scalar_lea.vmem %s0, %s181
        %p183 = pneg %p39
        %p184 = pneg %p36
        %p185 = scmp.lt.s32.totalorder %s18, 1
        %s186 = scalar_select %p185, %s18, 1
        %s187 = smul.addr %s186, 8
        %s188 = scalar_lea.vmem %s1, %s187
        %p189 = pneg %p65
        %p190 = pneg %p62
        %p191 = pneg %p86
        %p192 = pneg %p83
        %p193 = pneg %p107
        %p194 = pneg %p104
        %p195 = pneg %p133
        %p196 = pneg %p130
        %s197 = sand.u32 %s120, 1
        %s198 = scalar_lea.sflag [#allocation3], %s197
        %s199 = sand.u32 %s120, 1
        %s200 = smul.addr %s199, 8
        %s201 = scalar_lea.vmem [#allocation2], %s200
        %p202 = scmp.lt.s32.totalorder %s18, 1
        %s203 = scalar_select %p202, %s18, 1
        %s204 = smul.addr %s203, 8
        %s205 = scalar_lea.vmem %s0, %s204
        %p206 = scmp.lt.s32.totalorder %s18, 1
        %s207 = scalar_select %p206, %s18, 1
        %s208 = smul.addr %s207, 8
        %s209 = scalar_lea.vmem %s1, %s208
        %v211 = vld [vmem:[%s205] sm:$0xff]
        %v212 = vld [vmem:[%s209] sm:$0xff]
        %v213 = vadd.f32 %v211, %v212
        %v214 = vpack.c.bf16 %v213, %v213
        %v215 = vld [vmem:[%s2] sm:$0xf]
        %v216 = vld [vmem:[%s2 + $0x4] sm:$0xf]
        %v217 = vld [vmem:[%s2 + $0x8] sm:$0xf]
        %v218 = vld [vmem:[%s2 + $0xc] sm:$0xf]
        %v219 = vld [vmem:[%s3] sm:$0x1]
        %v221 = vlaneseq
        %v222 = vshrl.u32 %v221, 7
        %v223 = vsub.s32 0, %v222
        %v224 = vrot.slane %v219, %v223
        %v230 = vunpack.c.l.b16 %v215
        %v231 = vunpack.c.l.b16 %v216
        %v232 = vunpack.c.l.b16 %v217
        %v233 = vunpack.c.l.b16 %v218
        %v234 = vpack.c.b16 %v231, %v230
        %v235 = vpack.c.b16 %v233, %v232
        %vm238 = vcmask 261120
        %v240 = vsel %vm238, %v214, 0
        %242 = vmatprep.subr.bf16.mxu0 0
        %243 = vmatpush1.bf16.msra.mxu0 %v234
        %244 = vmatprep.subr.bf16.mxu0 0
        %245 = vmatpush1.bf16.msra.mxu0 %v235
        %246 = vmatprep.subr.bf16.mxu0 0
        %247 = vmatpush1.bf16.msra.mxu0 0
        %248 = vmatprep.subr.bf16.mxu0 0
        %249 = vmatpush1.bf16.msra.mxu0 0
        %250 = vmatprep.subr.bf16.mxu0 0
        %251 = vmatpush1.bf16.msra.mxu0 0
        %252 = vmatprep.subr.bf16.mxu0 0
        %253 = vmatpush1.bf16.msra.mxu0 0
        %254 = vmatprep.subr.bf16.mxu0 0
        %255 = vmatpush1.bf16.msra.mxu0 0
        %256 = vmatprep.subr.bf16.mxu0 0
        %257 = vmatpush1.bf16.msra.mxu0 0
        %258 = vmatprep.subr.bf16.mxu0 0
        %259 = vmatpush1.bf16.msra.mxu0 0
        %260 = vmatprep.subr.bf16.mxu0 0
        %261 = vmatpush1.bf16.msra.mxu0 0
        %262 = vmatprep.subr.bf16.mxu0 0
        %263 = vmatpush1.bf16.msra.mxu0 0
        %264 = vmatprep.subr.bf16.mxu0 0
        %265 = vmatpush1.bf16.msra.mxu0 0
        %266 = vmatprep.subr.bf16.mxu0 0
        %267 = vmatpush1.bf16.msra.mxu0 0
        %268 = vmatprep.subr.bf16.mxu0 0
        %269 = vmatpush1.bf16.msra.mxu0 0
        %270 = vmatprep.subr.bf16.mxu0 0
        %271 = vmatpush1.bf16.msra.mxu0 0
        %272 = vmatprep.subr.bf16.mxu0 0
        %273 = vmatpush1.bf16.msra.mxu0 0
        %274 = vmatprep.mubr.bf16.mxu0 0
        %275 = vmatmul.mubr.bf16.gmra.mrb[0].mxu0 %v240
        %v276 = vpop.f32.mrb[0].mxu0
        %v277 = vadd.f32 %v224, %v276
        %v278 = vpop.f32.mrb[0].mxu0
        %v279 = vpop.f32.mrb[0].mxu0
        %v280 = vpop.f32.mrb[0].mxu0
        %281 = vdwg.mxu0
        %282 = vst [vmem:[%s201] sm:$0xff] %v277
        %s283 = sand.u32 %s120, 1
        %s284 = scalar_lea.sflag [#allocation3], %s283
        %s285 = sand.u32 %s120, 1
        %s286 = smul.addr %s285, 8
        %s287 = scalar_lea.vmem [#allocation2], %s286
        // Predicated region
        $region37: #{soft_masked_bert_forward.25} parent=35 // pred_check
          %p288 = pneg %p130
        $region38: #{soft_masked_bert_forward.25} parent=35 // pred_check_branch
          %290 = sbr.rel (%p288) target = $region40
        $region39: #{soft_masked_bert_forward.25} parent=35 // pred_region
          %s292 = ssub.s32 128, 128
          %293 = vsyncadd %s284, %s292
          %s294 = smul.addr %s18, 128
          %s295 = scalar_lea.hbm %s4, %s294
          %s297 = sshll.u32 %s287, 4
          %s298 = int_to_ptr.vmem [resolvable:$true] %s297
          %300 = dma.vmem_to_hbm [thread:$0]  %s298, 128, %s295, %s284
        $region40: #{soft_masked_bert_forward.25} parent=35 // pred_fallthru
          _
      $region36: #{soft_masked_bert_forward.25} parent=5 // pred_fallthru
        _
      %p301 = scmp.le.s32.totalorder 2, %s13
      // Predicated region
      $region41: #{soft_masked_bert_forward.25} parent=5 // pred_check
        %p302 = pneg %p301
      $region42: #{soft_masked_bert_forward.25} parent=5 // pred_check_branch
        %304 = sbr.rel (%p302) target = $region44
      $region43: #{soft_masked_bert_forward.25} parent=5 // pred_region
        %s305 = ssub.s32 %s13, 2
        // Predicated region
        $region45: #{soft_masked_bert_forward.25} parent=43 // pred_check
          %p306 = pneg %p136
        $region46: #{soft_masked_bert_forward.25} parent=43 // pred_check_branch
          %308 = sbr.rel (%p306) target = $region48
        $region47: #{soft_masked_bert_forward.25} parent=43 // pred_region
          %s309 = sand.u32 %s121, 1
          %s310 = scalar_lea.sflag [#allocation3], %s309
          %s311 = sand.u32 %s121, 1
          %s312 = smul.addr %s311, 8
          %s313 = scalar_lea.vmem [#allocation2], %s312
          %314 = dma.done %s310, 128
        $region48: #{soft_masked_bert_forward.25} parent=43 // pred_fallthru
          _
      $region44: #{soft_masked_bert_forward.25} parent=5 // pred_fallthru
        _
    $region6: #{soft_masked_bert_forward.25} parent=1 // loop_footer
      %s17 = sadd.s32 1, %s13
    $region7: #{soft_masked_bert_forward.25} parent=1 // loop_footer_branch
      %12 = sbr.rel target = $region3
    $region8: #{soft_masked_bert_forward.25} parent=1 // loop_exit
      _
    %315 = vsyncpa [#allocation3], 1
    %s316 = scalar_lea.sflag [#allocation3], 1
    %317 = vsyncpa %s316, 1

// kernel: soft_masked_bert_forward.20
$region0: #{soft_masked_bert_forward.20}
  #allocation0 [shape = 'u32[]', space=smem, size = 0x4, offset = 0x4, fixed_abs, tag = 'smem constant byte address 0x4 - core index']
  #allocation1 [shape = 'u32[144,128]{1,0:T(1,128)}', space=vmem, size = 0x12000, scoped, tag = 'internal scratch']
  %s0 = inlined_call_operand.vmem [shape: f32[16,32], index: 0, kind: input, shape index: {}]
  %s1 = inlined_call_operand.vmem [shape: bf16[32,64], index: 1, kind: input, shape index: {}]
  %s2 = inlined_call_operand.vmem [shape: f32[1,64], index: 2, kind: input, shape index: {}]
  %s3 = inlined_call_operand.vmem [shape: bf16[64,32], index: 3, kind: input, shape index: {}]
  %s4 = inlined_call_operand.vmem [shape: f32[1,32], index: 4, kind: input, shape index: {}, may-alias: {4,6}]
  %s5 = inlined_call_operand.vmem [shape: f32[1,32], index: 5, kind: input, shape index: {}]
  %s6 = inlined_call_operand.vmem [shape: f32[1,32], index: 6, kind: input, shape index: {}, may-alias: {4,6}]
  %s7 = inlined_call_operand.vmem [shape: f32[16,32], index: 7, kind: output, shape index: {}]
  %s8 = sld [smem:[#allocation0]]
  $region61: #{soft_masked_bert_forward.20} parent=0
    _
  %s10 = ssub.s32 1, %s8
  %s11 = scalar_select 0, %s10, %s8
  loop: start=0, step=1, limit=4
  $region2: #{soft_masked_bert_forward.20} parent=0 // loop_pre_header
    _
  $region3: #{soft_masked_bert_forward.20} parent=0 // loop_header
    %s13 = sphi 0, %s17
    %p14 = scmp.ge.s32.totalorder %s13, 4
    %s23 = sphi 0, %s25
    %s26 = sphi 0, %s23
    %s27 = sphi 0, %s26
    %s43 = sphi 0, %s27
    %s47 = sphi 0, %s47
    %s49 = sphi 0, %s47
    %s50 = sphi 0, %s49
    %s64 = sphi 0, %s50
    %s68 = sphi 0, %s68
    %s70 = sphi 0, %s68
    %s71 = sphi 0, %s70
    %s85 = sphi 0, %s71
    %s89 = sphi 0, %s89
    %s91 = sphi 0, %s89
    %s92 = sphi 0, %s91
    %s106 = sphi 0, %s92
    %s110 = sphi 0, %s110
    %s112 = sphi 0, %s110
    %s113 = sphi 0, %s112
    %s127 = sphi 0, %s113
    %s131 = sphi 0, %s131
    %s133 = sphi 0, %s131
    %s134 = sphi 0, %s133
    %s148 = sphi 0, %s134
    %s152 = sphi 0, %s152
    %s154 = sphi 0, %s152
    %s155 = sphi 0, %s154
    %s169 = sphi 0, %s155
    %s175 = sphi 0, %s177
    %s178 = sphi 0, %s175
    %s179 = sphi 0, %s178
    %s195 = sphi 0, %s179
  $region4: #{soft_masked_bert_forward.20} parent=0 // loop_header_branch
    %16 = sbr.rel (%p14) target = $region8
  $region5: #{soft_masked_bert_forward.20} parent=0 // loop_body
    %s18 = ssub.s32 %s13, 1
    %s19 = ssub.s32 %s13, 2
    %s20 = sadd.s32 %s13, 1
    %s21 = ssub.s32 %s13, %s20
    %p22 = scmp.eq.s32.totalorder %s21, 0
    %s24 = sadd.s32 %s23, 1
    %s25 = scalar_select %p22, %s23, %s24
    %p28 = pneg %p22
    %p29 = scmp.eq.s32.totalorder %s13, 1
    %p30 = por %p28, %p29
    %p31 = scmp.ne.s32.totalorder %s23, %s26
    %p32 = scmp.eq.s32.totalorder %s13, 0
    %p33 = por %p31, %p32
    %p34 = scmp.ne.s32.totalorder %s23, %s26
    %p35 = scmp.eq.s32.totalorder %s18, 1
    %p36 = por %p34, %p35
    %p37 = scmp.ne.s32.totalorder %s26, %s27
    %p38 = scmp.eq.s32.totalorder %s18, 0
    %p39 = por %p37, %p38
    %p40 = scmp.ne.s32.totalorder %s26, %s27
    %p41 = scmp.eq.s32.totalorder %s19, 1
    %p42 = por %p40, %p41
    %p44 = scmp.ne.s32.totalorder %s27, %s43
    %p45 = scmp.eq.s32.totalorder %s19, 0
    %p46 = por %p44, %p45
    %s48 = sadd.s32 %s47, 1
    %p51 = scmp.eq.s32.totalorder %s13, 1
    %p52 = scmp.ne.s32.totalorder %s47, %s49
    %p53 = scmp.eq.s32.totalorder %s13, 0
    %p54 = por %p52, %p53
    %p55 = scmp.ne.s32.totalorder %s47, %s49
    %p56 = scmp.eq.s32.totalorder %s18, 1
    %p57 = por %p55, %p56
    %p58 = scmp.ne.s32.totalorder %s49, %s50
    %p59 = scmp.eq.s32.totalorder %s18, 0
    %p60 = por %p58, %p59
    %p61 = scmp.ne.s32.totalorder %s49, %s50
    %p62 = scmp.eq.s32.totalorder %s19, 1
    %p63 = por %p61, %p62
    %p65 = scmp.ne.s32.totalorder %s50, %s64
    %p66 = scmp.eq.s32.totalorder %s19, 0
    %p67 = por %p65, %p66
    %s69 = sadd.s32 %s68, 1
    %p72 = scmp.eq.s32.totalorder %s13, 1
    %p73 = scmp.ne.s32.totalorder %s68, %s70
    %p74 = scmp.eq.s32.totalorder %s13, 0
    %p75 = por %p73, %p74
    %p76 = scmp.ne.s32.totalorder %s68, %s70
    %p77 = scmp.eq.s32.totalorder %s18, 1
    %p78 = por %p76, %p77
    %p79 = scmp.ne.s32.totalorder %s70, %s71
    %p80 = scmp.eq.s32.totalorder %s18, 0
    %p81 = por %p79, %p80
    %p82 = scmp.ne.s32.totalorder %s70, %s71
    %p83 = scmp.eq.s32.totalorder %s19, 1
    %p84 = por %p82, %p83
    %p86 = scmp.ne.s32.totalorder %s71, %s85
    %p87 = scmp.eq.s32.totalorder %s19, 0
    %p88 = por %p86, %p87
    %s90 = sadd.s32 %s89, 1
    %p93 = scmp.eq.s32.totalorder %s13, 1
    %p94 = scmp.ne.s32.totalorder %s89, %s91
    %p95 = scmp.eq.s32.totalorder %s13, 0
    %p96 = por %p94, %p95
    %p97 = scmp.ne.s32.totalorder %s89, %s91
    %p98 = scmp.eq.s32.totalorder %s18, 1
    %p99 = por %p97, %p98
    %p100 = scmp.ne.s32.totalorder %s91, %s92
    %p101 = scmp.eq.s32.totalorder %s18, 0
    %p102 = por %p100, %p101
    %p103 = scmp.ne.s32.totalorder %s91, %s92
    %p104 = scmp.eq.s32.totalorder %s19, 1
    %p105 = por %p103, %p104
    %p107 = scmp.ne.s32.totalorder %s92, %s106
    %p108 = scmp.eq.s32.totalorder %s19, 0
    %p109 = por %p107, %p108
    %s111 = sadd.s32 %s110, 1
    %p114 = scmp.eq.s32.totalorder %s13, 1
    %p115 = scmp.ne.s32.totalorder %s110, %s112
    %p116 = scmp.eq.s32.totalorder %s13, 0
    %p117 = por %p115, %p116
    %p118 = scmp.ne.s32.totalorder %s110, %s112
    %p119 = scmp.eq.s32.totalorder %s18, 1
    %p120 = por %p118, %p119
    %p121 = scmp.ne.s32.totalorder %s112, %s113
    %p122 = scmp.eq.s32.totalorder %s18, 0
    %p123 = por %p121, %p122
    %p124 = scmp.ne.s32.totalorder %s112, %s113
    %p125 = scmp.eq.s32.totalorder %s19, 1
    %p126 = por %p124, %p125
    %p128 = scmp.ne.s32.totalorder %s113, %s127
    %p129 = scmp.eq.s32.totalorder %s19, 0
    %p130 = por %p128, %p129
    %s132 = sadd.s32 %s131, 1
    %p135 = scmp.eq.s32.totalorder %s13, 1
    %p136 = scmp.ne.s32.totalorder %s131, %s133
    %p137 = scmp.eq.s32.totalorder %s13, 0
    %p138 = por %p136, %p137
    %p139 = scmp.ne.s32.totalorder %s131, %s133
    %p140 = scmp.eq.s32.totalorder %s18, 1
    %p141 = por %p139, %p140
    %p142 = scmp.ne.s32.totalorder %s133, %s134
    %p143 = scmp.eq.s32.totalorder %s18, 0
    %p144 = por %p142, %p143
    %p145 = scmp.ne.s32.totalorder %s133, %s134
    %p146 = scmp.eq.s32.totalorder %s19, 1
    %p147 = por %p145, %p146
    %p149 = scmp.ne.s32.totalorder %s134, %s148
    %p150 = scmp.eq.s32.totalorder %s19, 0
    %p151 = por %p149, %p150
    %s153 = sadd.s32 %s152, 1
    %p156 = scmp.eq.s32.totalorder %s13, 1
    %p157 = scmp.ne.s32.totalorder %s152, %s154
    %p158 = scmp.eq.s32.totalorder %s13, 0
    %p159 = por %p157, %p158
    %p160 = scmp.ne.s32.totalorder %s152, %s154
    %p161 = scmp.eq.s32.totalorder %s18, 1
    %p162 = por %p160, %p161
    %p163 = scmp.ne.s32.totalorder %s154, %s155
    %p164 = scmp.eq.s32.totalorder %s18, 0
    %p165 = por %p163, %p164
    %p166 = scmp.ne.s32.totalorder %s154, %s155
    %p167 = scmp.eq.s32.totalorder %s19, 1
    %p168 = por %p166, %p167
    %p170 = scmp.ne.s32.totalorder %s155, %s169
    %p171 = scmp.eq.s32.totalorder %s19, 0
    %p172 = por %p170, %p171
    %s173 = ssub.s32 %s13, %s20
    %p174 = scmp.eq.s32.totalorder %s173, 0
    %s176 = sadd.s32 %s175, 1
    %s177 = scalar_select %p174, %s175, %s176
    %p180 = pneg %p174
    %p181 = scmp.eq.s32.totalorder %s13, 1
    %p182 = por %p180, %p181
    %p183 = scmp.ne.s32.totalorder %s175, %s178
    %p184 = scmp.eq.s32.totalorder %s13, 0
    %p185 = por %p183, %p184
    %p186 = scmp.ne.s32.totalorder %s175, %s178
    %p187 = scmp.eq.s32.totalorder %s18, 1
    %p188 = por %p186, %p187
    %p189 = scmp.ne.s32.totalorder %s178, %s179
    %p190 = scmp.eq.s32.totalorder %s18, 0
    %p191 = por %p189, %p190
    %p192 = scmp.ne.s32.totalorder %s178, %s179
    %p193 = scmp.eq.s32.totalorder %s19, 1
    %p194 = por %p192, %p193
    %p196 = scmp.ne.s32.totalorder %s179, %s195
    %p197 = scmp.eq.s32.totalorder %s19, 0
    %p198 = por %p196, %p197
    %p199 = scmp.le.s32.totalorder 1, %s13
    %p200 = scmp.lt.s32.totalorder %s13, 3
    %p201 = pnand %p199, %p200
    %p202 = pneg %p201
    // Predicated region
    $region9: #{soft_masked_bert_forward.20} parent=5 // pred_check
      _
    $region10: #{soft_masked_bert_forward.20} parent=5 // pred_check_branch
      %204 = sbr.rel (%p201) target = $region12
    $region11: #{soft_masked_bert_forward.20} parent=5 // pred_region
      %s205 = ssub.s32 %s13, 1
      // Predicated region
      $region13: #{soft_masked_bert_forward.20} parent=11 // pred_check
        %p206 = pneg %p60
      $region14: #{soft_masked_bert_forward.20} parent=11 // pred_check_branch
        %208 = sbr.rel (%p206) target = $region16
      $region15: #{soft_masked_bert_forward.20} parent=11 // pred_region
        _
      $region16: #{soft_masked_bert_forward.20} parent=11 // pred_fallthru
        _
      // Predicated region
      $region17: #{soft_masked_bert_forward.20} parent=11 // pred_check
        %p209 = pneg %p81
      $region18: #{soft_masked_bert_forward.20} parent=11 // pred_check_branch
        %211 = sbr.rel (%p209) target = $region20
      $region19: #{soft_masked_bert_forward.20} parent=11 // pred_region
        _
      $region20: #{soft_masked_bert_forward.20} parent=11 // pred_fallthru
        _
      // Predicated region
      $region21: #{soft_masked_bert_forward.20} parent=11 // pred_check
        %p212 = pneg %p102
      $region22: #{soft_masked_bert_forward.20} parent=11 // pred_check_branch
        %214 = sbr.rel (%p212) target = $region24
      $region23: #{soft_masked_bert_forward.20} parent=11 // pred_region
        _
      $region24: #{soft_masked_bert_forward.20} parent=11 // pred_fallthru
        _
      // Predicated region
      $region25: #{soft_masked_bert_forward.20} parent=11 // pred_check
        %p215 = pneg %p123
      $region26: #{soft_masked_bert_forward.20} parent=11 // pred_check_branch
        %217 = sbr.rel (%p215) target = $region28
      $region27: #{soft_masked_bert_forward.20} parent=11 // pred_region
        _
      $region28: #{soft_masked_bert_forward.20} parent=11 // pred_fallthru
        _
      // Predicated region
      $region29: #{soft_masked_bert_forward.20} parent=11 // pred_check
        %p218 = pneg %p144
      $region30: #{soft_masked_bert_forward.20} parent=11 // pred_check_branch
        %220 = sbr.rel (%p218) target = $region32
      $region31: #{soft_masked_bert_forward.20} parent=11 // pred_region
        _
      $region32: #{soft_masked_bert_forward.20} parent=11 // pred_fallthru
        _
      // Predicated region
      $region33: #{soft_masked_bert_forward.20} parent=11 // pred_check
        %p221 = pneg %p165
      $region34: #{soft_masked_bert_forward.20} parent=11 // pred_check_branch
        %223 = sbr.rel (%p221) target = $region36
      $region35: #{soft_masked_bert_forward.20} parent=11 // pred_region
        _
      $region36: #{soft_masked_bert_forward.20} parent=11 // pred_fallthru
        _
    $region12: #{soft_masked_bert_forward.20} parent=5 // pred_fallthru
      _
    %p224 = scmp.lt.s32.totalorder %s13, 2
    // Predicated region
    $region37: #{soft_masked_bert_forward.20} parent=5 // pred_check
      %p225 = pneg %p224
    $region38: #{soft_masked_bert_forward.20} parent=5 // pred_check_branch
      %227 = sbr.rel (%p225) target = $region40
    $region39: #{soft_masked_bert_forward.20} parent=5 // pred_region
      // Predicated region
      $region41: #{soft_masked_bert_forward.20} parent=39 // pred_check
        %p228 = pneg %p33
      $region42: #{soft_masked_bert_forward.20} parent=39 // pred_check_branch
        %230 = sbr.rel (%p228) target = $region44
      $region43: #{soft_masked_bert_forward.20} parent=39 // pred_region
        %p231 = scmp.lt.s32.totalorder %s13, 1
        %s232 = scalar_select %p231, %s13, 1
        %s233 = smul.addr %s232, 8
        %s234 = scalar_lea.vmem %s0, %s233
      $region44: #{soft_masked_bert_forward.20} parent=39 // pred_fallthru
        _
    $region40: #{soft_masked_bert_forward.20} parent=5 // pred_fallthru
      _
    %p235 = scmp.le.s32.totalorder 1, %s13
    %p236 = scmp.lt.s32.totalorder %s13, 3
    %p237 = pnand %p235, %p236
    %p238 = pneg %p237
    // Predicated region
    $region45: #{soft_masked_bert_forward.20} parent=5 // pred_check
      _
    $region46: #{soft_masked_bert_forward.20} parent=5 // pred_check_branch
      %240 = sbr.rel (%p237) target = $region48
    $region47: #{soft_masked_bert_forward.20} parent=5 // pred_region
      %s241 = ssub.s32 %s13, 1
      %p242 = scmp.lt.s32.totalorder %s18, 1
      %s243 = scalar_select %p242, %s18, 1
      %s244 = smul.addr %s243, 8
      %s245 = scalar_lea.vmem %s0, %s244
      %p246 = pneg %p39
      %p247 = pneg %p36
      %p248 = pneg %p60
      %p249 = pneg %p57
      %p250 = pneg %p81
      %p251 = pneg %p78
      %p252 = pneg %p102
      %p253 = pneg %p99
      %p254 = pneg %p123
      %p255 = pneg %p120
      %p256 = pneg %p144
      %p257 = pneg %p141
      %p258 = pneg %p165
      %p259 = pneg %p162
      %p260 = pneg %p191
      %p261 = pneg %p188
      %p262 = scmp.lt.s32.totalorder %s18, 1
      %s263 = scalar_select %p262, %s18, 1
      %s264 = smul.addr %s263, 8
      %s265 = scalar_lea.vmem %s7, %s264
      %p266 = scmp.lt.s32.totalorder %s18, 1
      %s267 = scalar_select %p266, %s18, 1
      %s268 = smul.addr %s267, 8
      %s269 = scalar_lea.vmem %s0, %s268
      %p270 = scmp.lt.s32.totalorder %s18, 1
      %s271 = scalar_select %p270, %s18, 1
      %s272 = smul.addr %s271, 8
      %s273 = scalar_lea.vmem %s7, %s272
      %v275 = vld [vmem:[%s269] sm:$0xff]
      %v276 = vpack.c.bf16 %v275, %v275
      %v277 = vld [vmem:[%s1] sm:$0xf]
      %v278 = vld [vmem:[%s1 + $0x4] sm:$0xf]
      %v279 = vld [vmem:[%s1 + $0x8] sm:$0xf]
      %v280 = vld [vmem:[%s1 + $0xc] sm:$0xf]
      %v281 = vld [vmem:[%s2] sm:$0x1]
      %v283 = vlaneseq
      %v284 = vshrl.u32 %v283, 7
      %v285 = vsub.s32 0, %v284
      %v286 = vrot.slane %v281, %v285
      %v292 = vunpack.c.l.b16 %v277
      %v293 = vunpack.c.l.b16 %v278
      %v294 = vunpack.c.l.b16 %v279
      %v295 = vunpack.c.l.b16 %v280
      %v296 = vpack.c.b16 %v293, %v292
      %v297 = vpack.c.b16 %v295, %v294
      %vm300 = vcmask 261120
      %v302 = vsel %vm300, %v276, 0
      %304 = vmatprep.subr.bf16.mxu0 0
      %305 = vmatpush1.bf16.msra.mxu0 %v296
      %306 = vmatprep.subr.bf16.mxu0 0
      %307 = vmatpush1.bf16.msra.mxu0 %v297
      %308 = vmatprep.subr.bf16.mxu0 0
      %309 = vmatpush1.bf16.msra.mxu0 0
      %310 = vmatprep.subr.bf16.mxu0 0
      %311 = vmatpush1.bf16.msra.mxu0 0
      %312 = vmatprep.subr.bf16.mxu0 0
      %313 = vmatpush1.bf16.msra.mxu0 0
      %314 = vmatprep.subr.bf16.mxu0 0
      %315 = vmatpush1.bf16.msra.mxu0 0
      %316 = vmatprep.subr.bf16.mxu0 0
      %317 = vmatpush1.bf16.msra.mxu0 0
      %318 = vmatprep.subr.bf16.mxu0 0
      %319 = vmatpush1.bf16.msra.mxu0 0
      %320 = vmatprep.subr.bf16.mxu0 0
      %321 = vmatpush1.bf16.msra.mxu0 0
      %322 = vmatprep.subr.bf16.mxu0 0
      %323 = vmatpush1.bf16.msra.mxu0 0
      %324 = vmatprep.subr.bf16.mxu0 0
      %325 = vmatpush1.bf16.msra.mxu0 0
      %326 = vmatprep.subr.bf16.mxu0 0
      %327 = vmatpush1.bf16.msra.mxu0 0
      %328 = vmatprep.subr.bf16.mxu0 0
      %329 = vmatpush1.bf16.msra.mxu0 0
      %330 = vmatprep.subr.bf16.mxu0 0
      %331 = vmatpush1.bf16.msra.mxu0 0
      %332 = vmatprep.subr.bf16.mxu0 0
      %333 = vmatpush1.bf16.msra.mxu0 0
      %334 = vmatprep.subr.bf16.mxu0 0
      %335 = vmatpush1.bf16.msra.mxu0 0
      %336 = vmatprep.mubr.bf16.mxu0 0
      %337 = vmatmul.mubr.bf16.gmra.mrb[0].mxu0 %v302
      %v338 = vpop.f32.mrb[0].mxu0
      %v339 = vadd.f32 %v286, %v338
      %v340 = vpop.f32.mrb[0].mxu0
      %v341 = vpop.f32.mrb[0].mxu0
      %v342 = vpop.f32.mrb[0].mxu0
      %343 = vdwg.mxu0
      %v344 = vmul.f32 %v339, 0.5
      %v345 = vmul.f32 %v339, 0.044715
      %v346 = vmul.f32 %v345, %v339
      %v347 = vmul.f32 %v346, %v339
      %v348 = vadd.f32 %v339, %v347
      %v349 = vmul.f32 %v348, 0.7978846
      %v350 = vtanh.pop %v349
      %v351 = vadd.f32 %v350, 1.0
      %v352 = vmul.f32 %v344, %v351
      %v353 = vpack.c.bf16 %v352, %v352
      %v354 = vld [vmem:[%s3] sm:$0xf]
      %v355 = vld [vmem:[%s3 + $0x4] sm:$0xf]
      %v356 = vld [vmem:[%s3 + $0x8] sm:$0xf]
      %v357 = vld [vmem:[%s3 + $0xc] sm:$0xf]
      %v358 = vld [vmem:[%s3 + $0x10] sm:$0xf]
      %v359 = vld [vmem:[%s3 + $0x14] sm:$0xf]
      %v360 = vld [vmem:[%s3 + $0x18] sm:$0xf]
      %v361 = vld [vmem:[%s3 + $0x1c] sm:$0xf]
      %v362 = vld [vmem:[%s4] sm:$0x1]
      %v364 = vlaneseq
      %v365 = vshrl.u32 %v364, 7
      %v366 = vsub.s32 0, %v365
      %v367 = vrot.slane %v362, %v366
      %v377 = vunpack.c.l.b16 %v354
      %v378 = vunpack.c.l.b16 %v355
      %v379 = vunpack.c.l.b16 %v356
      %v380 = vunpack.c.l.b16 %v357
      %v381 = vunpack.c.l.b16 %v358
      %v382 = vunpack.c.l.b16 %v359
      %v383 = vunpack.c.l.b16 %v360
      %v384 = vunpack.c.l.b16 %v361
      %v385 = vpack.c.b16 %v378, %v377
      %v386 = vpack.c.b16 %v380, %v379
      %v387 = vpack.c.b16 %v382, %v381
      %v388 = vpack.c.b16 %v384, %v383
      %vm393 = vcmask 523264
      %v395 = vsel %vm393, %v353, 0
      %397 = vmatprep.subr.bf16.mxu0 0
      %398 = vmatpush1.bf16.msra.mxu0 %v385
      %399 = vmatprep.subr.bf16.mxu0 0
      %400 = vmatpush1.bf16.msra.mxu0 %v386
      %401 = vmatprep.subr.bf16.mxu0 0
      %402 = vmatpush1.bf16.msra.mxu0 %v387
      %403 = vmatprep.subr.bf16.mxu0 0
      %404 = vmatpush1.bf16.msra.mxu0 %v388
      %405 = vmatprep.subr.bf16.mxu0 0
      %406 = vmatpush1.bf16.msra.mxu0 0
      %407 = vmatprep.subr.bf16.mxu0 0
      %408 = vmatpush1.bf16.msra.mxu0 0
      %409 = vmatprep.subr.bf16.mxu0 0
      %410 = vmatpush1.bf16.msra.mxu0 0
      %411 = vmatprep.subr.bf16.mxu0 0
      %412 = vmatpush1.bf16.msra.mxu0 0
      %413 = vmatprep.subr.bf16.mxu0 0
      %414 = vmatpush1.bf16.msra.mxu0 0
      %415 = vmatprep.subr.bf16.mxu0 0
      %416 = vmatpush1.bf16.msra.mxu0 0
      %417 = vmatprep.subr.bf16.mxu0 0
      %418 = vmatpush1.bf16.msra.mxu0 0
      %419 = vmatprep.subr.bf16.mxu0 0
      %420 = vmatpush1.bf16.msra.mxu0 0
      %421 = vmatprep.subr.bf16.mxu0 0
      %422 = vmatpush1.bf16.msra.mxu0 0
      %423 = vmatprep.subr.bf16.mxu0 0
      %424 = vmatpush1.bf16.msra.mxu0 0
      %425 = vmatprep.subr.bf16.mxu0 0
      %426 = vmatpush1.bf16.msra.mxu0 0
      %427 = vmatprep.subr.bf16.mxu0 0
      %428 = vmatpush1.bf16.msra.mxu0 0
      %429 = vmatprep.mubr.bf16.mxu0 0
      %430 = vmatmul.mubr.bf16.gmra.mrb[0].mxu0 %v395
      %v431 = vpop.f32.mrb[0].mxu0
      %v432 = vadd.f32 %v367, %v431
      %v433 = vpop.f32.mrb[0].mxu0
      %v434 = vpop.f32.mrb[0].mxu0
      %v435 = vpop.f32.mrb[0].mxu0
      %436 = vdwg.mxu0
      %v437 = vadd.f32 %v432, %v275
      %v438 = vld [vmem:[%s5] sm:$0x1]
      %v439 = vld [vmem:[%s6] sm:$0x1]
      %v440 = vsel %vm300, %v437, 0.0
      %441 = vadd.xlane.f32.xlu0 %v440
      %v442 = vpop.xlane.xlu0 %441
      %v443 = vrcp.pop 32.0
      %v444 = vmul.f32 %v442, %v443
      %v445 = vsub.f32 %v437, %v444
      %v446 = vmul.f32 %v445, %v445
      %v447 = vsel %vm300, %v446, 0.0
      %448 = vadd.xlane.f32.xlu0 %v447
      %v449 = vpop.xlane.xlu0 %448
      %v450 = vmul.f32 %v449, %v443
      %v451 = vadd.f32 %v450, 1e-12
      %v452 = vrsqrt.pop %v451
      %v453 = vmul.f32 %v445, %v452
      %v455 = vlaneseq
      %v456 = vshrl.u32 %v455, 7
      %v457 = vsub.s32 0, %v456
      %v458 = vrot.slane %v438, %v457
      %v460 = vmul.f32 %v453, %v458
      %v462 = vlaneseq
      %v463 = vshrl.u32 %v462, 7
      %v464 = vsub.s32 0, %v463
      %v465 = vrot.slane %v439, %v464
      %v467 = vadd.f32 %v460, %v465
      %468 = vst.msk [vmem:[%s273] sm:$0xff] %vm300, %v467
      %p469 = scmp.lt.s32.totalorder %s18, 1
      %s470 = scalar_select %p469, %s18, 1
      %s471 = smul.addr %s470, 8
      %s472 = scalar_lea.vmem %s7, %s471
      // Predicated region
      $region49: #{soft_masked_bert_forward.20} parent=47 // pred_check
        %p473 = pneg %p188
      $region50: #{soft_masked_bert_forward.20} parent=47 // pred_check_branch
        %475 = sbr.rel (%p473) target = $region52
      $region51: #{soft_masked_bert_forward.20} parent=47 // pred_region
        _
      $region52: #{soft_masked_bert_forward.20} parent=47 // pred_fallthru
        _
    $region48: #{soft_masked_bert_forward.20} parent=5 // pred_fallthru
      _
    %p476 = scmp.le.s32.totalorder 2, %s13
    // Predicated region
    $region53: #{soft_masked_bert_forward.20} parent=5 // pred_check
      %p477 = pneg %p476
    $region54: #{soft_masked_bert_forward.20} parent=5 // pred_check_branch
      %479 = sbr.rel (%p477) target = $region56
    $region55: #{soft_masked_bert_forward.20} parent=5 // pred_region
      %s480 = ssub.s32 %s13, 2
      // Predicated region
      $region57: #{soft_masked_bert_forward.20} parent=55 // pred_check
        %p481 = pneg %p194
      $region58: #{soft_masked_bert_forward.20} parent=55 // pred_check_branch
        %483 = sbr.rel (%p481) target = $region60
      $region59: #{soft_masked_bert_forward.20} parent=55 // pred_region
        %p484 = scmp.lt.s32.totalorder %s19, 1
        %s485 = scalar_select %p484, %s19, 1
        %s486 = smul.addr %s485, 8
        %s487 = scalar_lea.vmem %s7, %s486
      $region60: #{soft_masked_bert_forward.20} parent=55 // pred_fallthru
        _
    $region56: #{soft_masked_bert_forward.20} parent=5 // pred_fallthru
      _
  $region6: #{soft_masked_bert_forward.20} parent=0 // loop_footer
    %s17 = sadd.s32 1, %s13
  $region7: #{soft_masked_bert_forward.20} parent=0 // loop_footer_branch
    %12 = sbr.rel target = $region3
  $region8: #{soft_masked_bert_forward.20} parent=0 // loop_exit
    _

// kernel: soft_masked_bert_forward.18
$region0: #{soft_masked_bert_forward.18}
  #allocation0 [shape = 'u32[]', space=smem, size = 0x4, offset = 0x4, fixed_abs, tag = 'smem constant byte address 0x4 - core index']
  #allocation1 [shape = 'u32[144,128]{1,0:T(1,128)}', space=vmem, size = 0x12000, scoped, tag = 'internal scratch']
  %s0 = inlined_call_operand.vmem [shape: f32[2,8,96], index: 0, kind: input, shape index: {}]
  %s1 = inlined_call_operand.vmem [shape: f32[2,1,8], index: 1, kind: input, shape index: {}]
  %s2 = inlined_call_operand.vmem [shape: f32[2,8,32], index: 2, kind: output, shape index: {}]
  %s3 = sld [smem:[#allocation0]]
  $region41: #{soft_masked_bert_forward.18} parent=0
    _
  %s5 = ssub.s32 1, %s3
  %s6 = scalar_select 0, %s5, %s3
  loop: start=0, step=1, limit=4
  $region2: #{soft_masked_bert_forward.18} parent=0 // loop_pre_header
    _
  $region3: #{soft_masked_bert_forward.18} parent=0 // loop_header
    %s8 = sphi 0, %s12
    %p9 = scmp.ge.s32.totalorder %s8, 4
    %s18 = sphi 0, %s20
    %s21 = sphi 0, %s18
    %s22 = sphi 0, %s21
    %s38 = sphi 0, %s22
    %s44 = sphi 0, %s46
    %s47 = sphi 0, %s44
    %s48 = sphi 0, %s47
    %s64 = sphi 0, %s48
    %s70 = sphi 0, %s72
    %s73 = sphi 0, %s70
    %s74 = sphi 0, %s73
    %s90 = sphi 0, %s74
  $region4: #{soft_masked_bert_forward.18} parent=0 // loop_header_branch
    %11 = sbr.rel (%p9) target = $region8
  $region5: #{soft_masked_bert_forward.18} parent=0 // loop_body
    %s13 = ssub.s32 %s8, 1
    %s14 = ssub.s32 %s8, 2
    %s15 = sadd.s32 %s8, 1
    %s16 = ssub.s32 %s8, %s15
    %p17 = scmp.eq.s32.totalorder %s16, 0
    %s19 = sadd.s32 %s18, 1
    %s20 = scalar_select %p17, %s18, %s19
    %p23 = pneg %p17
    %p24 = scmp.eq.s32.totalorder %s8, 1
    %p25 = por %p23, %p24
    %p26 = scmp.ne.s32.totalorder %s18, %s21
    %p27 = scmp.eq.s32.totalorder %s8, 0
    %p28 = por %p26, %p27
    %p29 = scmp.ne.s32.totalorder %s18, %s21
    %p30 = scmp.eq.s32.totalorder %s13, 1
    %p31 = por %p29, %p30
    %p32 = scmp.ne.s32.totalorder %s21, %s22
    %p33 = scmp.eq.s32.totalorder %s13, 0
    %p34 = por %p32, %p33
    %p35 = scmp.ne.s32.totalorder %s21, %s22
    %p36 = scmp.eq.s32.totalorder %s14, 1
    %p37 = por %p35, %p36
    %p39 = scmp.ne.s32.totalorder %s22, %s38
    %p40 = scmp.eq.s32.totalorder %s14, 0
    %p41 = por %p39, %p40
    %s42 = ssub.s32 %s8, %s15
    %p43 = scmp.eq.s32.totalorder %s42, 0
    %s45 = sadd.s32 %s44, 1
    %s46 = scalar_select %p43, %s44, %s45
    %p49 = pneg %p43
    %p50 = scmp.eq.s32.totalorder %s8, 1
    %p51 = por %p49, %p50
    %p52 = scmp.ne.s32.totalorder %s44, %s47
    %p53 = scmp.eq.s32.totalorder %s8, 0
    %p54 = por %p52, %p53
    %p55 = scmp.ne.s32.totalorder %s44, %s47
    %p56 = scmp.eq.s32.totalorder %s13, 1
    %p57 = por %p55, %p56
    %p58 = scmp.ne.s32.totalorder %s47, %s48
    %p59 = scmp.eq.s32.totalorder %s13, 0
    %p60 = por %p58, %p59
    %p61 = scmp.ne.s32.totalorder %s47, %s48
    %p62 = scmp.eq.s32.totalorder %s14, 1
    %p63 = por %p61, %p62
    %p65 = scmp.ne.s32.totalorder %s48, %s64
    %p66 = scmp.eq.s32.totalorder %s14, 0
    %p67 = por %p65, %p66
    %s68 = ssub.s32 %s8, %s15
    %p69 = scmp.eq.s32.totalorder %s68, 0
    %s71 = sadd.s32 %s70, 1
    %s72 = scalar_select %p69, %s70, %s71
    %p75 = pneg %p69
    %p76 = scmp.eq.s32.totalorder %s8, 1
    %p77 = por %p75, %p76
    %p78 = scmp.ne.s32.totalorder %s70, %s73
    %p79 = scmp.eq.s32.totalorder %s8, 0
    %p80 = por %p78, %p79
    %p81 = scmp.ne.s32.totalorder %s70, %s73
    %p82 = scmp.eq.s32.totalorder %s13, 1
    %p83 = por %p81, %p82
    %p84 = scmp.ne.s32.totalorder %s73, %s74
    %p85 = scmp.eq.s32.totalorder %s13, 0
    %p86 = por %p84, %p85
    %p87 = scmp.ne.s32.totalorder %s73, %s74
    %p88 = scmp.eq.s32.totalorder %s14, 1
    %p89 = por %p87, %p88
    %p91 = scmp.ne.s32.totalorder %s74, %s90
    %p92 = scmp.eq.s32.totalorder %s14, 0
    %p93 = por %p91, %p92
    %p94 = scmp.le.s32.totalorder 1, %s8
    %p95 = scmp.lt.s32.totalorder %s8, 3
    %p96 = pnand %p94, %p95
    %p97 = pneg %p96
    // Predicated region
    $region9: #{soft_masked_bert_forward.18} parent=5 // pred_check
      _
    $region10: #{soft_masked_bert_forward.18} parent=5 // pred_check_branch
      %99 = sbr.rel (%p96) target = $region12
    $region11: #{soft_masked_bert_forward.18} parent=5 // pred_region
      %s100 = ssub.s32 %s8, 1
    $region12: #{soft_masked_bert_forward.18} parent=5 // pred_fallthru
      _
    %p101 = scmp.lt.s32.totalorder %s8, 2
    // Predicated region
    $region13: #{soft_masked_bert_forward.18} parent=5 // pred_check
      %p102 = pneg %p101
    $region14: #{soft_masked_bert_forward.18} parent=5 // pred_check_branch
      %104 = sbr.rel (%p102) target = $region16
    $region15: #{soft_masked_bert_forward.18} parent=5 // pred_region
      // Predicated region
      $region17: #{soft_masked_bert_forward.18} parent=15 // pred_check
        %p105 = pneg %p28
      $region18: #{soft_masked_bert_forward.18} parent=15 // pred_check_branch
        %107 = sbr.rel (%p105) target = $region20
      $region19: #{soft_masked_bert_forward.18} parent=15 // pred_region
        %p108 = scmp.lt.s32.totalorder %s8, 1
        %s109 = scalar_select %p108, %s8, 1
        %s110 = smul.addr %s109, 8
        %s111 = scalar_lea.vmem %s0, %s110
      $region20: #{soft_masked_bert_forward.18} parent=15 // pred_fallthru
        _
      // Predicated region
      $region21: #{soft_masked_bert_forward.18} parent=15 // pred_check
        %p112 = pneg %p54
      $region22: #{soft_masked_bert_forward.18} parent=15 // pred_check_branch
        %114 = sbr.rel (%p112) target = $region24
      $region23: #{soft_masked_bert_forward.18} parent=15 // pred_region
        %p115 = scmp.lt.s32.totalorder %s8, 1
        %s116 = scalar_select %p115, %s8, 1
        %s117 = scalar_lea.vmem %s1, %s116
      $region24: #{soft_masked_bert_forward.18} parent=15 // pred_fallthru
        _
    $region16: #{soft_masked_bert_forward.18} parent=5 // pred_fallthru
      _
    %p118 = scmp.le.s32.totalorder 1, %s8
    %p119 = scmp.lt.s32.totalorder %s8, 3
    %p120 = pnand %p118, %p119
    %p121 = pneg %p120
    // Predicated region
    $region25: #{soft_masked_bert_forward.18} parent=5 // pred_check
      _
    $region26: #{soft_masked_bert_forward.18} parent=5 // pred_check_branch
      %123 = sbr.rel (%p120) target = $region28
    $region27: #{soft_masked_bert_forward.18} parent=5 // pred_region
      %s124 = ssub.s32 %s8, 1
      %p125 = scmp.lt.s32.totalorder %s13, 1
      %s126 = scalar_select %p125, %s13, 1
      %s127 = smul.addr %s126, 8
      %s128 = scalar_lea.vmem %s0, %s127
      %p129 = pneg %p34
      %p130 = pneg %p31
      %p131 = scmp.lt.s32.totalorder %s13, 1
      %s132 = scalar_select %p131, %s13, 1
      %s133 = scalar_lea.vmem %s1, %s132
      %p134 = pneg %p60
      %p135 = pneg %p57
      %p136 = pneg %p86
      %p137 = pneg %p83
      %p138 = scmp.lt.s32.totalorder %s13, 1
      %s139 = scalar_select %p138, %s13, 1
      %s140 = smul.addr %s139, 8
      %s141 = scalar_lea.vmem %s2, %s140
      %p142 = scmp.lt.s32.totalorder %s13, 1
      %s143 = scalar_select %p142, %s13, 1
      %s144 = smul.addr %s143, 8
      %s145 = scalar_lea.vmem %s0, %s144
      %p146 = scmp.lt.s32.totalorder %s13, 1
      %s147 = scalar_select %p146, %s13, 1
      %s148 = scalar_lea.vmem %s1, %s147
      %p149 = scmp.lt.s32.totalorder %s13, 1
      %s150 = scalar_select %p149, %s13, 1
      %s151 = smul.addr %s150, 8
      %s152 = scalar_lea.vmem %s2, %s151
      %v154 = vld [vmem:[%s145] sm:$0xff]
      %v155 = vld [vmem:[%s148] sm:$0x1]
      %v156 = vpack.c.bf16 %v154, %v154
      %158 = vrot.lane.b32.xlu0 %v156, 96
      %v159 = vpop.permute.xlu0 %158
      %vm160 = vcmask 64512
      %v162 = vsel %vm160, %v156, 0
      %v165 = vsel %vm160, %v159, 0
      %167 = vmatprep.subr.bf16.mxu0 0
      %168 = vmatpush1.bf16.xpose.msra.mxu0 %v165
      %169 = vmatprep.subr.bf16.mxu0 0
      %170 = vmatpush1.bf16.xpose.msra.mxu0 0
      %171 = vmatprep.subr.bf16.mxu0 0
      %172 = vmatpush1.bf16.xpose.msra.mxu0 0
      %173 = vmatprep.subr.bf16.mxu0 0
      %174 = vmatpush1.bf16.xpose.msra.mxu0 0
      %175 = vmatprep.subr.bf16.mxu0 0
      %176 = vmatpush1.bf16.xpose.msra.mxu0 0
      %177 = vmatprep.subr.bf16.mxu0 0
      %178 = vmatpush1.bf16.xpose.msra.mxu0 0
      %179 = vmatprep.subr.bf16.mxu0 0
      %180 = vmatpush1.bf16.xpose.msra.mxu0 0
      %181 = vmatprep.subr.bf16.mxu0 0
      %182 = vmatpush1.bf16.xpose.msra.mxu0 0
      %183 = vmatprep.subr.bf16.mxu0 0
      %184 = vmatpush1.bf16.xpose.msra.mxu0 0
      %185 = vmatprep.subr.bf16.mxu0 0
      %186 = vmatpush1.bf16.xpose.msra.mxu0 0
      %187 = vmatprep.subr.bf16.mxu0 0
      %188 = vmatpush1.bf16.xpose.msra.mxu0 0
      %189 = vmatprep.subr.bf16.mxu0 0
      %190 = vmatpush1.bf16.xpose.msra.mxu0 0
      %191 = vmatprep.subr.bf16.mxu0 0
      %192 = vmatpush1.bf16.xpose.msra.mxu0 0
      %193 = vmatprep.subr.bf16.mxu0 0
      %194 = vmatpush1.bf16.xpose.msra.mxu0 0
      %195 = vmatprep.subr.bf16.mxu0 0
      %196 = vmatpush1.bf16.xpose.msra.mxu0 0
      %197 = vmatprep.subr.bf16.mxu0 0
      %198 = vmatpush1.bf16.xpose.msra.mxu0 0
      %199 = vmatprep.mubr.bf16.mxu0 0
      %200 = vmatmul.mubr.bf16.gmra.mrb[0].mxu0 %v162
      %v201 = vpop.f32.mrb[0].mxu0
      %v202 = vadd.f32 0.0, %v201
      %v203 = vpop.f32.mrb[0].mxu0
      %v204 = vpop.f32.mrb[0].mxu0
      %v205 = vpop.f32.mrb[0].mxu0
      %206 = vdwg.mxu0
      %v207 = vmul.f32 %v202, 0.35355338
      %v209 = vlaneseq
      %v210 = vshrl.u32 %v209, 7
      %v211 = vsub.s32 0, %v210
      %v212 = vrot.slane %v155, %v211
      %v214 = vadd.f32 %v207, %v212
      %v215 = vsel %vm160, %v214, -inf
      %216 = vmax.xlane.f32.xlu0 %v215
      %v217 = vpop.xlane.xlu0 %216
      %v218 = vsub.f32 %v214, %v217
      %v219 = vmul.f32 %v218, 1.442695
      %v220 = vpow.pop %v219
      %v221 = vsel %vm160, %v220, 0.0
      %222 = vadd.xlane.f32.xlu0 %v221
      %v223 = vpop.xlane.xlu0 %222
      %v224 = vrcp.pop %v223
      %v225 = vmul.f32 %v220, %v224
      %v226 = vpack.c.bf16 %v225, %v225
      %227 = vrot.lane.b32.xlu0 %v156, 64
      %v228 = vpop.permute.xlu0 %227
      %v230 = vsel %vm160, %v226, 0
      %vm232 = vcmask 1043456
      %v234 = vsel %vm232, %v228, 0
      %236 = vmatprep.subr.bf16.mxu0 0
      %237 = vmatpush1.bf16.msra.mxu0 %v234
      %238 = vmatprep.subr.bf16.mxu0 0
      %239 = vmatpush1.bf16.msra.mxu0 0
      %240 = vmatprep.subr.bf16.mxu0 0
      %241 = vmatpush1.bf16.msra.mxu0 0
      %242 = vmatprep.subr.bf16.mxu0 0
      %243 = vmatpush1.bf16.msra.mxu0 0
      %244 = vmatprep.subr.bf16.mxu0 0
      %245 = vmatpush1.bf16.msra.mxu0 0
      %246 = vmatprep.subr.bf16.mxu0 0
      %247 = vmatpush1.bf16.msra.mxu0 0
      %248 = vmatprep.subr.bf16.mxu0 0
      %249 = vmatpush1.bf16.msra.mxu0 0
      %250 = vmatprep.subr.bf16.mxu0 0
      %251 = vmatpush1.bf16.msra.mxu0 0
      %252 = vmatprep.subr.bf16.mxu0 0
      %253 = vmatpush1.bf16.msra.mxu0 0
      %254 = vmatprep.subr.bf16.mxu0 0
      %255 = vmatpush1.bf16.msra.mxu0 0
      %256 = vmatprep.subr.bf16.mxu0 0
      %257 = vmatpush1.bf16.msra.mxu0 0
      %258 = vmatprep.subr.bf16.mxu0 0
      %259 = vmatpush1.bf16.msra.mxu0 0
      %260 = vmatprep.subr.bf16.mxu0 0
      %261 = vmatpush1.bf16.msra.mxu0 0
      %262 = vmatprep.subr.bf16.mxu0 0
      %263 = vmatpush1.bf16.msra.mxu0 0
      %264 = vmatprep.subr.bf16.mxu0 0
      %265 = vmatpush1.bf16.msra.mxu0 0
      %266 = vmatprep.subr.bf16.mxu0 0
      %267 = vmatpush1.bf16.msra.mxu0 0
      %268 = vmatprep.mubr.bf16.mxu0 0
      %269 = vmatmul.mubr.bf16.gmra.mrb[0].mxu0 %v230
      %v270 = vpop.f32.mrb[0].mxu0
      %v271 = vadd.f32 0.0, %v270
      %v272 = vpop.f32.mrb[0].mxu0
      %v273 = vpop.f32.mrb[0].mxu0
      %v274 = vpop.f32.mrb[0].mxu0
      %275 = vdwg.mxu0
      %276 = vrot.lane.b32.xlu0 %v156, 120
      %v277 = vpop.permute.xlu0 %276
      %278 = vrot.lane.b32.xlu0 %v156, 88
      %v279 = vpop.permute.xlu0 %278
      %v281 = vsel %vm160, %v277, 0
      %v284 = vsel %vm160, %v279, 0
      %286 = vmatprep.subr.bf16.mxu0 0
      %287 = vmatpush1.bf16.xpose.msra.mxu0 %v284
      %288 = vmatprep.subr.bf16.mxu0 0
      %289 = vmatpush1.bf16.xpose.msra.mxu0 0
      %290 = vmatprep.subr.bf16.mxu0 0
      %291 = vmatpush1.bf16.xpose.msra.mxu0 0
      %292 = vmatprep.subr.bf16.mxu0 0
      %293 = vmatpush1.bf16.xpose.msra.mxu0 0
      %294 = vmatprep.subr.bf16.mxu0 0
      %295 = vmatpush1.bf16.xpose.msra.mxu0 0
      %296 = vmatprep.subr.bf16.mxu0 0
      %297 = vmatpush1.bf16.xpose.msra.mxu0 0
      %298 = vmatprep.subr.bf16.mxu0 0
      %299 = vmatpush1.bf16.xpose.msra.mxu0 0
      %300 = vmatprep.subr.bf16.mxu0 0
      %301 = vmatpush1.bf16.xpose.msra.mxu0 0
      %302 = vmatprep.subr.bf16.mxu0 0
      %303 = vmatpush1.bf16.xpose.msra.mxu0 0
      %304 = vmatprep.subr.bf16.mxu0 0
      %305 = vmatpush1.bf16.xpose.msra.mxu0 0
      %306 = vmatprep.subr.bf16.mxu0 0
      %307 = vmatpush1.bf16.xpose.msra.mxu0 0
      %308 = vmatprep.subr.bf16.mxu0 0
      %309 = vmatpush1.bf16.xpose.msra.mxu0 0
      %310 = vmatprep.subr.bf16.mxu0 0
      %311 = vmatpush1.bf16.xpose.msra.mxu0 0
      %312 = vmatprep.subr.bf16.mxu0 0
      %313 = vmatpush1.bf16.xpose.msra.mxu0 0
      %314 = vmatprep.subr.bf16.mxu0 0
      %315 = vmatpush1.bf16.xpose.msra.mxu0 0
      %316 = vmatprep.subr.bf16.mxu0 0
      %317 = vmatpush1.bf16.xpose.msra.mxu0 0
      %318 = vmatprep.mubr.bf16.mxu0 0
      %319 = vmatmul.mubr.bf16.gmra.mrb[0].mxu0 %v281
      %v320 = vpop.f32.mrb[0].mxu0
      %v321 = vadd.f32 0.0, %v320
      %v322 = vpop.f32.mrb[0].mxu0
      %v323 = vpop.f32.mrb[0].mxu0
      %v324 = vpop.f32.mrb[0].mxu0
      %325 = vdwg.mxu0
      %v326 = vmul.f32 %v321, 0.35355338
      %v327 = vadd.f32 %v326, %v212
      %v328 = vsel %vm160, %v327, -inf
      %329 = vmax.xlane.f32.xlu0 %v328
      %v330 = vpop.xlane.xlu0 %329
      %v331 = vsub.f32 %v327, %v330
      %v332 = vmul.f32 %v331, 1.442695
      %v333 = vpow.pop %v332
      %v334 = vsel %vm160, %v333, 0.0
      %335 = vadd.xlane.f32.xlu0 %v334
      %v336 = vpop.xlane.xlu0 %335
      %v337 = vrcp.pop %v336
      %v338 = vmul.f32 %v333, %v337
      %v339 = vpack.c.bf16 %v338, %v338
      %340 = vrot.lane.b32.xlu0 %v156, 56
      %v341 = vpop.permute.xlu0 %340
      %v343 = vsel %vm160, %v339, 0
      %v346 = vsel %vm232, %v341, 0
      %348 = vmatprep.subr.bf16.mxu0 0
      %349 = vmatpush1.bf16.msra.mxu0 %v346
      %350 = vmatprep.subr.bf16.mxu0 0
      %351 = vmatpush1.bf16.msra.mxu0 0
      %352 = vmatprep.subr.bf16.mxu0 0
      %353 = vmatpush1.bf16.msra.mxu0 0
      %354 = vmatprep.subr.bf16.mxu0 0
      %355 = vmatpush1.bf16.msra.mxu0 0
      %356 = vmatprep.subr.bf16.mxu0 0
      %357 = vmatpush1.bf16.msra.mxu0 0
      %358 = vmatprep.subr.bf16.mxu0 0
      %359 = vmatpush1.bf16.msra.mxu0 0
      %360 = vmatprep.subr.bf16.mxu0 0
      %361 = vmatpush1.bf16.msra.mxu0 0
      %362 = vmatprep.subr.bf16.mxu0 0
      %363 = vmatpush1.bf16.msra.mxu0 0
      %364 = vmatprep.subr.bf16.mxu0 0
      %365 = vmatpush1.bf16.msra.mxu0 0
      %366 = vmatprep.subr.bf16.mxu0 0
      %367 = vmatpush1.bf16.msra.mxu0 0
      %368 = vmatprep.subr.bf16.mxu0 0
      %369 = vmatpush1.bf16.msra.mxu0 0
      %370 = vmatprep.subr.bf16.mxu0 0
      %371 = vmatpush1.bf16.msra.mxu0 0
      %372 = vmatprep.subr.bf16.mxu0 0
      %373 = vmatpush1.bf16.msra.mxu0 0
      %374 = vmatprep.subr.bf16.mxu0 0
      %375 = vmatpush1.bf16.msra.mxu0 0
      %376 = vmatprep.subr.bf16.mxu0 0
      %377 = vmatpush1.bf16.msra.mxu0 0
      %378 = vmatprep.subr.bf16.mxu0 0
      %379 = vmatpush1.bf16.msra.mxu0 0
      %380 = vmatprep.mubr.bf16.mxu0 0
      %381 = vmatmul.mubr.bf16.gmra.mrb[0].mxu0 %v343
      %v382 = vpop.f32.mrb[0].mxu0
      %v383 = vadd.f32 0.0, %v382
      %v384 = vpop.f32.mrb[0].mxu0
      %v385 = vpop.f32.mrb[0].mxu0
      %v386 = vpop.f32.mrb[0].mxu0
      %387 = vdwg.mxu0
      %388 = vrot.lane.b32.xlu0 %v156, 112
      %v389 = vpop.permute.xlu0 %388
      %390 = vrot.lane.b32.xlu0 %v156, 80
      %v391 = vpop.permute.xlu0 %390
      %v393 = vsel %vm160, %v389, 0
      %v396 = vsel %vm160, %v391, 0
      %398 = vmatprep.subr.bf16.mxu0 0
      %399 = vmatpush1.bf16.xpose.msra.mxu0 %v396
      %400 = vmatprep.subr.bf16.mxu0 0
      %401 = vmatpush1.bf16.xpose.msra.mxu0 0
      %402 = vmatprep.subr.bf16.mxu0 0
      %403 = vmatpush1.bf16.xpose.msra.mxu0 0
      %404 = vmatprep.subr.bf16.mxu0 0
      %405 = vmatpush1.bf16.xpose.msra.mxu0 0
      %406 = vmatprep.subr.bf16.mxu0 0
      %407 = vmatpush1.bf16.xpose.msra.mxu0 0
      %408 = vmatprep.subr.bf16.mxu0 0
      %409 = vmatpush1.bf16.xpose.msra.mxu0 0
      %410 = vmatprep.subr.bf16.mxu0 0
      %411 = vmatpush1.bf16.xpose.msra.mxu0 0
      %412 = vmatprep.subr.bf16.mxu0 0
      %413 = vmatpush1.bf16.xpose.msra.mxu0 0
      %414 = vmatprep.subr.bf16.mxu0 0
      %415 = vmatpush1.bf16.xpose.msra.mxu0 0
      %416 = vmatprep.subr.bf16.mxu0 0
      %417 = vmatpush1.bf16.xpose.msra.mxu0 0
      %418 = vmatprep.subr.bf16.mxu0 0
      %419 = vmatpush1.bf16.xpose.msra.mxu0 0
      %420 = vmatprep.subr.bf16.mxu0 0
      %421 = vmatpush1.bf16.xpose.msra.mxu0 0
      %422 = vmatprep.subr.bf16.mxu0 0
      %423 = vmatpush1.bf16.xpose.msra.mxu0 0
      %424 = vmatprep.subr.bf16.mxu0 0
      %425 = vmatpush1.bf16.xpose.msra.mxu0 0
      %426 = vmatprep.subr.bf16.mxu0 0
      %427 = vmatpush1.bf16.xpose.msra.mxu0 0
      %428 = vmatprep.subr.bf16.mxu0 0
      %429 = vmatpush1.bf16.xpose.msra.mxu0 0
      %430 = vmatprep.mubr.bf16.mxu0 0
      %431 = vmatmul.mubr.bf16.gmra.mrb[0].mxu0 %v393
      %v432 = vpop.f32.mrb[0].mxu0
      %v433 = vadd.f32 0.0, %v432
      %v434 = vpop.f32.mrb[0].mxu0
      %v435 = vpop.f32.mrb[0].mxu0
      %v436 = vpop.f32.mrb[0].mxu0
      %437 = vdwg.mxu0
      %v438 = vmul.f32 %v433, 0.35355338
      %v439 = vadd.f32 %v438, %v212
      %v440 = vsel %vm160, %v439, -inf
      %441 = vmax.xlane.f32.xlu0 %v440
      %v442 = vpop.xlane.xlu0 %441
      %v443 = vsub.f32 %v439, %v442
      %v444 = vmul.f32 %v443, 1.442695
      %v445 = vpow.pop %v444
      %v446 = vsel %vm160, %v445, 0.0
      %447 = vadd.xlane.f32.xlu0 %v446
      %v448 = vpop.xlane.xlu0 %447
      %v449 = vrcp.pop %v448
      %v450 = vmul.f32 %v445, %v449
      %v451 = vpack.c.bf16 %v450, %v450
      %452 = vrot.lane.b32.xlu0 %v156, 48
      %v453 = vpop.permute.xlu0 %452
      %v455 = vsel %vm160, %v451, 0
      %v458 = vsel %vm232, %v453, 0
      %460 = vmatprep.subr.bf16.mxu0 0
      %461 = vmatpush1.bf16.msra.mxu0 %v458
      %462 = vmatprep.subr.bf16.mxu0 0
      %463 = vmatpush1.bf16.msra.mxu0 0
      %464 = vmatprep.subr.bf16.mxu0 0
      %465 = vmatpush1.bf16.msra.mxu0 0
      %466 = vmatprep.subr.bf16.mxu0 0
      %467 = vmatpush1.bf16.msra.mxu0 0
      %468 = vmatprep.subr.bf16.mxu0 0
      %469 = vmatpush1.bf16.msra.mxu0 0
      %470 = vmatprep.subr.bf16.mxu0 0
      %471 = vmatpush1.bf16.msra.mxu0 0
      %472 = vmatprep.subr.bf16.mxu0 0
      %473 = vmatpush1.bf16.msra.mxu0 0
      %474 = vmatprep.subr.bf16.mxu0 0
      %475 = vmatpush1.bf16.msra.mxu0 0
      %476 = vmatprep.subr.bf16.mxu0 0
      %477 = vmatpush1.bf16.msra.mxu0 0
      %478 = vmatprep.subr.bf16.mxu0 0
      %479 = vmatpush1.bf16.msra.mxu0 0
      %480 = vmatprep.subr.bf16.mxu0 0
      %481 = vmatpush1.bf16.msra.mxu0 0
      %482 = vmatprep.subr.bf16.mxu0 0
      %483 = vmatpush1.bf16.msra.mxu0 0
      %484 = vmatprep.subr.bf16.mxu0 0
      %485 = vmatpush1.bf16.msra.mxu0 0
      %486 = vmatprep.subr.bf16.mxu0 0
      %487 = vmatpush1.bf16.msra.mxu0 0
      %488 = vmatprep.subr.bf16.mxu0 0
      %489 = vmatpush1.bf16.msra.mxu0 0
      %490 = vmatprep.subr.bf16.mxu0 0
      %491 = vmatpush1.bf16.msra.mxu0 0
      %492 = vmatprep.mubr.bf16.mxu0 0
      %493 = vmatmul.mubr.bf16.gmra.mrb[0].mxu0 %v455
      %v494 = vpop.f32.mrb[0].mxu0
      %v495 = vadd.f32 0.0, %v494
      %v496 = vpop.f32.mrb[0].mxu0
      %v497 = vpop.f32.mrb[0].mxu0
      %v498 = vpop.f32.mrb[0].mxu0
      %499 = vdwg.mxu0
      %500 = vrot.lane.b32.xlu0 %v156, 104
      %v501 = vpop.permute.xlu0 %500
      %502 = vrot.lane.b32.xlu0 %v156, 72
      %v503 = vpop.permute.xlu0 %502
      %v505 = vsel %vm160, %v501, 0
      %v508 = vsel %vm160, %v503, 0
      %510 = vmatprep.subr.bf16.mxu0 0
      %511 = vmatpush1.bf16.xpose.msra.mxu0 %v508
      %512 = vmatprep.subr.bf16.mxu0 0
      %513 = vmatpush1.bf16.xpose.msra.mxu0 0
      %514 = vmatprep.subr.bf16.mxu0 0
      %515 = vmatpush1.bf16.xpose.msra.mxu0 0
      %516 = vmatprep.subr.bf16.mxu0 0
      %517 = vmatpush1.bf16.xpose.msra.mxu0 0
      %518 = vmatprep.subr.bf16.mxu0 0
      %519 = vmatpush1.bf16.xpose.msra.mxu0 0
      %520 = vmatprep.subr.bf16.mxu0 0
      %521 = vmatpush1.bf16.xpose.msra.mxu0 0
      %522 = vmatprep.subr.bf16.mxu0 0
      %523 = vmatpush1.bf16.xpose.msra.mxu0 0
      %524 = vmatprep.subr.bf16.mxu0 0
      %525 = vmatpush1.bf16.xpose.msra.mxu0 0
      %526 = vmatprep.subr.bf16.mxu0 0
      %527 = vmatpush1.bf16.xpose.msra.mxu0 0
      %528 = vmatprep.subr.bf16.mxu0 0
      %529 = vmatpush1.bf16.xpose.msra.mxu0 0
      %530 = vmatprep.subr.bf16.mxu0 0
      %531 = vmatpush1.bf16.xpose.msra.mxu0 0
      %532 = vmatprep.subr.bf16.mxu0 0
      %533 = vmatpush1.bf16.xpose.msra.mxu0 0
      %534 = vmatprep.subr.bf16.mxu0 0
      %535 = vmatpush1.bf16.xpose.msra.mxu0 0
      %536 = vmatprep.subr.bf16.mxu0 0
      %537 = vmatpush1.bf16.xpose.msra.mxu0 0
      %538 = vmatprep.subr.bf16.mxu0 0
      %539 = vmatpush1.bf16.xpose.msra.mxu0 0
      %540 = vmatprep.subr.bf16.mxu0 0
      %541 = vmatpush1.bf16.xpose.msra.mxu0 0
      %542 = vmatprep.mubr.bf16.mxu0 0
      %543 = vmatmul.mubr.bf16.gmra.mrb[0].mxu0 %v505
      %v544 = vpop.f32.mrb[0].mxu0
      %v545 = vadd.f32 0.0, %v544
      %v546 = vpop.f32.mrb[0].mxu0
      %v547 = vpop.f32.mrb[0].mxu0
      %v548 = vpop.f32.mrb[0].mxu0
      %549 = vdwg.mxu0
      %v550 = vmul.f32 %v545, 0.35355338
      %v551 = vadd.f32 %v550, %v212
      %v552 = vsel %vm160, %v551, -inf
      %553 = vmax.xlane.f32.xlu0 %v552
      %v554 = vpop.xlane.xlu0 %553
      %v555 = vsub.f32 %v551, %v554
      %v556 = vmul.f32 %v555, 1.442695
      %v557 = vpow.pop %v556
      %v558 = vsel %vm160, %v557, 0.0
      %559 = vadd.xlane.f32.xlu0 %v558
      %v560 = vpop.xlane.xlu0 %559
      %v561 = vrcp.pop %v560
      %v562 = vmul.f32 %v557, %v561
      %v563 = vpack.c.bf16 %v562, %v562
      %564 = vrot.lane.b32.xlu0 %v156, 40
      %v565 = vpop.permute.xlu0 %564
      %v567 = vsel %vm160, %v563, 0
      %v570 = vsel %vm232, %v565, 0
      %572 = vmatprep.subr.bf16.mxu0 0
      %573 = vmatpush1.bf16.msra.mxu0 %v570
      %574 = vmatprep.subr.bf16.mxu0 0
      %575 = vmatpush1.bf16.msra.mxu0 0
      %576 = vmatprep.subr.bf16.mxu0 0
      %577 = vmatpush1.bf16.msra.mxu0 0
      %578 = vmatprep.subr.bf16.mxu0 0
      %579 = vmatpush1.bf16.msra.mxu0 0
      %580 = vmatprep.subr.bf16.mxu0 0
      %581 = vmatpush1.bf16.msra.mxu0 0
      %582 = vmatprep.subr.bf16.mxu0 0
      %583 = vmatpush1.bf16.msra.mxu0 0
      %584 = vmatprep.subr.bf16.mxu0 0
      %585 = vmatpush1.bf16.msra.mxu0 0
      %586 = vmatprep.subr.bf16.mxu0 0
      %587 = vmatpush1.bf16.msra.mxu0 0
      %588 = vmatprep.subr.bf16.mxu0 0
      %589 = vmatpush1.bf16.msra.mxu0 0
      %590 = vmatprep.subr.bf16.mxu0 0
      %591 = vmatpush1.bf16.msra.mxu0 0
      %592 = vmatprep.subr.bf16.mxu0 0
      %593 = vmatpush1.bf16.msra.mxu0 0
      %594 = vmatprep.subr.bf16.mxu0 0
      %595 = vmatpush1.bf16.msra.mxu0 0
      %596 = vmatprep.subr.bf16.mxu0 0
      %597 = vmatpush1.bf16.msra.mxu0 0
      %598 = vmatprep.subr.bf16.mxu0 0
      %599 = vmatpush1.bf16.msra.mxu0 0
      %600 = vmatprep.subr.bf16.mxu0 0
      %601 = vmatpush1.bf16.msra.mxu0 0
      %602 = vmatprep.subr.bf16.mxu0 0
      %603 = vmatpush1.bf16.msra.mxu0 0
      %604 = vmatprep.mubr.bf16.mxu0 0
      %605 = vmatmul.mubr.bf16.gmra.mrb[0].mxu0 %v567
      %v606 = vpop.f32.mrb[0].mxu0
      %v607 = vadd.f32 0.0, %v606
      %v608 = vpop.f32.mrb[0].mxu0
      %v609 = vpop.f32.mrb[0].mxu0
      %v610 = vpop.f32.mrb[0].mxu0
      %611 = vdwg.mxu0
      %613 = vrot.lane.b32.xlu0 %v383, 8
      %v614 = vpop.permute.xlu0 %613
      %617 = vrot.lane.b32.xlu0 %v495, 16
      %v618 = vpop.permute.xlu0 %617
      %621 = vrot.lane.b32.xlu0 %v607, 24
      %v622 = vpop.permute.xlu0 %621
      %v624 = vsel %vm160, %v271, %v614
      %vm625 = vcmask 130048
      %v626 = vsel %vm625, %v624, %v618
      %vm627 = vcmask 195584
      %v628 = vsel %vm627, %v626, %v622
      %vm629 = vcmask 261120
      %630 = vst.msk [vmem:[%s152] sm:$0xff] %vm629, %v628
      %p631 = scmp.lt.s32.totalorder %s13, 1
      %s632 = scalar_select %p631, %s13, 1
      %s633 = smul.addr %s632, 8
      %s634 = scalar_lea.vmem %s2, %s633
      // Predicated region
      $region29: #{soft_masked_bert_forward.18} parent=27 // pred_check
        %p635 = pneg %p83
      $region30: #{soft_masked_bert_forward.18} parent=27 // pred_check_branch
        %637 = sbr.rel (%p635) target = $region32
      $region31: #{soft_masked_bert_forward.18} parent=27 // pred_region
        _
      $region32: #{soft_masked_bert_forward.18} parent=27 // pred_fallthru
        _
    $region28: #{soft_masked_bert_forward.18} parent=5 // pred_fallthru
      _
    %p638 = scmp.le.s32.totalorder 2, %s8
    // Predicated region
    $region33: #{soft_masked_bert_forward.18} parent=5 // pred_check
      %p639 = pneg %p638
    $region34: #{soft_masked_bert_forward.18} parent=5 // pred_check_branch
      %641 = sbr.rel (%p639) target = $region36
    $region35: #{soft_masked_bert_forward.18} parent=5 // pred_region
      %s642 = ssub.s32 %s8, 2
      // Predicated region
      $region37: #{soft_masked_bert_forward.18} parent=35 // pred_check
        %p643 = pneg %p89
      $region38: #{soft_masked_bert_forward.18} parent=35 // pred_check_branch
        %645 = sbr.rel (%p643) target = $region40
      $region39: #{soft_masked_bert_forward.18} parent=35 // pred_region
        %p646 = scmp.lt.s32.totalorder %s14, 1
        %s647 = scalar_select %p646, %s14, 1
        %s648 = smul.addr %s647, 8
        %s649 = scalar_lea.vmem %s2, %s648
      $region40: #{soft_masked_bert_forward.18} parent=35 // pred_fallthru
        _
    $region36: #{soft_masked_bert_forward.18} parent=5 // pred_fallthru
      _
  $region6: #{soft_masked_bert_forward.18} parent=0 // loop_footer
    %s12 = sadd.s32 1, %s8
  $region7: #{soft_masked_bert_forward.18} parent=0 // loop_footer_branch
    %7 = sbr.rel target = $region3
  $region8: #{soft_masked_bert_forward.18} parent=0 // loop_exit
    _

// kernel: soft_masked_bert_forward.19
$region0: #{soft_masked_bert_forward.19}
  #allocation0 [shape = 'u32[]', space=smem, size = 0x4, offset = 0x4, fixed_abs, tag = 'smem constant byte address 0x4 - core index']
  #allocation1 [shape = 'u32[144,128]{1,0:T(1,128)}', space=vmem, size = 0x12000, scoped, tag = 'internal scratch']
  %s0 = inlined_call_operand.vmem [shape: f32[16,32], index: 0, kind: input, shape index: {}]
  %s1 = inlined_call_operand.vmem [shape: f32[16,32], index: 1, kind: input, shape index: {}]
  %s2 = inlined_call_operand.vmem [shape: bf16[32,32], index: 2, kind: input, shape index: {}]
  %s3 = inlined_call_operand.vmem [shape: f32[1,32], index: 3, kind: input, shape index: {}, may-alias: {3,5}]
  %s4 = inlined_call_operand.vmem [shape: f32[1,32], index: 4, kind: input, shape index: {}]
  %s5 = inlined_call_operand.vmem [shape: f32[1,32], index: 5, kind: input, shape index: {}, may-alias: {3,5}]
  %s6 = inlined_call_operand.vmem [shape: f32[16,32], index: 6, kind: output, shape index: {}]
  %s7 = sld [smem:[#allocation0]]
  $region57: #{soft_masked_bert_forward.19} parent=0
    _
  %s9 = ssub.s32 1, %s7
  %s10 = scalar_select 0, %s9, %s7
  loop: start=0, step=1, limit=4
  $region2: #{soft_masked_bert_forward.19} parent=0 // loop_pre_header
    _
  $region3: #{soft_masked_bert_forward.19} parent=0 // loop_header
    %s12 = sphi 0, %s16
    %p13 = scmp.ge.s32.totalorder %s12, 4
    %s22 = sphi 0, %s24
    %s25 = sphi 0, %s22
    %s26 = sphi 0, %s25
    %s42 = sphi 0, %s26
    %s48 = sphi 0, %s50
    %s51 = sphi 0, %s48
    %s52 = sphi 0, %s51
    %s68 = sphi 0, %s52
    %s72 = sphi 0, %s72
    %s74 = sphi 0, %s72
    %s75 = sphi 0, %s74
    %s89 = sphi 0, %s75
    %s93 = sphi 0, %s93
    %s95 = sphi 0, %s93
    %s96 = sphi 0, %s95
    %s110 = sphi 0, %s96
    %s114 = sphi 0, %s114
    %s116 = sphi 0, %s114
    %s117 = sphi 0, %s116
    %s131 = sphi 0, %s117
    %s135 = sphi 0, %s135
    %s137 = sphi 0, %s135
    %s138 = sphi 0, %s137
    %s152 = sphi 0, %s138
    %s158 = sphi 0, %s160
    %s161 = sphi 0, %s158
    %s162 = sphi 0, %s161
    %s178 = sphi 0, %s162
  $region4: #{soft_masked_bert_forward.19} parent=0 // loop_header_branch
    %15 = sbr.rel (%p13) target = $region8
  $region5: #{soft_masked_bert_forward.19} parent=0 // loop_body
    %s17 = ssub.s32 %s12, 1
    %s18 = ssub.s32 %s12, 2
    %s19 = sadd.s32 %s12, 1
    %s20 = ssub.s32 %s12, %s19
    %p21 = scmp.eq.s32.totalorder %s20, 0
    %s23 = sadd.s32 %s22, 1
    %s24 = scalar_select %p21, %s22, %s23
    %p27 = pneg %p21
    %p28 = scmp.eq.s32.totalorder %s12, 1
    %p29 = por %p27, %p28
    %p30 = scmp.ne.s32.totalorder %s22, %s25
    %p31 = scmp.eq.s32.totalorder %s12, 0
    %p32 = por %p30, %p31
    %p33 = scmp.ne.s32.totalorder %s22, %s25
    %p34 = scmp.eq.s32.totalorder %s17, 1
    %p35 = por %p33, %p34
    %p36 = scmp.ne.s32.totalorder %s25, %s26
    %p37 = scmp.eq.s32.totalorder %s17, 0
    %p38 = por %p36, %p37
    %p39 = scmp.ne.s32.totalorder %s25, %s26
    %p40 = scmp.eq.s32.totalorder %s18, 1
    %p41 = por %p39, %p40
    %p43 = scmp.ne.s32.totalorder %s26, %s42
    %p44 = scmp.eq.s32.totalorder %s18, 0
    %p45 = por %p43, %p44
    %s46 = ssub.s32 %s12, %s19
    %p47 = scmp.eq.s32.totalorder %s46, 0
    %s49 = sadd.s32 %s48, 1
    %s50 = scalar_select %p47, %s48, %s49
    %p53 = pneg %p47
    %p54 = scmp.eq.s32.totalorder %s12, 1
    %p55 = por %p53, %p54
    %p56 = scmp.ne.s32.totalorder %s48, %s51
    %p57 = scmp.eq.s32.totalorder %s12, 0
    %p58 = por %p56, %p57
    %p59 = scmp.ne.s32.totalorder %s48, %s51
    %p60 = scmp.eq.s32.totalorder %s17, 1
    %p61 = por %p59, %p60
    %p62 = scmp.ne.s32.totalorder %s51, %s52
    %p63 = scmp.eq.s32.totalorder %s17, 0
    %p64 = por %p62, %p63
    %p65 = scmp.ne.s32.totalorder %s51, %s52
    %p66 = scmp.eq.s32.totalorder %s18, 1
    %p67 = por %p65, %p66
    %p69 = scmp.ne.s32.totalorder %s52, %s68
    %p70 = scmp.eq.s32.totalorder %s18, 0
    %p71 = por %p69, %p70
    %s73 = sadd.s32 %s72, 1
    %p76 = scmp.eq.s32.totalorder %s12, 1
    %p77 = scmp.ne.s32.totalorder %s72, %s74
    %p78 = scmp.eq.s32.totalorder %s12, 0
    %p79 = por %p77, %p78
    %p80 = scmp.ne.s32.totalorder %s72, %s74
    %p81 = scmp.eq.s32.totalorder %s17, 1
    %p82 = por %p80, %p81
    %p83 = scmp.ne.s32.totalorder %s74, %s75
    %p84 = scmp.eq.s32.totalorder %s17, 0
    %p85 = por %p83, %p84
    %p86 = scmp.ne.s32.totalorder %s74, %s75
    %p87 = scmp.eq.s32.totalorder %s18, 1
    %p88 = por %p86, %p87
    %p90 = scmp.ne.s32.totalorder %s75, %s89
    %p91 = scmp.eq.s32.totalorder %s18, 0
    %p92 = por %p90, %p91
    %s94 = sadd.s32 %s93, 1
    %p97 = scmp.eq.s32.totalorder %s12, 1
    %p98 = scmp.ne.s32.totalorder %s93, %s95
    %p99 = scmp.eq.s32.totalorder %s12, 0
    %p100 = por %p98, %p99
    %p101 = scmp.ne.s32.totalorder %s93, %s95
    %p102 = scmp.eq.s32.totalorder %s17, 1
    %p103 = por %p101, %p102
    %p104 = scmp.ne.s32.totalorder %s95, %s96
    %p105 = scmp.eq.s32.totalorder %s17, 0
    %p106 = por %p104, %p105
    %p107 = scmp.ne.s32.totalorder %s95, %s96
    %p108 = scmp.eq.s32.totalorder %s18, 1
    %p109 = por %p107, %p108
    %p111 = scmp.ne.s32.totalorder %s96, %s110
    %p112 = scmp.eq.s32.totalorder %s18, 0
    %p113 = por %p111, %p112
    %s115 = sadd.s32 %s114, 1
    %p118 = scmp.eq.s32.totalorder %s12, 1
    %p119 = scmp.ne.s32.totalorder %s114, %s116
    %p120 = scmp.eq.s32.totalorder %s12, 0
    %p121 = por %p119, %p120
    %p122 = scmp.ne.s32.totalorder %s114, %s116
    %p123 = scmp.eq.s32.totalorder %s17, 1
    %p124 = por %p122, %p123
    %p125 = scmp.ne.s32.totalorder %s116, %s117
    %p126 = scmp.eq.s32.totalorder %s17, 0
    %p127 = por %p125, %p126
    %p128 = scmp.ne.s32.totalorder %s116, %s117
    %p129 = scmp.eq.s32.totalorder %s18, 1
    %p130 = por %p128, %p129
    %p132 = scmp.ne.s32.totalorder %s117, %s131
    %p133 = scmp.eq.s32.totalorder %s18, 0
    %p134 = por %p132, %p133
    %s136 = sadd.s32 %s135, 1
    %p139 = scmp.eq.s32.totalorder %s12, 1
    %p140 = scmp.ne.s32.totalorder %s135, %s137
    %p141 = scmp.eq.s32.totalorder %s12, 0
    %p142 = por %p140, %p141
    %p143 = scmp.ne.s32.totalorder %s135, %s137
    %p144 = scmp.eq.s32.totalorder %s17, 1
    %p145 = por %p143, %p144
    %p146 = scmp.ne.s32.totalorder %s137, %s138
    %p147 = scmp.eq.s32.totalorder %s17, 0
    %p148 = por %p146, %p147
    %p149 = scmp.ne.s32.totalorder %s137, %s138
    %p150 = scmp.eq.s32.totalorder %s18, 1
    %p151 = por %p149, %p150
    %p153 = scmp.ne.s32.totalorder %s138, %s152
    %p154 = scmp.eq.s32.totalorder %s18, 0
    %p155 = por %p153, %p154
    %s156 = ssub.s32 %s12, %s19
    %p157 = scmp.eq.s32.totalorder %s156, 0
    %s159 = sadd.s32 %s158, 1
    %s160 = scalar_select %p157, %s158, %s159
    %p163 = pneg %p157
    %p164 = scmp.eq.s32.totalorder %s12, 1
    %p165 = por %p163, %p164
    %p166 = scmp.ne.s32.totalorder %s158, %s161
    %p167 = scmp.eq.s32.totalorder %s12, 0
    %p168 = por %p166, %p167
    %p169 = scmp.ne.s32.totalorder %s158, %s161
    %p170 = scmp.eq.s32.totalorder %s17, 1
    %p171 = por %p169, %p170
    %p172 = scmp.ne.s32.totalorder %s161, %s162
    %p173 = scmp.eq.s32.totalorder %s17, 0
    %p174 = por %p172, %p173
    %p175 = scmp.ne.s32.totalorder %s161, %s162
    %p176 = scmp.eq.s32.totalorder %s18, 1
    %p177 = por %p175, %p176
    %p179 = scmp.ne.s32.totalorder %s162, %s178
    %p180 = scmp.eq.s32.totalorder %s18, 0
    %p181 = por %p179, %p180
    %p182 = scmp.le.s32.totalorder 1, %s12
    %p183 = scmp.lt.s32.totalorder %s12, 3
    %p184 = pnand %p182, %p183
    %p185 = pneg %p184
    // Predicated region
    $region9: #{soft_masked_bert_forward.19} parent=5 // pred_check
      _
    $region10: #{soft_masked_bert_forward.19} parent=5 // pred_check_branch
      %187 = sbr.rel (%p184) target = $region12
    $region11: #{soft_masked_bert_forward.19} parent=5 // pred_region
      %s188 = ssub.s32 %s12, 1
      // Predicated region
      $region13: #{soft_masked_bert_forward.19} parent=11 // pred_check
        %p189 = pneg %p85
      $region14: #{soft_masked_bert_forward.19} parent=11 // pred_check_branch
        %191 = sbr.rel (%p189) target = $region16
      $region15: #{soft_masked_bert_forward.19} parent=11 // pred_region
        _
      $region16: #{soft_masked_bert_forward.19} parent=11 // pred_fallthru
        _
      // Predicated region
      $region17: #{soft_masked_bert_forward.19} parent=11 // pred_check
        %p192 = pneg %p106
      $region18: #{soft_masked_bert_forward.19} parent=11 // pred_check_branch
        %194 = sbr.rel (%p192) target = $region20
      $region19: #{soft_masked_bert_forward.19} parent=11 // pred_region
        _
      $region20: #{soft_masked_bert_forward.19} parent=11 // pred_fallthru
        _
      // Predicated region
      $region21: #{soft_masked_bert_forward.19} parent=11 // pred_check
        %p195 = pneg %p127
      $region22: #{soft_masked_bert_forward.19} parent=11 // pred_check_branch
        %197 = sbr.rel (%p195) target = $region24
      $region23: #{soft_masked_bert_forward.19} parent=11 // pred_region
        _
      $region24: #{soft_masked_bert_forward.19} parent=11 // pred_fallthru
        _
      // Predicated region
      $region25: #{soft_masked_bert_forward.19} parent=11 // pred_check
        %p198 = pneg %p148
      $region26: #{soft_masked_bert_forward.19} parent=11 // pred_check_branch
        %200 = sbr.rel (%p198) target = $region28
      $region27: #{soft_masked_bert_forward.19} parent=11 // pred_region
        _
      $region28: #{soft_masked_bert_forward.19} parent=11 // pred_fallthru
        _
    $region12: #{soft_masked_bert_forward.19} parent=5 // pred_fallthru
      _
    %p201 = scmp.lt.s32.totalorder %s12, 2
    // Predicated region
    $region29: #{soft_masked_bert_forward.19} parent=5 // pred_check
      %p202 = pneg %p201
    $region30: #{soft_masked_bert_forward.19} parent=5 // pred_check_branch
      %204 = sbr.rel (%p202) target = $region32
    $region31: #{soft_masked_bert_forward.19} parent=5 // pred_region
      // Predicated region
      $region33: #{soft_masked_bert_forward.19} parent=31 // pred_check
        %p205 = pneg %p32
      $region34: #{soft_masked_bert_forward.19} parent=31 // pred_check_branch
        %207 = sbr.rel (%p205) target = $region36
      $region35: #{soft_masked_bert_forward.19} parent=31 // pred_region
        %p208 = scmp.lt.s32.totalorder %s12, 1
        %s209 = scalar_select %p208, %s12, 1
        %s210 = smul.addr %s209, 8
        %s211 = scalar_lea.vmem %s0, %s210
      $region36: #{soft_masked_bert_forward.19} parent=31 // pred_fallthru
        _
      // Predicated region
      $region37: #{soft_masked_bert_forward.19} parent=31 // pred_check
        %p212 = pneg %p58
      $region38: #{soft_masked_bert_forward.19} parent=31 // pred_check_branch
        %214 = sbr.rel (%p212) target = $region40
      $region39: #{soft_masked_bert_forward.19} parent=31 // pred_region
        %p215 = scmp.lt.s32.totalorder %s12, 1
        %s216 = scalar_select %p215, %s12, 1
        %s217 = smul.addr %s216, 8
        %s218 = scalar_lea.vmem %s1, %s217
      $region40: #{soft_masked_bert_forward.19} parent=31 // pred_fallthru
        _
    $region32: #{soft_masked_bert_forward.19} parent=5 // pred_fallthru
      _
    %p219 = scmp.le.s32.totalorder 1, %s12
    %p220 = scmp.lt.s32.totalorder %s12, 3
    %p221 = pnand %p219, %p220
    %p222 = pneg %p221
    // Predicated region
    $region41: #{soft_masked_bert_forward.19} parent=5 // pred_check
      _
    $region42: #{soft_masked_bert_forward.19} parent=5 // pred_check_branch
      %224 = sbr.rel (%p221) target = $region44
    $region43: #{soft_masked_bert_forward.19} parent=5 // pred_region
      %s225 = ssub.s32 %s12, 1
      %p226 = scmp.lt.s32.totalorder %s17, 1
      %s227 = scalar_select %p226, %s17, 1
      %s228 = smul.addr %s227, 8
      %s229 = scalar_lea.vmem %s0, %s228
      %p230 = pneg %p38
      %p231 = pneg %p35
      %p232 = scmp.lt.s32.totalorder %s17, 1
      %s233 = scalar_select %p232, %s17, 1
      %s234 = smul.addr %s233, 8
      %s235 = scalar_lea.vmem %s1, %s234
      %p236 = pneg %p64
      %p237 = pneg %p61
      %p238 = pneg %p85
      %p239 = pneg %p82
      %p240 = pneg %p106
      %p241 = pneg %p103
      %p242 = pneg %p127
      %p243 = pneg %p124
      %p244 = pneg %p148
      %p245 = pneg %p145
      %p246 = pneg %p174
      %p247 = pneg %p171
      %p248 = scmp.lt.s32.totalorder %s17, 1
      %s249 = scalar_select %p248, %s17, 1
      %s250 = smul.addr %s249, 8
      %s251 = scalar_lea.vmem %s6, %s250
      %p252 = scmp.lt.s32.totalorder %s17, 1
      %s253 = scalar_select %p252, %s17, 1
      %s254 = smul.addr %s253, 8
      %s255 = scalar_lea.vmem %s0, %s254
      %p256 = scmp.lt.s32.totalorder %s17, 1
      %s257 = scalar_select %p256, %s17, 1
      %s258 = smul.addr %s257, 8
      %s259 = scalar_lea.vmem %s1, %s258
      %p260 = scmp.lt.s32.totalorder %s17, 1
      %s261 = scalar_select %p260, %s17, 1
      %s262 = smul.addr %s261, 8
      %s263 = scalar_lea.vmem %s6, %s262
      %v265 = vld [vmem:[%s255] sm:$0xff]
      %v266 = vpack.c.bf16 %v265, %v265
      %v267 = vld [vmem:[%s2] sm:$0xf]
      %v268 = vld [vmem:[%s2 + $0x4] sm:$0xf]
      %v269 = vld [vmem:[%s2 + $0x8] sm:$0xf]
      %v270 = vld [vmem:[%s2 + $0xc] sm:$0xf]
      %v271 = vld [vmem:[%s3] sm:$0x1]
      %v273 = vlaneseq
      %v274 = vshrl.u32 %v273, 7
      %v275 = vsub.s32 0, %v274
      %v276 = vrot.slane %v271, %v275
      %v282 = vunpack.c.l.b16 %v267
      %v283 = vunpack.c.l.b16 %v268
      %v284 = vunpack.c.l.b16 %v269
      %v285 = vunpack.c.l.b16 %v270
      %v286 = vpack.c.b16 %v283, %v282
      %v287 = vpack.c.b16 %v285, %v284
      %vm290 = vcmask 261120
      %v292 = vsel %vm290, %v266, 0
      %294 = vmatprep.subr.bf16.mxu0 0
      %295 = vmatpush1.bf16.msra.mxu0 %v286
      %296 = vmatprep.subr.bf16.mxu0 0
      %297 = vmatpush1.bf16.msra.mxu0 %v287
      %298 = vmatprep.subr.bf16.mxu0 0
      %299 = vmatpush1.bf16.msra.mxu0 0
      %300 = vmatprep.subr.bf16.mxu0 0
      %301 = vmatpush1.bf16.msra.mxu0 0
      %302 = vmatprep.subr.bf16.mxu0 0
      %303 = vmatpush1.bf16.msra.mxu0 0
      %304 = vmatprep.subr.bf16.mxu0 0
      %305 = vmatpush1.bf16.msra.mxu0 0
      %306 = vmatprep.subr.bf16.mxu0 0
      %307 = vmatpush1.bf16.msra.mxu0 0
      %308 = vmatprep.subr.bf16.mxu0 0
      %309 = vmatpush1.bf16.msra.mxu0 0
      %310 = vmatprep.subr.bf16.mxu0 0
      %311 = vmatpush1.bf16.msra.mxu0 0
      %312 = vmatprep.subr.bf16.mxu0 0
      %313 = vmatpush1.bf16.msra.mxu0 0
      %314 = vmatprep.subr.bf16.mxu0 0
      %315 = vmatpush1.bf16.msra.mxu0 0
      %316 = vmatprep.subr.bf16.mxu0 0
      %317 = vmatpush1.bf16.msra.mxu0 0
      %318 = vmatprep.subr.bf16.mxu0 0
      %319 = vmatpush1.bf16.msra.mxu0 0
      %320 = vmatprep.subr.bf16.mxu0 0
      %321 = vmatpush1.bf16.msra.mxu0 0
      %322 = vmatprep.subr.bf16.mxu0 0
      %323 = vmatpush1.bf16.msra.mxu0 0
      %324 = vmatprep.subr.bf16.mxu0 0
      %325 = vmatpush1.bf16.msra.mxu0 0
      %326 = vmatprep.mubr.bf16.mxu0 0
      %327 = vmatmul.mubr.bf16.gmra.mrb[0].mxu0 %v292
      %v328 = vpop.f32.mrb[0].mxu0
      %v329 = vadd.f32 %v276, %v328
      %v330 = vpop.f32.mrb[0].mxu0
      %v331 = vpop.f32.mrb[0].mxu0
      %v332 = vpop.f32.mrb[0].mxu0
      %333 = vdwg.mxu0
      %v334 = vld [vmem:[%s259] sm:$0xff]
      %v335 = vadd.f32 %v329, %v334
      %v336 = vld [vmem:[%s4] sm:$0x1]
      %v337 = vld [vmem:[%s5] sm:$0x1]
      %v338 = vsel %vm290, %v335, 0.0
      %339 = vadd.xlane.f32.xlu0 %v338
      %v340 = vpop.xlane.xlu0 %339
      %v341 = vrcp.pop 32.0
      %v342 = vmul.f32 %v340, %v341
      %v343 = vsub.f32 %v335, %v342
      %v344 = vmul.f32 %v343, %v343
      %v345 = vsel %vm290, %v344, 0.0
      %346 = vadd.xlane.f32.xlu0 %v345
      %v347 = vpop.xlane.xlu0 %346
      %v348 = vmul.f32 %v347, %v341
      %v349 = vadd.f32 %v348, 1e-12
      %v350 = vrsqrt.pop %v349
      %v351 = vmul.f32 %v343, %v350
      %v353 = vlaneseq
      %v354 = vshrl.u32 %v353, 7
      %v355 = vsub.s32 0, %v354
      %v356 = vrot.slane %v336, %v355
      %v358 = vmul.f32 %v351, %v356
      %v360 = vlaneseq
      %v361 = vshrl.u32 %v360, 7
      %v362 = vsub.s32 0, %v361
      %v363 = vrot.slane %v337, %v362
      %v365 = vadd.f32 %v358, %v363
      %366 = vst.msk [vmem:[%s263] sm:$0xff] %vm290, %v365
      %p367 = scmp.lt.s32.totalorder %s17, 1
      %s368 = scalar_select %p367, %s17, 1
      %s369 = smul.addr %s368, 8
      %s370 = scalar_lea.vmem %s6, %s369
      // Predicated region
      $region45: #{soft_masked_bert_forward.19} parent=43 // pred_check
        %p371 = pneg %p171
      $region46: #{soft_masked_bert_forward.19} parent=43 // pred_check_branch
        %373 = sbr.rel (%p371) target = $region48
      $region47: #{soft_masked_bert_forward.19} parent=43 // pred_region
        _
      $region48: #{soft_masked_bert_forward.19} parent=43 // pred_fallthru
        _
    $region44: #{soft_masked_bert_forward.19} parent=5 // pred_fallthru
      _
    %p374 = scmp.le.s32.totalorder 2, %s12
    // Predicated region
    $region49: #{soft_masked_bert_forward.19} parent=5 // pred_check
      %p375 = pneg %p374
    $region50: #{soft_masked_bert_forward.19} parent=5 // pred_check_branch
      %377 = sbr.rel (%p375) target = $region52
    $region51: #{soft_masked_bert_forward.19} parent=5 // pred_region
      %s378 = ssub.s32 %s12, 2
      // Predicated region
      $region53: #{soft_masked_bert_forward.19} parent=51 // pred_check
        %p379 = pneg %p177
      $region54: #{soft_masked_bert_forward.19} parent=51 // pred_check_branch
        %381 = sbr.rel (%p379) target = $region56
      $region55: #{soft_masked_bert_forward.19} parent=51 // pred_region
        %p382 = scmp.lt.s32.totalorder %s18, 1
        %s383 = scalar_select %p382, %s18, 1
        %s384 = smul.addr %s383, 8
        %s385 = scalar_lea.vmem %s6, %s384
      $region56: #{soft_masked_bert_forward.19} parent=51 // pred_fallthru
        _
    $region52: #{soft_masked_bert_forward.19} parent=5 // pred_fallthru
      _
  $region6: #{soft_masked_bert_forward.19} parent=0 // loop_footer
    %s16 = sadd.s32 1, %s12
  $region7: #{soft_masked_bert_forward.19} parent=0 // loop_footer_branch
    %11 = sbr.rel target = $region3
  $region8: #{soft_masked_bert_forward.19} parent=0 // loop_exit
    _

</llo_original>
